<compile_context>
chip_gen: v7x
topology: tpu7x:2x2x1
jax: 0.10.0
libtpu: 0.0.40
codegen_flags: <defaults>
</compile_context>

<pallas_src>
import functools

import jax
import jax.numpy as jnp
from jax.experimental import pallas as pl
from jax.experimental.pallas import tpu as pltpu

EPS = 1e-5  # PyTorch BatchNorm2d default


# ---------------------------------------------------------------------------
# Kernel: ALL residual layers, fused, for one batch tile (grid over N // Nb)
# ---------------------------------------------------------------------------
def _resblock_kernel(x_ref, w1_ref, b1_ref, w2_ref, b2_ref, o_ref,
                     pad_ref, act_ref):
    # x_ref  : (Nb, H, W, C)        f32  input tile (NHWC)
    # w1_ref : (L, 9*C, Ch)         bf16 im2col-reshaped 3x3 conv (BN1 folded)
    # b1_ref : (L, 1, Ch)           f32  folded conv1+BN1 bias
    # w2_ref : (L, Ch, C)           bf16 1x1 conv (BN2 folded)
    # b2_ref : (L, 1, C)            f32  folded conv2+BN2 bias
    # o_ref  : (Nb, H, W, C)        f32  output tile
    # pad_ref: (Nb, H+2, W+2, C)    f32  VMEM halo scratch (zero border)
    # act_ref: (Nb*H*W, C)          f32  VMEM residual accumulator
    Nb, H, W, C = x_ref.shape
    L = w1_ref.shape[0]
    M = Nb * H * W

    act_ref[...] = x_ref[...].reshape(M, C)

    # Zero the halo buffer once per grid step (not per layer): each layer fully
    # overwrites the interior, the 1-pixel border stays zero.  Not gated on
    # program_id == 0 so it stays correct when the grid is sharded across
    # TensorCores (scratch is per-core).
    pad_ref[...] = jnp.zeros_like(pad_ref)

    for l in range(L):                                   # L static -> unrolled
        a = jnp.maximum(act_ref[...], 0.0)               # ReLU (f32)
        pad_ref[:, 1:H + 1, 1:W + 1, :] = a.reshape(Nb, H, W, C)

        # im2col: build one (M, 9*C) patch and do a single K=9*C MXU matmul.
        cols = []
        for ky in range(3):
            for kx in range(3):
                cols.append(pad_ref[:, ky:ky + H, kx:kx + W, :].reshape(M, C))
        patch = jnp.concatenate(cols, axis=1).astype(jnp.bfloat16)

        h = jnp.dot(patch, w1_ref[l], preferred_element_type=jnp.float32)
        h = jnp.maximum(h + b1_ref[l], 0.0)              # bias + ReLU (f32)

        y = jnp.dot(h.astype(jnp.bfloat16), w2_ref[l],
                    preferred_element_type=jnp.float32)
        act_ref[...] = act_ref[...] + y + b2_ref[l]      # residual add (f32)

    o_ref[...] = act_ref[...].reshape(Nb, H, W, C)


def _choose_batch_tile(N, H, W, C, Ch):
    """Largest per-step batch tile such that the grid keeps >= 2 parallel steps
    (so both TensorCores of a v7x chip get work) and per-step VMEM stays well
    under the v7x scoped limit."""
    budget = 8 * 1024 * 1024          # conservative vs 32 MiB scoped default
    best = 1
    for nb in range(1, N + 1):
        if N % nb != 0:
            continue
        if N >= 2 and N // nb < 2:    # keep >= 2 grid steps when possible
            continue
        per_step = nb * (
            2 * 2 * H * W * C * 4            # in + out blocks, double-buffered
            + (H + 2) * (W + 2) * C * 4      # halo scratch
            + H * W * C * 4                  # residual accumulator
            + H * W * 9 * C * 2              # im2col patch (bf16)
            + H * W * Ch * 4)                # hidden activation
        if per_step <= budget:
            best = nb
    return best


def _residual_block_pallas(x_nhwc, w1s, b1s, w2s, b2s):
    N, H, W, C = x_nhwc.shape
    L = w1s.shape[0]
    Ch = w1s.shape[-1]
    nb = _choose_batch_tile(N, H, W, C, Ch)

    # wrapper-side weight prep: im2col reshape + bf16 cast (f32 biases)
    w1s_k = w1s.reshape(L, 9 * C, Ch).astype(jnp.bfloat16)
    w2s_k = w2s.astype(jnp.bfloat16)
    b1s_k = b1s.reshape(L, 1, Ch).astype(jnp.float32)
    b2s_k = b2s.reshape(L, 1, C).astype(jnp.float32)

    return pl.pallas_call(
        _resblock_kernel,
        out_shape=jax.ShapeDtypeStruct((N, H, W, C), jnp.float32),
        grid_spec=pltpu.PrefetchScalarGridSpec(
            num_scalar_prefetch=0,
            grid=(N // nb,),
            in_specs=[
                pl.BlockSpec((nb, H, W, C), lambda n: (n, 0, 0, 0)),
                pl.BlockSpec((L, 9 * C, Ch), lambda n: (0, 0, 0)),
                pl.BlockSpec((L, 1, Ch), lambda n: (0, 0, 0)),
                pl.BlockSpec((L, Ch, C), lambda n: (0, 0, 0)),
                pl.BlockSpec((L, 1, C), lambda n: (0, 0, 0)),
            ],
            out_specs=pl.BlockSpec((nb, H, W, C), lambda n: (n, 0, 0, 0)),
            scratch_shapes=[
                pltpu.VMEM((nb, H + 2, W + 2, C), jnp.float32),
                pltpu.VMEM((nb * H * W, C), jnp.float32),
            ]),
        compiler_params=pltpu.CompilerParams(
            dimension_semantics=("parallel",)),
    )(x_nhwc, w1s_k, b1s_k, w2s_k, b2s_k)


# ---------------------------------------------------------------------------
# Parameter construction (deterministic) + BN folding
# ---------------------------------------------------------------------------
def _fold_bn(w_out_last, conv_bias, gamma, beta, mean, var):
    """Fold eval-mode BatchNorm into a conv whose LAST axis is out-channels."""
    s = gamma / jnp.sqrt(var + EPS)
    w_f = w_out_last * s
    b_f = (conv_bias - mean) * s + beta
    return w_f.astype(jnp.float32), b_f.astype(jnp.float32)


def make_residual_block_params(key, num_hiddens, num_residual_hiddens,
                               num_residual_layers):
    C, Ch = num_hiddens, num_residual_hiddens
    w1s, b1s, w2s, b2s = [], [], [], []
    for _ in range(num_residual_layers):
        keys = jax.random.split(key, 11)
        key = keys[0]
        # conv1: 3x3, C -> Ch (HWIO layout)
        w1 = jax.random.normal(keys[1], (3, 3, C, Ch), jnp.float32) * 0.05
        cb1 = jax.random.normal(keys[2], (Ch,), jnp.float32) * 0.05
        g1 = 1.0 + 0.1 * jax.random.normal(keys[3], (Ch,), jnp.float32)
        be1 = 0.1 * jax.random.normal(keys[4], (Ch,), jnp.float32)
        m1 = 0.1 * jax.random.normal(keys[5], (Ch,), jnp.float32)
        v1 = jax.random.uniform(keys[6], (Ch,), jnp.float32, 0.5, 1.5)
        # conv2: 1x1, Ch -> C (stored as (in, out) = (Ch, C))
        w2 = jax.random.normal(keys[7], (Ch, C), jnp.float32) * 0.05
        cb2 = jax.random.normal(keys[8], (C,), jnp.float32) * 0.05
        g2 = 1.0 + 0.1 * jax.random.normal(keys[9], (C,), jnp.float32)
        be2 = 0.1 * jax.random.normal(keys[10], (C,), jnp.float32)
        m2 = jnp.zeros((C,), jnp.float32)
        v2 = jnp.ones((C,), jnp.float32)

        w1f, b1f = _fold_bn(w1, cb1, g1, be1, m1, v1)
        w2f, b2f = _fold_bn(w2, cb2, g2, be2, m2, v2)
        w1s.append(w1f); b1s.append(b1f); w2s.append(w2f); b2s.append(b2f)
    return (jnp.stack(w1s), jnp.stack(b1s), jnp.stack(w2s), jnp.stack(b2s))


# ---------------------------------------------------------------------------
# Public module-equivalent forward (takes NCHW like the PyTorch module)
# ---------------------------------------------------------------------------
@jax.jit
def residual_block_forward(x_nchw, params):
    w1s, b1s, w2s, b2s = params
    x = jnp.transpose(x_nchw, (0, 2, 3, 1)).astype(jnp.float32)   # NCHW -> NHWC
    y = _residual_block_pallas(x, w1s, b1s, w2s, b2s)
    return jnp.transpose(y, (0, 3, 1, 2))                          # NHWC -> NCHW


# Pure-JAX f32 reference for verification
def residual_block_reference(x_nchw, params):
    w1s, b1s, w2s, b2s = params
    x = jnp.transpose(x_nchw, (0, 2, 3, 1)).astype(jnp.float32)
    for l in range(w1s.shape[0]):
        a = jax.nn.relu(x)
        c1 = jax.lax.conv_general_dilated(
            a, w1s[l], window_strides=(1, 1), padding="SAME",
            dimension_numbers=("NHWC", "HWIO", "NHWC")) + b1s[l].reshape(1, 1, 1, -1)
        h = jax.nn.relu(c1)
        c2 = jnp.einsum("nhwc,cd->nhwd", h, w2s[l]) + b2s[l].reshape(1, 1, 1, -1)
        x = x + c2
    return jnp.transpose(x, (0, 3, 1, 2))


if __name__ == "__main__":
    # small, module-consistent shapes
    N, num_hiddens, num_residual_hiddens, num_residual_layers = 2, 32, 64, 2
    H = W = 16

    key = jax.random.PRNGKey(0)
    kx, kp = jax.random.split(key)
    x = jax.random.normal(kx, (N, num_hiddens, H, W), jnp.float32)  # NCHW

    params = make_residual_block_params(kp, num_hiddens, num_residual_hiddens,
                                        num_residual_layers)

    out = residual_block_forward(x, params)
    out = jax.block_until_ready(out)

    ref = residual_block_reference(x, params)
    assert out.shape == x.shape
    max_err = float(jnp.max(jnp.abs(out - ref)))
    # bf16 matmul operands with f32 accumulation -> small numerical delta vs f32 ref
    assert jnp.allclose(out, ref, rtol=5e-2, atol=5e-2), max_err

    print("KERNEL_OK")
</pallas_src>

<mosaic_0001>
module attributes {stable_mosaic.version = 11 : i64} {
  func.func @_resblock_kernel(%arg0: i32, %arg1: memref<1x16x16x32xf32, #tpu.memory_space<vmem>>, %arg2: memref<2x288x64xbf16, #tpu.memory_space<vmem>>, %arg3: memref<2x1x64xf32, #tpu.memory_space<vmem>>, %arg4: memref<2x64x32xbf16, #tpu.memory_space<vmem>>, %arg5: memref<2x1x32xf32, #tpu.memory_space<vmem>>, %arg6: memref<1x16x16x32xf32, #tpu.memory_space<vmem>>, %arg7: memref<1x18x18x32xf32, #tpu.memory_space<vmem>>, %arg8: memref<256x32xf32, #tpu.memory_space<vmem>>) attributes {dimension_semantics = [#tpu.dimension_semantics<parallel>], iteration_bounds = array<i64: 2>, scalar_prefetch = 0 : i64, scratch_operands = 2 : i64, tpu.core_type = #tpu.core_type<tc>, window_params = [{transform_indices = @transform_0, window_bounds = array<i64: 1, 16, 16, 32>}, {pipeline_mode = #tpu.pipeline_mode<synchronous>, transform_indices = @transform_1, window_bounds = array<i64: 2, 288, 64>}, {pipeline_mode = #tpu.pipeline_mode<synchronous>, transform_indices = @transform_2, window_bounds = array<i64: 2, 1, 64>}, {pipeline_mode = #tpu.pipeline_mode<synchronous>, transform_indices = @transform_3, window_bounds = array<i64: 2, 64, 32>}, {pipeline_mode = #tpu.pipeline_mode<synchronous>, transform_indices = @transform_4, window_bounds = array<i64: 2, 1, 32>}, {transform_indices = @transform_5, window_bounds = array<i64: 1, 16, 16, 32>}]} {
    %c0 = arith.constant 0 : index
    %c0_0 = arith.constant 0 : index
    %c0_1 = arith.constant 0 : index
    %c0_2 = arith.constant 0 : index
    %0 = vector.load %arg1[%c0, %c0_0, %c0_1, %c0_2] : memref<1x16x16x32xf32, #tpu.memory_space<vmem>>, vector<1x16x16x32xf32>
    %1 = vector.shape_cast %0 : vector<1x16x16x32xf32> to vector<256x32xf32>
    %c0_3 = arith.constant 0 : index
    %c0_4 = arith.constant 0 : index
    %2 = vector.load %arg8[%c0_3, %c0_4] : memref<256x32xf32, #tpu.memory_space<vmem>>, vector<256x32xf32>
    tpu.vector_store %arg8[%c0_3, %c0_4], %1 {strides = array<i32>} : memref<256x32xf32, #tpu.memory_space<vmem>>, vector<256x32xf32>,
    %cst = arith.constant 0.000000e+00 : f32
    %3 = vector.broadcast %cst : f32 to vector<1x18x18x32xf32>
    %c0_5 = arith.constant 0 : index
    %c0_6 = arith.constant 0 : index
    %c0_7 = arith.constant 0 : index
    %c0_8 = arith.constant 0 : index
    %4 = vector.load %arg7[%c0_5, %c0_6, %c0_7, %c0_8] : memref<1x18x18x32xf32, #tpu.memory_space<vmem>>, vector<1x18x18x32xf32>
    tpu.vector_store %arg7[%c0_5, %c0_6, %c0_7, %c0_8], %3 {strides = array<i32>} : memref<1x18x18x32xf32, #tpu.memory_space<vmem>>, vector<1x18x18x32xf32>,
    %c0_9 = arith.constant 0 : index
    %c0_10 = arith.constant 0 : index
    %5 = vector.load %arg8[%c0_9, %c0_10] : memref<256x32xf32, #tpu.memory_space<vmem>>, vector<256x32xf32>
    %cst_11 = arith.constant 0.000000e+00 : f32
    %6 = vector.broadcast %cst_11 : f32 to vector<256x32xf32>
    %7 = arith.maximumf %5, %6 : vector<256x32xf32>
    %8 = vector.shape_cast %7 : vector<256x32xf32> to vector<1x16x16x32xf32>
    %c0_12 = arith.constant 0 : index
    %c1 = arith.constant 1 : index
    %c1_13 = arith.constant 1 : index
    %c0_14 = arith.constant 0 : index
    %9 = vector.load %arg7[%c0_12, %c1, %c1_13, %c0_14] : memref<1x18x18x32xf32, #tpu.memory_space<vmem>>, vector<1x16x16x32xf32>
    tpu.vector_store %arg7[%c0_12, %c1, %c1_13, %c0_14], %8 {strides = array<i32>} : memref<1x18x18x32xf32, #tpu.memory_space<vmem>>, vector<1x16x16x32xf32>,
    %c0_15 = arith.constant 0 : index
    %c0_16 = arith.constant 0 : index
    %c0_17 = arith.constant 0 : index
    %c0_18 = arith.constant 0 : index
    %10 = vector.load %arg7[%c0_15, %c0_16, %c0_17, %c0_18] : memref<1x18x18x32xf32, #tpu.memory_space<vmem>>, vector<1x16x16x32xf32>
    %11 = vector.shape_cast %10 : vector<1x16x16x32xf32> to vector<256x32xf32>
    %c0_19 = arith.constant 0 : index
    %c0_20 = arith.constant 0 : index
    %c1_21 = arith.constant 1 : index
    %c0_22 = arith.constant 0 : index
    %12 = vector.load %arg7[%c0_19, %c0_20, %c1_21, %c0_22] : memref<1x18x18x32xf32, #tpu.memory_space<vmem>>, vector<1x16x16x32xf32>
    %13 = vector.shape_cast %12 : vector<1x16x16x32xf32> to vector<256x32xf32>
    %c0_23 = arith.constant 0 : index
    %c0_24 = arith.constant 0 : index
    %c2 = arith.constant 2 : index
    %c0_25 = arith.constant 0 : index
    %14 = vector.load %arg7[%c0_23, %c0_24, %c2, %c0_25] : memref<1x18x18x32xf32, #tpu.memory_space<vmem>>, vector<1x16x16x32xf32>
    %15 = vector.shape_cast %14 : vector<1x16x16x32xf32> to vector<256x32xf32>
    %c0_26 = arith.constant 0 : index
    %c1_27 = arith.constant 1 : index
    %c0_28 = arith.constant 0 : index
    %c0_29 = arith.constant 0 : index
    %16 = vector.load %arg7[%c0_26, %c1_27, %c0_28, %c0_29] : memref<1x18x18x32xf32, #tpu.memory_space<vmem>>, vector<1x16x16x32xf32>
    %17 = vector.shape_cast %16 : vector<1x16x16x32xf32> to vector<256x32xf32>
    %c0_30 = arith.constant 0 : index
    %c1_31 = arith.constant 1 : index
    %c1_32 = arith.constant 1 : index
    %c0_33 = arith.constant 0 : index
    %18 = vector.load %arg7[%c0_30, %c1_31, %c1_32, %c0_33] : memref<1x18x18x32xf32, #tpu.memory_space<vmem>>, vector<1x16x16x32xf32>
    %19 = vector.shape_cast %18 : vector<1x16x16x32xf32> to vector<256x32xf32>
    %c0_34 = arith.constant 0 : index
    %c1_35 = arith.constant 1 : index
    %c2_36 = arith.constant 2 : index
    %c0_37 = arith.constant 0 : index
    %20 = vector.load %arg7[%c0_34, %c1_35, %c2_36, %c0_37] : memref<1x18x18x32xf32, #tpu.memory_space<vmem>>, vector<1x16x16x32xf32>
    %21 = vector.shape_cast %20 : vector<1x16x16x32xf32> to vector<256x32xf32>
    %c0_38 = arith.constant 0 : index
    %c2_39 = arith.constant 2 : index
    %c0_40 = arith.constant 0 : index
    %c0_41 = arith.constant 0 : index
    %22 = vector.load %arg7[%c0_38, %c2_39, %c0_40, %c0_41] : memref<1x18x18x32xf32, #tpu.memory_space<vmem>>, vector<1x16x16x32xf32>
    %23 = vector.shape_cast %22 : vector<1x16x16x32xf32> to vector<256x32xf32>
    %c0_42 = arith.constant 0 : index
    %c2_43 = arith.constant 2 : index
    %c1_44 = arith.constant 1 : index
    %c0_45 = arith.constant 0 : index
    %24 = vector.load %arg7[%c0_42, %c2_43, %c1_44, %c0_45] : memref<1x18x18x32xf32, #tpu.memory_space<vmem>>, vector<1x16x16x32xf32>
    %25 = vector.shape_cast %24 : vector<1x16x16x32xf32> to vector<256x32xf32>
    %c0_46 = arith.constant 0 : index
    %c2_47 = arith.constant 2 : index
    %c2_48 = arith.constant 2 : index
    %c0_49 = arith.constant 0 : index
    %26 = vector.load %arg7[%c0_46, %c2_47, %c2_48, %c0_49] : memref<1x18x18x32xf32, #tpu.memory_space<vmem>>, vector<1x16x16x32xf32>
    %27 = vector.shape_cast %26 : vector<1x16x16x32xf32> to vector<256x32xf32>
    %28 = tpu.concatenate %11, %13, %15, %17, %19, %21, %23, %25, %27 in 1 : vector<256x32xf32>, vector<256x32xf32>, vector<256x32xf32>, vector<256x32xf32>, vector<256x32xf32>, vector<256x32xf32>, vector<256x32xf32>, vector<256x32xf32>, vector<256x32xf32> -> vector<256x288xf32>
    %29 = arith.truncf %28 : vector<256x288xf32> to vector<256x288xbf16>
    %c0_50 = arith.constant 0 : index
    %c0_51 = arith.constant 0 : index
    %c0_52 = arith.constant 0 : index
    %30 = vector.load %arg2[%c0_50, %c0_51, %c0_52] : memref<2x288x64xbf16, #tpu.memory_space<vmem>>, vector<1x288x64xbf16>
    %31 = vector.shape_cast %30 : vector<1x288x64xbf16> to vector<288x64xbf16>
    %cst_53 = arith.constant dense<0.000000e+00> : vector<256x64xf32>
    %32 = tpu.matmul %29, %31, %cst_53 {dimension_numbers = #tpu.dot_dimension_numbers<[1], [0], [0], [1], [0, 0, 1, 1], [], []>} : vector<256x288xbf16>, vector<288x64xbf16>, vector<256x64xf32> -> vector<256x64xf32>
    %c0_54 = arith.constant 0 : index
    %c0_55 = arith.constant 0 : index
    %c0_56 = arith.constant 0 : index
    %33 = vector.load %arg3[%c0_54, %c0_55, %c0_56] : memref<2x1x64xf32, #tpu.memory_space<vmem>>, vector<1x1x64xf32>
    %34 = vector.shape_cast %33 : vector<1x1x64xf32> to vector<1x64xf32>
    %35 = vector.broadcast %34 : vector<1x64xf32> to vector<256x64xf32>
    %36 = arith.addf %32, %35 : vector<256x64xf32>
    %cst_57 = arith.constant 0.000000e+00 : f32
    %37 = vector.broadcast %cst_57 : f32 to vector<256x64xf32>
    %38 = arith.maximumf %36, %37 : vector<256x64xf32>
    %39 = arith.truncf %38 : vector<256x64xf32> to vector<256x64xbf16>
    %c0_58 = arith.constant 0 : index
    %c0_59 = arith.constant 0 : index
    %c0_60 = arith.constant 0 : index
    %40 = vector.load %arg4[%c0_58, %c0_59, %c0_60] : memref<2x64x32xbf16, #tpu.memory_space<vmem>>, vector<1x64x32xbf16>
    %41 = vector.shape_cast %40 : vector<1x64x32xbf16> to vector<64x32xbf16>
    %cst_61 = arith.constant dense<0.000000e+00> : vector<256x32xf32>
    %42 = tpu.matmul %39, %41, %cst_61 {dimension_numbers = #tpu.dot_dimension_numbers<[1], [0], [0], [1], [0, 0, 1, 1], [], []>} : vector<256x64xbf16>, vector<64x32xbf16>, vector<256x32xf32> -> vector<256x32xf32>
    %c0_62 = arith.constant 0 : index
    %c0_63 = arith.constant 0 : index
    %43 = vector.load %arg8[%c0_62, %c0_63] : memref<256x32xf32, #tpu.memory_space<vmem>>, vector<256x32xf32>
    %44 = arith.addf %43, %42 : vector<256x32xf32>
    %c0_64 = arith.constant 0 : index
    %c0_65 = arith.constant 0 : index
    %c0_66 = arith.constant 0 : index
    %45 = vector.load %arg5[%c0_64, %c0_65, %c0_66] : memref<2x1x32xf32, #tpu.memory_space<vmem>>, vector<1x1x32xf32>
    %46 = vector.shape_cast %45 : vector<1x1x32xf32> to vector<1x32xf32>
    %47 = vector.broadcast %46 : vector<1x32xf32> to vector<256x32xf32>
    %48 = arith.addf %44, %47 : vector<256x32xf32>
    %c0_67 = arith.constant 0 : index
    %c0_68 = arith.constant 0 : index
    %49 = vector.load %arg8[%c0_67, %c0_68] : memref<256x32xf32, #tpu.memory_space<vmem>>, vector<256x32xf32>
    tpu.vector_store %arg8[%c0_67, %c0_68], %48 {strides = array<i32>} : memref<256x32xf32, #tpu.memory_space<vmem>>, vector<256x32xf32>,
    %c0_69 = arith.constant 0 : index
    %c0_70 = arith.constant 0 : index
    %50 = vector.load %arg8[%c0_69, %c0_70] : memref<256x32xf32, #tpu.memory_space<vmem>>, vector<256x32xf32>
    %cst_71 = arith.constant 0.000000e+00 : f32
    %51 = vector.broadcast %cst_71 : f32 to vector<256x32xf32>
    %52 = arith.maximumf %50, %51 : vector<256x32xf32>
    %53 = vector.shape_cast %52 : vector<256x32xf32> to vector<1x16x16x32xf32>
    %c0_72 = arith.constant 0 : index
    %c1_73 = arith.constant 1 : index
    %c1_74 = arith.constant 1 : index
    %c0_75 = arith.constant 0 : index
    %54 = vector.load %arg7[%c0_72, %c1_73, %c1_74, %c0_75] : memref<1x18x18x32xf32, #tpu.memory_space<vmem>>, vector<1x16x16x32xf32>
    tpu.vector_store %arg7[%c0_72, %c1_73, %c1_74, %c0_75], %53 {strides = array<i32>} : memref<1x18x18x32xf32, #tpu.memory_space<vmem>>, vector<1x16x16x32xf32>,
    %c0_76 = arith.constant 0 : index
    %c0_77 = arith.constant 0 : index
    %c0_78 = arith.constant 0 : index
    %c0_79 = arith.constant 0 : index
    %55 = vector.load %arg7[%c0_76, %c0_77, %c0_78, %c0_79] : memref<1x18x18x32xf32, #tpu.memory_space<vmem>>, vector<1x16x16x32xf32>
    %56 = vector.shape_cast %55 : vector<1x16x16x32xf32> to vector<256x32xf32>
    %c0_80 = arith.constant 0 : index
    %c0_81 = arith.constant 0 : index
    %c1_82 = arith.constant 1 : index
    %c0_83 = arith.constant 0 : index
    %57 = vector.load %arg7[%c0_80, %c0_81, %c1_82, %c0_83] : memref<1x18x18x32xf32, #tpu.memory_space<vmem>>, vector<1x16x16x32xf32>
    %58 = vector.shape_cast %57 : vector<1x16x16x32xf32> to vector<256x32xf32>
    %c0_84 = arith.constant 0 : index
    %c0_85 = arith.constant 0 : index
    %c2_86 = arith.constant 2 : index
    %c0_87 = arith.constant 0 : index
    %59 = vector.load %arg7[%c0_84, %c0_85, %c2_86, %c0_87] : memref<1x18x18x32xf32, #tpu.memory_space<vmem>>, vector<1x16x16x32xf32>
    %60 = vector.shape_cast %59 : vector<1x16x16x32xf32> to vector<256x32xf32>
    %c0_88 = arith.constant 0 : index
    %c1_89 = arith.constant 1 : index
    %c0_90 = arith.constant 0 : index
    %c0_91 = arith.constant 0 : index
    %61 = vector.load %arg7[%c0_88, %c1_89, %c0_90, %c0_91] : memref<1x18x18x32xf32, #tpu.memory_space<vmem>>, vector<1x16x16x32xf32>
    %62 = vector.shape_cast %61 : vector<1x16x16x32xf32> to vector<256x32xf32>
    %c0_92 = arith.constant 0 : index
    %c1_93 = arith.constant 1 : index
    %c1_94 = arith.constant 1 : index
    %c0_95 = arith.constant 0 : index
    %63 = vector.load %arg7[%c0_92, %c1_93, %c1_94, %c0_95] : memref<1x18x18x32xf32, #tpu.memory_space<vmem>>, vector<1x16x16x32xf32>
    %64 = vector.shape_cast %63 : vector<1x16x16x32xf32> to vector<256x32xf32>
    %c0_96 = arith.constant 0 : index
    %c1_97 = arith.constant 1 : index
    %c2_98 = arith.constant 2 : index
    %c0_99 = arith.constant 0 : index
    %65 = vector.load %arg7[%c0_96, %c1_97, %c2_98, %c0_99] : memref<1x18x18x32xf32, #tpu.memory_space<vmem>>, vector<1x16x16x32xf32>
    %66 = vector.shape_cast %65 : vector<1x16x16x32xf32> to vector<256x32xf32>
    %c0_100 = arith.constant 0 : index
    %c2_101 = arith.constant 2 : index
    %c0_102 = arith.constant 0 : index
    %c0_103 = arith.constant 0 : index
    %67 = vector.load %arg7[%c0_100, %c2_101, %c0_102, %c0_103] : memref<1x18x18x32xf32, #tpu.memory_space<vmem>>, vector<1x16x16x32xf32>
    %68 = vector.shape_cast %67 : vector<1x16x16x32xf32> to vector<256x32xf32>
    %c0_104 = arith.constant 0 : index
    %c2_105 = arith.constant 2 : index
    %c1_106 = arith.constant 1 : index
    %c0_107 = arith.constant 0 : index
    %69 = vector.load %arg7[%c0_104, %c2_105, %c1_106, %c0_107] : memref<1x18x18x32xf32, #tpu.memory_space<vmem>>, vector<1x16x16x32xf32>
    %70 = vector.shape_cast %69 : vector<1x16x16x32xf32> to vector<256x32xf32>
    %c0_108 = arith.constant 0 : index
    %c2_109 = arith.constant 2 : index
    %c2_110 = arith.constant 2 : index
    %c0_111 = arith.constant 0 : index
    %71 = vector.load %arg7[%c0_108, %c2_109, %c2_110, %c0_111] : memref<1x18x18x32xf32, #tpu.memory_space<vmem>>, vector<1x16x16x32xf32>
    %72 = vector.shape_cast %71 : vector<1x16x16x32xf32> to vector<256x32xf32>
    %73 = tpu.concatenate %56, %58, %60, %62, %64, %66, %68, %70, %72 in 1 : vector<256x32xf32>, vector<256x32xf32>, vector<256x32xf32>, vector<256x32xf32>, vector<256x32xf32>, vector<256x32xf32>, vector<256x32xf32>, vector<256x32xf32>, vector<256x32xf32> -> vector<256x288xf32>
    %74 = arith.truncf %73 : vector<256x288xf32> to vector<256x288xbf16>
    %c1_112 = arith.constant 1 : index
    %c0_113 = arith.constant 0 : index
    %c0_114 = arith.constant 0 : index
    %75 = vector.load %arg2[%c1_112, %c0_113, %c0_114] : memref<2x288x64xbf16, #tpu.memory_space<vmem>>, vector<1x288x64xbf16>
    %76 = vector.shape_cast %75 : vector<1x288x64xbf16> to vector<288x64xbf16>
    %cst_115 = arith.constant dense<0.000000e+00> : vector<256x64xf32>
    %77 = tpu.matmul %74, %76, %cst_115 {dimension_numbers = #tpu.dot_dimension_numbers<[1], [0], [0], [1], [0, 0, 1, 1], [], []>} : vector<256x288xbf16>, vector<288x64xbf16>, vector<256x64xf32> -> vector<256x64xf32>
    %c1_116 = arith.constant 1 : index
    %c0_117 = arith.constant 0 : index
    %c0_118 = arith.constant 0 : index
    %78 = vector.load %arg3[%c1_116, %c0_117, %c0_118] : memref<2x1x64xf32, #tpu.memory_space<vmem>>, vector<1x1x64xf32>
    %79 = vector.shape_cast %78 : vector<1x1x64xf32> to vector<1x64xf32>
    %80 = vector.broadcast %79 : vector<1x64xf32> to vector<256x64xf32>
    %81 = arith.addf %77, %80 : vector<256x64xf32>
    %cst_119 = arith.constant 0.000000e+00 : f32
    %82 = vector.broadcast %cst_119 : f32 to vector<256x64xf32>
    %83 = arith.maximumf %81, %82 : vector<256x64xf32>
    %84 = arith.truncf %83 : vector<256x64xf32> to vector<256x64xbf16>
    %c1_120 = arith.constant 1 : index
    %c0_121 = arith.constant 0 : index
    %c0_122 = arith.constant 0 : index
    %85 = vector.load %arg4[%c1_120, %c0_121, %c0_122] : memref<2x64x32xbf16, #tpu.memory_space<vmem>>, vector<1x64x32xbf16>
    %86 = vector.shape_cast %85 : vector<1x64x32xbf16> to vector<64x32xbf16>
    %cst_123 = arith.constant dense<0.000000e+00> : vector<256x32xf32>
    %87 = tpu.matmul %84, %86, %cst_123 {dimension_numbers = #tpu.dot_dimension_numbers<[1], [0], [0], [1], [0, 0, 1, 1], [], []>} : vector<256x64xbf16>, vector<64x32xbf16>, vector<256x32xf32> -> vector<256x32xf32>
    %c0_124 = arith.constant 0 : index
    %c0_125 = arith.constant 0 : index
    %88 = vector.load %arg8[%c0_124, %c0_125] : memref<256x32xf32, #tpu.memory_space<vmem>>, vector<256x32xf32>
    %89 = arith.addf %88, %87 : vector<256x32xf32>
    %c1_126 = arith.constant 1 : index
    %c0_127 = arith.constant 0 : index
    %c0_128 = arith.constant 0 : index
    %90 = vector.load %arg5[%c1_126, %c0_127, %c0_128] : memref<2x1x32xf32, #tpu.memory_space<vmem>>, vector<1x1x32xf32>
    %91 = vector.shape_cast %90 : vector<1x1x32xf32> to vector<1x32xf32>
    %92 = vector.broadcast %91 : vector<1x32xf32> to vector<256x32xf32>
    %93 = arith.addf %89, %92 : vector<256x32xf32>
    %c0_129 = arith.constant 0 : index
    %c0_130 = arith.constant 0 : index
    %94 = vector.load %arg8[%c0_129, %c0_130] : memref<256x32xf32, #tpu.memory_space<vmem>>, vector<256x32xf32>
    tpu.vector_store %arg8[%c0_129, %c0_130], %93 {strides = array<i32>} : memref<256x32xf32, #tpu.memory_space<vmem>>, vector<256x32xf32>,
    %c0_131 = arith.constant 0 : index
    %c0_132 = arith.constant 0 : index
    %95 = vector.load %arg8[%c0_131, %c0_132] : memref<256x32xf32, #tpu.memory_space<vmem>>, vector<256x32xf32>
    %96 = vector.shape_cast %95 : vector<256x32xf32> to vector<1x16x16x32xf32>
    %c0_133 = arith.constant 0 : index
    %c0_134 = arith.constant 0 : index
    %c0_135 = arith.constant 0 : index
    %c0_136 = arith.constant 0 : index
    %97 = vector.load %arg6[%c0_133, %c0_134, %c0_135, %c0_136] : memref<1x16x16x32xf32, #tpu.memory_space<vmem>>, vector<1x16x16x32xf32>
    tpu.vector_store %arg6[%c0_133, %c0_134, %c0_135, %c0_136], %96 {strides = array<i32>} : memref<1x16x16x32xf32, #tpu.memory_space<vmem>>, vector<1x16x16x32xf32>,
    return
  }
  func.func @transform_0(%arg0: i32) -> (i32, i32, i32, i32) {
    %c0_i32 = arith.constant 0 : i32
    %c0_i32_0 = arith.constant 0 : i32
    %c0_i32_1 = arith.constant 0 : i32
    %c0_i32_2 = arith.constant 0 : i32
    return %arg0, %c0_i32, %c0_i32_0, %c0_i32_1 : i32, i32, i32, i32
  }
  func.func @transform_1(%arg0: i32) -> (i32, i32, i32) {
    %c0_i32 = arith.constant 0 : i32
    %c0_i32_0 = arith.constant 0 : i32
    %c0_i32_1 = arith.constant 0 : i32
    %c0_i32_2 = arith.constant 0 : i32
    return %c0_i32, %c0_i32_0, %c0_i32_1 : i32, i32, i32
  }
  func.func @transform_2(%arg0: i32) -> (i32, i32, i32) {
    %c0_i32 = arith.constant 0 : i32
    %c0_i32_0 = arith.constant 0 : i32
    %c0_i32_1 = arith.constant 0 : i32
    %c0_i32_2 = arith.constant 0 : i32
    return %c0_i32, %c0_i32_0, %c0_i32_1 : i32, i32, i32
  }
  func.func @transform_3(%arg0: i32) -> (i32, i32, i32) {
    %c0_i32 = arith.constant 0 : i32
    %c0_i32_0 = arith.constant 0 : i32
    %c0_i32_1 = arith.constant 0 : i32
    %c0_i32_2 = arith.constant 0 : i32
    return %c0_i32, %c0_i32_0, %c0_i32_1 : i32, i32, i32
  }
  func.func @transform_4(%arg0: i32) -> (i32, i32, i32) {
    %c0_i32 = arith.constant 0 : i32
    %c0_i32_0 = arith.constant 0 : i32
    %c0_i32_1 = arith.constant 0 : i32
    %c0_i32_2 = arith.constant 0 : i32
    return %c0_i32, %c0_i32_0, %c0_i32_1 : i32, i32, i32
  }
  func.func @transform_5(%arg0: i32) -> (i32, i32, i32, i32) {
    %c0_i32 = arith.constant 0 : i32
    %c0_i32_0 = arith.constant 0 : i32
    %c0_i32_1 = arith.constant 0 : i32
    %c0_i32_2 = arith.constant 0 : i32
    return %arg0, %c0_i32, %c0_i32_0, %c0_i32_1 : i32, i32, i32, i32
  }
}

</mosaic_0001>

<llo_original>
// kernel: residual_block_forward.1
$region0: #{residual_block_forward.1}
  #allocation0 [shape = 'u32[]', space=smem, size = 0x4, offset = 0x4, fixed_abs, tag = 'smem constant byte address 0x4 - core index']
  #allocation1 [shape = 'u32[144,128]{1,0:T(1,128)}', space=vmem, size = 0x12000, scoped, tag = 'internal scratch']
  #allocation2 [shape = 'f32[1,18,18,32]{3,2,1,0:T(8,128)}', space=vmem, size = 0x36000, scoped, tag = 'scratch operand']
  #allocation3 [shape = 'f32[256,32]{1,0:T(8,128)}', space=vmem, size = 0x20000, scoped, tag = 'scratch operand']
  %s0 = inlined_call_operand.vmem [shape: f32[2,16,16,32], index: 0, kind: input, shape index: {}]
  %s1 = inlined_call_operand.vmem [shape: bf16[2,288,64], index: 1, kind: input, shape index: {}]
  %s2 = inlined_call_operand.vmem [shape: f32[2,1,64], index: 2, kind: input, shape index: {}]
  %s3 = inlined_call_operand.vmem [shape: bf16[2,64,32], index: 3, kind: input, shape index: {}]
  %s4 = inlined_call_operand.vmem [shape: f32[2,1,32], index: 4, kind: input, shape index: {}]
  %s5 = inlined_call_operand.hbm [shape: f32[2,16,16,32], index: 5, kind: output, shape index: {}]
  %s6 = sld [smem:[#allocation0]]
  $region53: #{residual_block_forward.1} parent=0
    _
  %s8 = ssub.s32 1, %s6
  %s9 = scalar_select 0, %s8, %s6
  $region1: #{residual_block_forward.1} parent=0
    #allocation4 [shape = 'u8[262144]{0}', space=vmem, size = 0x40000, scoped, tag = 'output window, operand 0']
    #allocation5 [shape = 's32[2]{0}', space=sflag, size = 0x8, scoped, tag = 'scoped memory for residual_block_forward.1']
    %10 = vsyncpa [#allocation5], 0
    %s11 = scalar_lea.sflag [#allocation5], 1
    %12 = vsyncpa %s11, 0
    loop: start=0, step=1, limit=4
    $region2: #{residual_block_forward.1} parent=1 // loop_pre_header
      _
    $region3: #{residual_block_forward.1} parent=1 // loop_header
      %s14 = sphi 0, %s18
      %p15 = scmp.ge.s32.totalorder %s14, 4
      %s24 = sphi 0, %s26
      %s27 = sphi 0, %s24
      %s28 = sphi 0, %s27
      %s44 = sphi 0, %s28
      %s48 = sphi 0, %s48
      %s50 = sphi 0, %s48
      %s51 = sphi 0, %s50
      %s65 = sphi 0, %s51
      %s69 = sphi 0, %s69
      %s71 = sphi 0, %s69
      %s72 = sphi 0, %s71
      %s86 = sphi 0, %s72
      %s90 = sphi 0, %s90
      %s92 = sphi 0, %s90
      %s93 = sphi 0, %s92
      %s107 = sphi 0, %s93
      %s111 = sphi 0, %s111
      %s113 = sphi 0, %s111
      %s114 = sphi 0, %s113
      %s128 = sphi 0, %s114
      %s134 = sphi 0, %s136
      %s137 = sphi 0, %s134
      %s138 = sphi 0, %s137
      %s154 = sphi 0, %s138
    $region4: #{residual_block_forward.1} parent=1 // loop_header_branch
      %17 = sbr.rel (%p15) target = $region8
    $region5: #{residual_block_forward.1} parent=1 // loop_body
      %s19 = ssub.s32 %s14, 1
      %s20 = ssub.s32 %s14, 2
      %s21 = sadd.s32 %s14, 1
      %s22 = ssub.s32 %s14, %s21
      %p23 = scmp.eq.s32.totalorder %s22, 0
      %s25 = sadd.s32 %s24, 1
      %s26 = scalar_select %p23, %s24, %s25
      %p29 = pneg %p23
      %p30 = scmp.eq.s32.totalorder %s14, 1
      %p31 = por %p29, %p30
      %p32 = scmp.ne.s32.totalorder %s24, %s27
      %p33 = scmp.eq.s32.totalorder %s14, 0
      %p34 = por %p32, %p33
      %p35 = scmp.ne.s32.totalorder %s24, %s27
      %p36 = scmp.eq.s32.totalorder %s19, 1
      %p37 = por %p35, %p36
      %p38 = scmp.ne.s32.totalorder %s27, %s28
      %p39 = scmp.eq.s32.totalorder %s19, 0
      %p40 = por %p38, %p39
      %p41 = scmp.ne.s32.totalorder %s27, %s28
      %p42 = scmp.eq.s32.totalorder %s20, 1
      %p43 = por %p41, %p42
      %p45 = scmp.ne.s32.totalorder %s28, %s44
      %p46 = scmp.eq.s32.totalorder %s20, 0
      %p47 = por %p45, %p46
      %s49 = sadd.s32 %s48, 1
      %p52 = scmp.eq.s32.totalorder %s14, 1
      %p53 = scmp.ne.s32.totalorder %s48, %s50
      %p54 = scmp.eq.s32.totalorder %s14, 0
      %p55 = por %p53, %p54
      %p56 = scmp.ne.s32.totalorder %s48, %s50
      %p57 = scmp.eq.s32.totalorder %s19, 1
      %p58 = por %p56, %p57
      %p59 = scmp.ne.s32.totalorder %s50, %s51
      %p60 = scmp.eq.s32.totalorder %s19, 0
      %p61 = por %p59, %p60
      %p62 = scmp.ne.s32.totalorder %s50, %s51
      %p63 = scmp.eq.s32.totalorder %s20, 1
      %p64 = por %p62, %p63
      %p66 = scmp.ne.s32.totalorder %s51, %s65
      %p67 = scmp.eq.s32.totalorder %s20, 0
      %p68 = por %p66, %p67
      %s70 = sadd.s32 %s69, 1
      %p73 = scmp.eq.s32.totalorder %s14, 1
      %p74 = scmp.ne.s32.totalorder %s69, %s71
      %p75 = scmp.eq.s32.totalorder %s14, 0
      %p76 = por %p74, %p75
      %p77 = scmp.ne.s32.totalorder %s69, %s71
      %p78 = scmp.eq.s32.totalorder %s19, 1
      %p79 = por %p77, %p78
      %p80 = scmp.ne.s32.totalorder %s71, %s72
      %p81 = scmp.eq.s32.totalorder %s19, 0
      %p82 = por %p80, %p81
      %p83 = scmp.ne.s32.totalorder %s71, %s72
      %p84 = scmp.eq.s32.totalorder %s20, 1
      %p85 = por %p83, %p84
      %p87 = scmp.ne.s32.totalorder %s72, %s86
      %p88 = scmp.eq.s32.totalorder %s20, 0
      %p89 = por %p87, %p88
      %s91 = sadd.s32 %s90, 1
      %p94 = scmp.eq.s32.totalorder %s14, 1
      %p95 = scmp.ne.s32.totalorder %s90, %s92
      %p96 = scmp.eq.s32.totalorder %s14, 0
      %p97 = por %p95, %p96
      %p98 = scmp.ne.s32.totalorder %s90, %s92
      %p99 = scmp.eq.s32.totalorder %s19, 1
      %p100 = por %p98, %p99
      %p101 = scmp.ne.s32.totalorder %s92, %s93
      %p102 = scmp.eq.s32.totalorder %s19, 0
      %p103 = por %p101, %p102
      %p104 = scmp.ne.s32.totalorder %s92, %s93
      %p105 = scmp.eq.s32.totalorder %s20, 1
      %p106 = por %p104, %p105
      %p108 = scmp.ne.s32.totalorder %s93, %s107
      %p109 = scmp.eq.s32.totalorder %s20, 0
      %p110 = por %p108, %p109
      %s112 = sadd.s32 %s111, 1
      %p115 = scmp.eq.s32.totalorder %s14, 1
      %p116 = scmp.ne.s32.totalorder %s111, %s113
      %p117 = scmp.eq.s32.totalorder %s14, 0
      %p118 = por %p116, %p117
      %p119 = scmp.ne.s32.totalorder %s111, %s113
      %p120 = scmp.eq.s32.totalorder %s19, 1
      %p121 = por %p119, %p120
      %p122 = scmp.ne.s32.totalorder %s113, %s114
      %p123 = scmp.eq.s32.totalorder %s19, 0
      %p124 = por %p122, %p123
      %p125 = scmp.ne.s32.totalorder %s113, %s114
      %p126 = scmp.eq.s32.totalorder %s20, 1
      %p127 = por %p125, %p126
      %p129 = scmp.ne.s32.totalorder %s114, %s128
      %p130 = scmp.eq.s32.totalorder %s20, 0
      %p131 = por %p129, %p130
      %s132 = ssub.s32 %s14, %s21
      %p133 = scmp.eq.s32.totalorder %s132, 0
      %s135 = sadd.s32 %s134, 1
      %s136 = scalar_select %p133, %s134, %s135
      %p139 = pneg %p133
      %p140 = scmp.eq.s32.totalorder %s14, 1
      %p141 = por %p139, %p140
      %p142 = scmp.ne.s32.totalorder %s134, %s137
      %p143 = scmp.eq.s32.totalorder %s14, 0
      %p144 = por %p142, %p143
      %p145 = scmp.ne.s32.totalorder %s134, %s137
      %p146 = scmp.eq.s32.totalorder %s19, 1
      %p147 = por %p145, %p146
      %p148 = scmp.ne.s32.totalorder %s137, %s138
      %p149 = scmp.eq.s32.totalorder %s19, 0
      %p150 = por %p148, %p149
      %p151 = scmp.ne.s32.totalorder %s137, %s138
      %p152 = scmp.eq.s32.totalorder %s20, 1
      %p153 = por %p151, %p152
      %p155 = scmp.ne.s32.totalorder %s138, %s154
      %p156 = scmp.eq.s32.totalorder %s20, 0
      %p157 = por %p155, %p156
      %p158 = scmp.le.s32.totalorder 1, %s14
      %p159 = scmp.lt.s32.totalorder %s14, 3
      %p160 = pnand %p158, %p159
      %p161 = pneg %p160
      // Predicated region
      $region9: #{residual_block_forward.1} parent=5 // pred_check
        _
      $region10: #{residual_block_forward.1} parent=5 // pred_check_branch
        %163 = sbr.rel (%p160) target = $region12
      $region11: #{residual_block_forward.1} parent=5 // pred_region
        %s164 = ssub.s32 %s14, 1
        // Predicated region
        $region13: #{residual_block_forward.1} parent=11 // pred_check
          %p165 = pneg %p61
        $region14: #{residual_block_forward.1} parent=11 // pred_check_branch
          %167 = sbr.rel (%p165) target = $region16
        $region15: #{residual_block_forward.1} parent=11 // pred_region
          _
        $region16: #{residual_block_forward.1} parent=11 // pred_fallthru
          _
        // Predicated region
        $region17: #{residual_block_forward.1} parent=11 // pred_check
          %p168 = pneg %p82
        $region18: #{residual_block_forward.1} parent=11 // pred_check_branch
          %170 = sbr.rel (%p168) target = $region20
        $region19: #{residual_block_forward.1} parent=11 // pred_region
          _
        $region20: #{residual_block_forward.1} parent=11 // pred_fallthru
          _
        // Predicated region
        $region21: #{residual_block_forward.1} parent=11 // pred_check
          %p171 = pneg %p103
        $region22: #{residual_block_forward.1} parent=11 // pred_check_branch
          %173 = sbr.rel (%p171) target = $region24
        $region23: #{residual_block_forward.1} parent=11 // pred_region
          _
        $region24: #{residual_block_forward.1} parent=11 // pred_fallthru
          _
        // Predicated region
        $region25: #{residual_block_forward.1} parent=11 // pred_check
          %p174 = pneg %p124
        $region26: #{residual_block_forward.1} parent=11 // pred_check_branch
          %176 = sbr.rel (%p174) target = $region28
        $region27: #{residual_block_forward.1} parent=11 // pred_region
          _
        $region28: #{residual_block_forward.1} parent=11 // pred_fallthru
          _
      $region12: #{residual_block_forward.1} parent=5 // pred_fallthru
        _
      %p177 = scmp.lt.s32.totalorder %s14, 2
      // Predicated region
      $region29: #{residual_block_forward.1} parent=5 // pred_check
        %p178 = pneg %p177
      $region30: #{residual_block_forward.1} parent=5 // pred_check_branch
        %180 = sbr.rel (%p178) target = $region32
      $region31: #{residual_block_forward.1} parent=5 // pred_region
        // Predicated region
        $region33: #{residual_block_forward.1} parent=31 // pred_check
          %p181 = pneg %p34
        $region34: #{residual_block_forward.1} parent=31 // pred_check_branch
          %183 = sbr.rel (%p181) target = $region36
        $region35: #{residual_block_forward.1} parent=31 // pred_region
          %p184 = scmp.lt.s32.totalorder %s14, 1
          %s185 = scalar_select %p184, %s14, 1
          %s186 = smul.addr %s185, 32
          %s187 = smul.addr %s186, 8
          %s188 = scalar_lea.vmem %s0, %s187
        $region36: #{residual_block_forward.1} parent=31 // pred_fallthru
          _
      $region32: #{residual_block_forward.1} parent=5 // pred_fallthru
        _
      %p189 = scmp.le.s32.totalorder 1, %s14
      %p190 = scmp.lt.s32.totalorder %s14, 3
      %p191 = pnand %p189, %p190
      %p192 = pneg %p191
      // Predicated region
      $region37: #{residual_block_forward.1} parent=5 // pred_check
        _
      $region38: #{residual_block_forward.1} parent=5 // pred_check_branch
        %194 = sbr.rel (%p191) target = $region40
      $region39: #{residual_block_forward.1} parent=5 // pred_region
        %s195 = ssub.s32 %s14, 1
        %p196 = scmp.lt.s32.totalorder %s19, 1
        %s197 = scalar_select %p196, %s19, 1
        %s198 = smul.addr %s197, 32
        %s199 = smul.addr %s198, 8
        %s200 = scalar_lea.vmem %s0, %s199
        %p201 = pneg %p40
        %p202 = pneg %p37
        %p203 = pneg %p61
        %p204 = pneg %p58
        %p205 = pneg %p82
        %p206 = pneg %p79
        %p207 = pneg %p103
        %p208 = pneg %p100
        %p209 = pneg %p124
        %p210 = pneg %p121
        %p211 = pneg %p150
        %p212 = pneg %p147
        %s213 = sand.u32 %s137, 1
        %s214 = scalar_lea.sflag [#allocation5], %s213
        %s215 = sand.u32 %s137, 1
        %s216 = smul.addr %s215, 256
        %s217 = scalar_lea.vmem [#allocation4], %s216
        %p218 = scmp.lt.s32.totalorder %s19, 1
        %s219 = scalar_select %p218, %s19, 1
        %s220 = smul.addr %s219, 32
        %s221 = smul.addr %s220, 8
        %s222 = scalar_lea.vmem %s0, %s221
        %v224 = vld [vmem:[%s222] sm:$0xff]
        %v225 = vld [vmem:[%s222 + $0x8] sm:$0xff]
        %v226 = vld [vmem:[%s222 + $0x10] sm:$0xff]
        %v227 = vld [vmem:[%s222 + $0x18] sm:$0xff]
        %v228 = vld [vmem:[%s222 + $0x20] sm:$0xff]
        %v229 = vld [vmem:[%s222 + $0x28] sm:$0xff]
        %v230 = vld [vmem:[%s222 + $0x30] sm:$0xff]
        %v231 = vld [vmem:[%s222 + $0x38] sm:$0xff]
        %v232 = vld [vmem:[%s222 + $0x40] sm:$0xff]
        %v233 = vld [vmem:[%s222 + $0x48] sm:$0xff]
        %v234 = vld [vmem:[%s222 + $0x50] sm:$0xff]
        %v235 = vld [vmem:[%s222 + $0x58] sm:$0xff]
        %v236 = vld [vmem:[%s222 + $0x60] sm:$0xff]
        %v237 = vld [vmem:[%s222 + $0x68] sm:$0xff]
        %v238 = vld [vmem:[%s222 + $0x70] sm:$0xff]
        %v239 = vld [vmem:[%s222 + $0x78] sm:$0xff]
        %v240 = vld [vmem:[%s222 + $0x80] sm:$0xff]
        %v241 = vld [vmem:[%s222 + $0x88] sm:$0xff]
        %v242 = vld [vmem:[%s222 + $0x90] sm:$0xff]
        %v243 = vld [vmem:[%s222 + $0x98] sm:$0xff]
        %v244 = vld [vmem:[%s222 + $0xa0] sm:$0xff]
        %v245 = vld [vmem:[%s222 + $0xa8] sm:$0xff]
        %v246 = vld [vmem:[%s222 + $0xb0] sm:$0xff]
        %v247 = vld [vmem:[%s222 + $0xb8] sm:$0xff]
        %v248 = vld [vmem:[%s222 + $0xc0] sm:$0xff]
        %v249 = vld [vmem:[%s222 + $0xc8] sm:$0xff]
        %v250 = vld [vmem:[%s222 + $0xd0] sm:$0xff]
        %v251 = vld [vmem:[%s222 + $0xd8] sm:$0xff]
        %v252 = vld [vmem:[%s222 + $0xe0] sm:$0xff]
        %v253 = vld [vmem:[%s222 + $0xe8] sm:$0xff]
        %v254 = vld [vmem:[%s222 + $0xf0] sm:$0xff]
        %v255 = vld [vmem:[%s222 + $0xf8] sm:$0xff]
        %vm256 = vcmask 261120
        %257 = vst.msk [vmem:[#allocation3] sm:$0xff] %vm256, %v224
        %258 = vst.msk [vmem:[#allocation3 + $0x8] sm:$0xff] %vm256, %v225
        %259 = vst.msk [vmem:[#allocation3 + $0x10] sm:$0xff] %vm256, %v226
        %260 = vst.msk [vmem:[#allocation3 + $0x18] sm:$0xff] %vm256, %v227
        %261 = vst.msk [vmem:[#allocation3 + $0x20] sm:$0xff] %vm256, %v228
        %262 = vst.msk [vmem:[#allocation3 + $0x28] sm:$0xff] %vm256, %v229
        %263 = vst.msk [vmem:[#allocation3 + $0x30] sm:$0xff] %vm256, %v230
        %264 = vst.msk [vmem:[#allocation3 + $0x38] sm:$0xff] %vm256, %v231
        %265 = vst.msk [vmem:[#allocation3 + $0x40] sm:$0xff] %vm256, %v232
        %266 = vst.msk [vmem:[#allocation3 + $0x48] sm:$0xff] %vm256, %v233
        %267 = vst.msk [vmem:[#allocation3 + $0x50] sm:$0xff] %vm256, %v234
        %268 = vst.msk [vmem:[#allocation3 + $0x58] sm:$0xff] %vm256, %v235
        %269 = vst.msk [vmem:[#allocation3 + $0x60] sm:$0xff] %vm256, %v236
        %270 = vst.msk [vmem:[#allocation3 + $0x68] sm:$0xff] %vm256, %v237
        %271 = vst.msk [vmem:[#allocation3 + $0x70] sm:$0xff] %vm256, %v238
        %272 = vst.msk [vmem:[#allocation3 + $0x78] sm:$0xff] %vm256, %v239
        %273 = vst.msk [vmem:[#allocation3 + $0x80] sm:$0xff] %vm256, %v240
        %274 = vst.msk [vmem:[#allocation3 + $0x88] sm:$0xff] %vm256, %v241
        %275 = vst.msk [vmem:[#allocation3 + $0x90] sm:$0xff] %vm256, %v242
        %276 = vst.msk [vmem:[#allocation3 + $0x98] sm:$0xff] %vm256, %v243
        %277 = vst.msk [vmem:[#allocation3 + $0xa0] sm:$0xff] %vm256, %v244
        %278 = vst.msk [vmem:[#allocation3 + $0xa8] sm:$0xff] %vm256, %v245
        %279 = vst.msk [vmem:[#allocation3 + $0xb0] sm:$0xff] %vm256, %v246
        %280 = vst.msk [vmem:[#allocation3 + $0xb8] sm:$0xff] %vm256, %v247
        %281 = vst.msk [vmem:[#allocation3 + $0xc0] sm:$0xff] %vm256, %v248
        %282 = vst.msk [vmem:[#allocation3 + $0xc8] sm:$0xff] %vm256, %v249
        %283 = vst.msk [vmem:[#allocation3 + $0xd0] sm:$0xff] %vm256, %v250
        %284 = vst.msk [vmem:[#allocation3 + $0xd8] sm:$0xff] %vm256, %v251
        %285 = vst.msk [vmem:[#allocation3 + $0xe0] sm:$0xff] %vm256, %v252
        %286 = vst.msk [vmem:[#allocation3 + $0xe8] sm:$0xff] %vm256, %v253
        %287 = vst.msk [vmem:[#allocation3 + $0xf0] sm:$0xff] %vm256, %v254
        %288 = vst.msk [vmem:[#allocation3 + $0xf8] sm:$0xff] %vm256, %v255
        %289 = vst.msk [vmem:[#allocation2] sm:$0xff] %vm256, 0.0
        %290 = vst.msk [vmem:[#allocation2 + $0x8] sm:$0xff] %vm256, 0.0
        %vm291 = vcmask 254976
        %292 = vst.msk [vmem:[#allocation2 + $0x10] sm:$0x3] %vm291, 0.0
        %293 = vst.msk [vmem:[#allocation2 + $0x18] sm:$0xff] %vm256, 0.0
        %294 = vst.msk [vmem:[#allocation2 + $0x20] sm:$0xff] %vm256, 0.0
        %295 = vst.msk [vmem:[#allocation2 + $0x28] sm:$0x3] %vm291, 0.0
        %296 = vst.msk [vmem:[#allocation2 + $0x30] sm:$0xff] %vm256, 0.0
        %297 = vst.msk [vmem:[#allocation2 + $0x38] sm:$0xff] %vm256, 0.0
        %298 = vst.msk [vmem:[#allocation2 + $0x40] sm:$0x3] %vm291, 0.0
        %299 = vst.msk [vmem:[#allocation2 + $0x48] sm:$0xff] %vm256, 0.0
        %300 = vst.msk [vmem:[#allocation2 + $0x50] sm:$0xff] %vm256, 0.0
        %301 = vst.msk [vmem:[#allocation2 + $0x58] sm:$0x3] %vm291, 0.0
        %302 = vst.msk [vmem:[#allocation2 + $0x60] sm:$0xff] %vm256, 0.0
        %303 = vst.msk [vmem:[#allocation2 + $0x68] sm:$0xff] %vm256, 0.0
        %304 = vst.msk [vmem:[#allocation2 + $0x70] sm:$0x3] %vm291, 0.0
        %305 = vst.msk [vmem:[#allocation2 + $0x78] sm:$0xff] %vm256, 0.0
        %306 = vst.msk [vmem:[#allocation2 + $0x80] sm:$0xff] %vm256, 0.0
        %307 = vst.msk [vmem:[#allocation2 + $0x88] sm:$0x3] %vm291, 0.0
        %308 = vst.msk [vmem:[#allocation2 + $0x90] sm:$0xff] %vm256, 0.0
        %309 = vst.msk [vmem:[#allocation2 + $0x98] sm:$0xff] %vm256, 0.0
        %310 = vst.msk [vmem:[#allocation2 + $0xa0] sm:$0x3] %vm291, 0.0
        %311 = vst.msk [vmem:[#allocation2 + $0xa8] sm:$0xff] %vm256, 0.0
        %312 = vst.msk [vmem:[#allocation2 + $0xb0] sm:$0xff] %vm256, 0.0
        %313 = vst.msk [vmem:[#allocation2 + $0xb8] sm:$0x3] %vm291, 0.0
        %314 = vst.msk [vmem:[#allocation2 + $0xc0] sm:$0xff] %vm256, 0.0
        %315 = vst.msk [vmem:[#allocation2 + $0xc8] sm:$0xff] %vm256, 0.0
        %316 = vst.msk [vmem:[#allocation2 + $0xd0] sm:$0x3] %vm291, 0.0
        %317 = vst.msk [vmem:[#allocation2 + $0xd8] sm:$0xff] %vm256, 0.0
        %318 = vst.msk [vmem:[#allocation2 + $0xe0] sm:$0xff] %vm256, 0.0
        %319 = vst.msk [vmem:[#allocation2 + $0xe8] sm:$0x3] %vm291, 0.0
        %320 = vst.msk [vmem:[#allocation2 + $0xf0] sm:$0xff] %vm256, 0.0
        %321 = vst.msk [vmem:[#allocation2 + $0xf8] sm:$0xff] %vm256, 0.0
        %322 = vst.msk [vmem:[#allocation2 + $0x100] sm:$0x3] %vm291, 0.0
        %323 = vst.msk [vmem:[#allocation2 + $0x108] sm:$0xff] %vm256, 0.0
        %324 = vst.msk [vmem:[#allocation2 + $0x110] sm:$0xff] %vm256, 0.0
        %325 = vst.msk [vmem:[#allocation2 + $0x118] sm:$0x3] %vm291, 0.0
        %326 = vst.msk [vmem:[#allocation2 + $0x120] sm:$0xff] %vm256, 0.0
        %327 = vst.msk [vmem:[#allocation2 + $0x128] sm:$0xff] %vm256, 0.0
        %328 = vst.msk [vmem:[#allocation2 + $0x130] sm:$0x3] %vm291, 0.0
        %329 = vst.msk [vmem:[#allocation2 + $0x138] sm:$0xff] %vm256, 0.0
        %330 = vst.msk [vmem:[#allocation2 + $0x140] sm:$0xff] %vm256, 0.0
        %331 = vst.msk [vmem:[#allocation2 + $0x148] sm:$0x3] %vm291, 0.0
        %332 = vst.msk [vmem:[#allocation2 + $0x150] sm:$0xff] %vm256, 0.0
        %333 = vst.msk [vmem:[#allocation2 + $0x158] sm:$0xff] %vm256, 0.0
        %334 = vst.msk [vmem:[#allocation2 + $0x160] sm:$0x3] %vm291, 0.0
        %335 = vst.msk [vmem:[#allocation2 + $0x168] sm:$0xff] %vm256, 0.0
        %336 = vst.msk [vmem:[#allocation2 + $0x170] sm:$0xff] %vm256, 0.0
        %337 = vst.msk [vmem:[#allocation2 + $0x178] sm:$0x3] %vm291, 0.0
        %338 = vst.msk [vmem:[#allocation2 + $0x180] sm:$0xff] %vm256, 0.0
        %339 = vst.msk [vmem:[#allocation2 + $0x188] sm:$0xff] %vm256, 0.0
        %340 = vst.msk [vmem:[#allocation2 + $0x190] sm:$0x3] %vm291, 0.0
        %341 = vst.msk [vmem:[#allocation2 + $0x198] sm:$0xff] %vm256, 0.0
        %342 = vst.msk [vmem:[#allocation2 + $0x1a0] sm:$0xff] %vm256, 0.0
        %343 = vst.msk [vmem:[#allocation2 + $0x1a8] sm:$0x3] %vm291, 0.0
        %v344 = vld [vmem:[#allocation3] sm:$0xff]
        %v345 = vld [vmem:[#allocation3 + $0x8] sm:$0xff]
        %v346 = vld [vmem:[#allocation3 + $0x10] sm:$0xff]
        %v347 = vld [vmem:[#allocation3 + $0x18] sm:$0xff]
        %v348 = vld [vmem:[#allocation3 + $0x20] sm:$0xff]
        %v349 = vld [vmem:[#allocation3 + $0x28] sm:$0xff]
        %v350 = vld [vmem:[#allocation3 + $0x30] sm:$0xff]
        %v351 = vld [vmem:[#allocation3 + $0x38] sm:$0xff]
        %v352 = vld [vmem:[#allocation3 + $0x40] sm:$0xff]
        %v353 = vld [vmem:[#allocation3 + $0x48] sm:$0xff]
        %v354 = vld [vmem:[#allocation3 + $0x50] sm:$0xff]
        %v355 = vld [vmem:[#allocation3 + $0x58] sm:$0xff]
        %v356 = vld [vmem:[#allocation3 + $0x60] sm:$0xff]
        %v357 = vld [vmem:[#allocation3 + $0x68] sm:$0xff]
        %v358 = vld [vmem:[#allocation3 + $0x70] sm:$0xff]
        %v359 = vld [vmem:[#allocation3 + $0x78] sm:$0xff]
        %v360 = vld [vmem:[#allocation3 + $0x80] sm:$0xff]
        %v361 = vld [vmem:[#allocation3 + $0x88] sm:$0xff]
        %v362 = vld [vmem:[#allocation3 + $0x90] sm:$0xff]
        %v363 = vld [vmem:[#allocation3 + $0x98] sm:$0xff]
        %v364 = vld [vmem:[#allocation3 + $0xa0] sm:$0xff]
        %v365 = vld [vmem:[#allocation3 + $0xa8] sm:$0xff]
        %v366 = vld [vmem:[#allocation3 + $0xb0] sm:$0xff]
        %v367 = vld [vmem:[#allocation3 + $0xb8] sm:$0xff]
        %v368 = vld [vmem:[#allocation3 + $0xc0] sm:$0xff]
        %v369 = vld [vmem:[#allocation3 + $0xc8] sm:$0xff]
        %v370 = vld [vmem:[#allocation3 + $0xd0] sm:$0xff]
        %v371 = vld [vmem:[#allocation3 + $0xd8] sm:$0xff]
        %v372 = vld [vmem:[#allocation3 + $0xe0] sm:$0xff]
        %v373 = vld [vmem:[#allocation3 + $0xe8] sm:$0xff]
        %v374 = vld [vmem:[#allocation3 + $0xf0] sm:$0xff]
        %v375 = vld [vmem:[#allocation3 + $0xf8] sm:$0xff]
        %v376 = vmax.f32 %v344, 0.0
        %v377 = vmax.f32 %v345, 0.0
        %v378 = vmax.f32 %v346, 0.0
        %v379 = vmax.f32 %v347, 0.0
        %v380 = vmax.f32 %v348, 0.0
        %v381 = vmax.f32 %v349, 0.0
        %v382 = vmax.f32 %v350, 0.0
        %v383 = vmax.f32 %v351, 0.0
        %v384 = vmax.f32 %v352, 0.0
        %v385 = vmax.f32 %v353, 0.0
        %v386 = vmax.f32 %v354, 0.0
        %v387 = vmax.f32 %v355, 0.0
        %v388 = vmax.f32 %v356, 0.0
        %v389 = vmax.f32 %v357, 0.0
        %v390 = vmax.f32 %v358, 0.0
        %v391 = vmax.f32 %v359, 0.0
        %v392 = vmax.f32 %v360, 0.0
        %v393 = vmax.f32 %v361, 0.0
        %v394 = vmax.f32 %v362, 0.0
        %v395 = vmax.f32 %v363, 0.0
        %v396 = vmax.f32 %v364, 0.0
        %v397 = vmax.f32 %v365, 0.0
        %v398 = vmax.f32 %v366, 0.0
        %v399 = vmax.f32 %v367, 0.0
        %v400 = vmax.f32 %v368, 0.0
        %v401 = vmax.f32 %v369, 0.0
        %v402 = vmax.f32 %v370, 0.0
        %v403 = vmax.f32 %v371, 0.0
        %v404 = vmax.f32 %v372, 0.0
        %v405 = vmax.f32 %v373, 0.0
        %v406 = vmax.f32 %v374, 0.0
        %v407 = vmax.f32 %v375, 0.0
        %s408 = scalar_lea.vmem [#allocation2], 24
        %409 = vst.msk [vmem:[%s408 + $0x1] sm:$0xff] %vm256, %v376
        %410 = vst.msk [vmem:[%s408 + $0x9] sm:$0xff] %vm256, %v377
        %411 = vst.msk [vmem:[%s408 + $0x19] sm:$0xff] %vm256, %v378
        %412 = vst.msk [vmem:[%s408 + $0x21] sm:$0xff] %vm256, %v379
        %413 = vst.msk [vmem:[%s408 + $0x31] sm:$0xff] %vm256, %v380
        %414 = vst.msk [vmem:[%s408 + $0x39] sm:$0xff] %vm256, %v381
        %415 = vst.msk [vmem:[%s408 + $0x49] sm:$0xff] %vm256, %v382
        %416 = vst.msk [vmem:[%s408 + $0x51] sm:$0xff] %vm256, %v383
        %417 = vst.msk [vmem:[%s408 + $0x61] sm:$0xff] %vm256, %v384
        %418 = vst.msk [vmem:[%s408 + $0x69] sm:$0xff] %vm256, %v385
        %419 = vst.msk [vmem:[%s408 + $0x79] sm:$0xff] %vm256, %v386
        %420 = vst.msk [vmem:[%s408 + $0x81] sm:$0xff] %vm256, %v387
        %421 = vst.msk [vmem:[%s408 + $0x91] sm:$0xff] %vm256, %v388
        %422 = vst.msk [vmem:[%s408 + $0x99] sm:$0xff] %vm256, %v389
        %423 = vst.msk [vmem:[%s408 + $0xa9] sm:$0xff] %vm256, %v390
        %424 = vst.msk [vmem:[%s408 + $0xb1] sm:$0xff] %vm256, %v391
        %425 = vst.msk [vmem:[%s408 + $0xc1] sm:$0xff] %vm256, %v392
        %426 = vst.msk [vmem:[%s408 + $0xc9] sm:$0xff] %vm256, %v393
        %427 = vst.msk [vmem:[%s408 + $0xd9] sm:$0xff] %vm256, %v394
        %428 = vst.msk [vmem:[%s408 + $0xe1] sm:$0xff] %vm256, %v395
        %429 = vst.msk [vmem:[%s408 + $0xf1] sm:$0xff] %vm256, %v396
        %430 = vst.msk [vmem:[%s408 + $0xf9] sm:$0xff] %vm256, %v397
        %431 = vst.msk [vmem:[%s408 + $0x109] sm:$0xff] %vm256, %v398
        %432 = vst.msk [vmem:[%s408 + $0x111] sm:$0xff] %vm256, %v399
        %433 = vst.msk [vmem:[%s408 + $0x121] sm:$0xff] %vm256, %v400
        %434 = vst.msk [vmem:[%s408 + $0x129] sm:$0xff] %vm256, %v401
        %435 = vst.msk [vmem:[%s408 + $0x139] sm:$0xff] %vm256, %v402
        %436 = vst.msk [vmem:[%s408 + $0x141] sm:$0xff] %vm256, %v403
        %437 = vst.msk [vmem:[%s408 + $0x151] sm:$0xff] %vm256, %v404
        %438 = vst.msk [vmem:[%s408 + $0x159] sm:$0xff] %vm256, %v405
        %439 = vst.msk [vmem:[%s408 + $0x169] sm:$0xff] %vm256, %v406
        %440 = vst.msk [vmem:[%s408 + $0x171] sm:$0xff] %vm256, %v407
        %v441 = vld [vmem:[#allocation2] sm:$0xff]
        %v442 = vld [vmem:[#allocation2 + $0x8] sm:$0xff]
        %v443 = vld [vmem:[#allocation2 + $0x18] sm:$0xff]
        %v444 = vld [vmem:[#allocation2 + $0x20] sm:$0xff]
        %v445 = vld [vmem:[#allocation2 + $0x30] sm:$0xff]
        %v446 = vld [vmem:[#allocation2 + $0x38] sm:$0xff]
        %v447 = vld [vmem:[#allocation2 + $0x48] sm:$0xff]
        %v448 = vld [vmem:[#allocation2 + $0x50] sm:$0xff]
        %v449 = vld [vmem:[#allocation2 + $0x60] sm:$0xff]
        %v450 = vld [vmem:[#allocation2 + $0x68] sm:$0xff]
        %v451 = vld [vmem:[#allocation2 + $0x78] sm:$0xff]
        %v452 = vld [vmem:[#allocation2 + $0x80] sm:$0xff]
        %v453 = vld [vmem:[#allocation2 + $0x90] sm:$0xff]
        %v454 = vld [vmem:[#allocation2 + $0x98] sm:$0xff]
        %v455 = vld [vmem:[#allocation2 + $0xa8] sm:$0xff]
        %v456 = vld [vmem:[#allocation2 + $0xb0] sm:$0xff]
        %v457 = vld [vmem:[#allocation2 + $0xc0] sm:$0xff]
        %v458 = vld [vmem:[#allocation2 + $0xc8] sm:$0xff]
        %v459 = vld [vmem:[#allocation2 + $0xd8] sm:$0xff]
        %v460 = vld [vmem:[#allocation2 + $0xe0] sm:$0xff]
        %v461 = vld [vmem:[#allocation2 + $0xf0] sm:$0xff]
        %v462 = vld [vmem:[#allocation2 + $0xf8] sm:$0xff]
        %v463 = vld [vmem:[#allocation2 + $0x108] sm:$0xff]
        %v464 = vld [vmem:[#allocation2 + $0x110] sm:$0xff]
        %v465 = vld [vmem:[#allocation2 + $0x120] sm:$0xff]
        %v466 = vld [vmem:[#allocation2 + $0x128] sm:$0xff]
        %v467 = vld [vmem:[#allocation2 + $0x138] sm:$0xff]
        %v468 = vld [vmem:[#allocation2 + $0x140] sm:$0xff]
        %v469 = vld [vmem:[#allocation2 + $0x150] sm:$0xff]
        %v470 = vld [vmem:[#allocation2 + $0x158] sm:$0xff]
        %v471 = vld [vmem:[#allocation2 + $0x168] sm:$0xff]
        %v472 = vld [vmem:[#allocation2 + $0x170] sm:$0xff]
        %v473 = vld [vmem:[#allocation2 + $0x1] sm:$0xff]
        %v474 = vld [vmem:[#allocation2 + $0x9] sm:$0xff]
        %v475 = vld [vmem:[#allocation2 + $0x19] sm:$0xff]
        %v476 = vld [vmem:[#allocation2 + $0x21] sm:$0xff]
        %v477 = vld [vmem:[#allocation2 + $0x31] sm:$0xff]
        %v478 = vld [vmem:[#allocation2 + $0x39] sm:$0xff]
        %v479 = vld [vmem:[#allocation2 + $0x49] sm:$0xff]
        %v480 = vld [vmem:[#allocation2 + $0x51] sm:$0xff]
        %v481 = vld [vmem:[#allocation2 + $0x61] sm:$0xff]
        %v482 = vld [vmem:[#allocation2 + $0x69] sm:$0xff]
        %v483 = vld [vmem:[#allocation2 + $0x79] sm:$0xff]
        %v484 = vld [vmem:[#allocation2 + $0x81] sm:$0xff]
        %v485 = vld [vmem:[#allocation2 + $0x91] sm:$0xff]
        %v486 = vld [vmem:[#allocation2 + $0x99] sm:$0xff]
        %v487 = vld [vmem:[#allocation2 + $0xa9] sm:$0xff]
        %v488 = vld [vmem:[#allocation2 + $0xb1] sm:$0xff]
        %v489 = vld [vmem:[#allocation2 + $0xc1] sm:$0xff]
        %v490 = vld [vmem:[#allocation2 + $0xc9] sm:$0xff]
        %v491 = vld [vmem:[#allocation2 + $0xd9] sm:$0xff]
        %v492 = vld [vmem:[#allocation2 + $0xe1] sm:$0xff]
        %v493 = vld [vmem:[#allocation2 + $0xf1] sm:$0xff]
        %v494 = vld [vmem:[#allocation2 + $0xf9] sm:$0xff]
        %v495 = vld [vmem:[#allocation2 + $0x109] sm:$0xff]
        %v496 = vld [vmem:[#allocation2 + $0x111] sm:$0xff]
        %v497 = vld [vmem:[#allocation2 + $0x121] sm:$0xff]
        %v498 = vld [vmem:[#allocation2 + $0x129] sm:$0xff]
        %v499 = vld [vmem:[#allocation2 + $0x139] sm:$0xff]
        %v500 = vld [vmem:[#allocation2 + $0x141] sm:$0xff]
        %v501 = vld [vmem:[#allocation2 + $0x151] sm:$0xff]
        %v502 = vld [vmem:[#allocation2 + $0x159] sm:$0xff]
        %v503 = vld [vmem:[#allocation2 + $0x169] sm:$0xff]
        %v504 = vld [vmem:[#allocation2 + $0x171] sm:$0xff]
        %v505 = vld [vmem:[#allocation2 + $0x2] sm:$0xff]
        %v506 = vld [vmem:[#allocation2 + $0xa] sm:$0xff]
        %v507 = vld [vmem:[#allocation2 + $0x1a] sm:$0xff]
        %v508 = vld [vmem:[#allocation2 + $0x22] sm:$0xff]
        %v509 = vld [vmem:[#allocation2 + $0x32] sm:$0xff]
        %v510 = vld [vmem:[#allocation2 + $0x3a] sm:$0xff]
        %v511 = vld [vmem:[#allocation2 + $0x4a] sm:$0xff]
        %v512 = vld [vmem:[#allocation2 + $0x52] sm:$0xff]
        %v513 = vld [vmem:[#allocation2 + $0x62] sm:$0xff]
        %v514 = vld [vmem:[#allocation2 + $0x6a] sm:$0xff]
        %v515 = vld [vmem:[#allocation2 + $0x7a] sm:$0xff]
        %v516 = vld [vmem:[#allocation2 + $0x82] sm:$0xff]
        %v517 = vld [vmem:[#allocation2 + $0x92] sm:$0xff]
        %v518 = vld [vmem:[#allocation2 + $0x9a] sm:$0xff]
        %v519 = vld [vmem:[#allocation2 + $0xaa] sm:$0xff]
        %v520 = vld [vmem:[#allocation2 + $0xb2] sm:$0xff]
        %v521 = vld [vmem:[#allocation2 + $0xc2] sm:$0xff]
        %v522 = vld [vmem:[#allocation2 + $0xca] sm:$0xff]
        %v523 = vld [vmem:[#allocation2 + $0xda] sm:$0xff]
        %v524 = vld [vmem:[#allocation2 + $0xe2] sm:$0xff]
        %v525 = vld [vmem:[#allocation2 + $0xf2] sm:$0xff]
        %v526 = vld [vmem:[#allocation2 + $0xfa] sm:$0xff]
        %v527 = vld [vmem:[#allocation2 + $0x10a] sm:$0xff]
        %v528 = vld [vmem:[#allocation2 + $0x112] sm:$0xff]
        %v529 = vld [vmem:[#allocation2 + $0x122] sm:$0xff]
        %v530 = vld [vmem:[#allocation2 + $0x12a] sm:$0xff]
        %v531 = vld [vmem:[#allocation2 + $0x13a] sm:$0xff]
        %v532 = vld [vmem:[#allocation2 + $0x142] sm:$0xff]
        %v533 = vld [vmem:[#allocation2 + $0x152] sm:$0xff]
        %v534 = vld [vmem:[#allocation2 + $0x15a] sm:$0xff]
        %v535 = vld [vmem:[#allocation2 + $0x16a] sm:$0xff]
        %v536 = vld [vmem:[#allocation2 + $0x172] sm:$0xff]
        %v537 = vld [vmem:[%s408] sm:$0xff]
        %v538 = vld [vmem:[%s408 + $0x8] sm:$0xff]
        %v539 = vld [vmem:[%s408 + $0x18] sm:$0xff]
        %v540 = vld [vmem:[%s408 + $0x20] sm:$0xff]
        %v541 = vld [vmem:[%s408 + $0x30] sm:$0xff]
        %v542 = vld [vmem:[%s408 + $0x38] sm:$0xff]
        %v543 = vld [vmem:[%s408 + $0x48] sm:$0xff]
        %v544 = vld [vmem:[%s408 + $0x50] sm:$0xff]
        %v545 = vld [vmem:[%s408 + $0x60] sm:$0xff]
        %v546 = vld [vmem:[%s408 + $0x68] sm:$0xff]
        %v547 = vld [vmem:[%s408 + $0x78] sm:$0xff]
        %v548 = vld [vmem:[%s408 + $0x80] sm:$0xff]
        %v549 = vld [vmem:[%s408 + $0x90] sm:$0xff]
        %v550 = vld [vmem:[%s408 + $0x98] sm:$0xff]
        %v551 = vld [vmem:[%s408 + $0xa8] sm:$0xff]
        %v552 = vld [vmem:[%s408 + $0xb0] sm:$0xff]
        %v553 = vld [vmem:[%s408 + $0xc0] sm:$0xff]
        %v554 = vld [vmem:[%s408 + $0xc8] sm:$0xff]
        %v555 = vld [vmem:[%s408 + $0xd8] sm:$0xff]
        %v556 = vld [vmem:[%s408 + $0xe0] sm:$0xff]
        %v557 = vld [vmem:[%s408 + $0xf0] sm:$0xff]
        %v558 = vld [vmem:[%s408 + $0xf8] sm:$0xff]
        %v559 = vld [vmem:[%s408 + $0x108] sm:$0xff]
        %v560 = vld [vmem:[%s408 + $0x110] sm:$0xff]
        %v561 = vld [vmem:[%s408 + $0x120] sm:$0xff]
        %v562 = vld [vmem:[%s408 + $0x128] sm:$0xff]
        %v563 = vld [vmem:[%s408 + $0x138] sm:$0xff]
        %v564 = vld [vmem:[%s408 + $0x140] sm:$0xff]
        %v565 = vld [vmem:[%s408 + $0x150] sm:$0xff]
        %v566 = vld [vmem:[%s408 + $0x158] sm:$0xff]
        %v567 = vld [vmem:[%s408 + $0x168] sm:$0xff]
        %v568 = vld [vmem:[%s408 + $0x170] sm:$0xff]
        %v569 = vld [vmem:[%s408 + $0x1] sm:$0xff]
        %v570 = vld [vmem:[%s408 + $0x9] sm:$0xff]
        %v571 = vld [vmem:[%s408 + $0x19] sm:$0xff]
        %v572 = vld [vmem:[%s408 + $0x21] sm:$0xff]
        %v573 = vld [vmem:[%s408 + $0x31] sm:$0xff]
        %v574 = vld [vmem:[%s408 + $0x39] sm:$0xff]
        %v575 = vld [vmem:[%s408 + $0x49] sm:$0xff]
        %v576 = vld [vmem:[%s408 + $0x51] sm:$0xff]
        %v577 = vld [vmem:[%s408 + $0x61] sm:$0xff]
        %v578 = vld [vmem:[%s408 + $0x69] sm:$0xff]
        %v579 = vld [vmem:[%s408 + $0x79] sm:$0xff]
        %v580 = vld [vmem:[%s408 + $0x81] sm:$0xff]
        %v581 = vld [vmem:[%s408 + $0x91] sm:$0xff]
        %v582 = vld [vmem:[%s408 + $0x99] sm:$0xff]
        %v583 = vld [vmem:[%s408 + $0xa9] sm:$0xff]
        %v584 = vld [vmem:[%s408 + $0xb1] sm:$0xff]
        %v585 = vld [vmem:[%s408 + $0xc1] sm:$0xff]
        %v586 = vld [vmem:[%s408 + $0xc9] sm:$0xff]
        %v587 = vld [vmem:[%s408 + $0xd9] sm:$0xff]
        %v588 = vld [vmem:[%s408 + $0xe1] sm:$0xff]
        %v589 = vld [vmem:[%s408 + $0xf1] sm:$0xff]
        %v590 = vld [vmem:[%s408 + $0xf9] sm:$0xff]
        %v591 = vld [vmem:[%s408 + $0x109] sm:$0xff]
        %v592 = vld [vmem:[%s408 + $0x111] sm:$0xff]
        %v593 = vld [vmem:[%s408 + $0x121] sm:$0xff]
        %v594 = vld [vmem:[%s408 + $0x129] sm:$0xff]
        %v595 = vld [vmem:[%s408 + $0x139] sm:$0xff]
        %v596 = vld [vmem:[%s408 + $0x141] sm:$0xff]
        %v597 = vld [vmem:[%s408 + $0x151] sm:$0xff]
        %v598 = vld [vmem:[%s408 + $0x159] sm:$0xff]
        %v599 = vld [vmem:[%s408 + $0x169] sm:$0xff]
        %v600 = vld [vmem:[%s408 + $0x171] sm:$0xff]
        %v601 = vld [vmem:[%s408 + $0x2] sm:$0xff]
        %v602 = vld [vmem:[%s408 + $0xa] sm:$0xff]
        %v603 = vld [vmem:[%s408 + $0x1a] sm:$0xff]
        %v604 = vld [vmem:[%s408 + $0x22] sm:$0xff]
        %v605 = vld [vmem:[%s408 + $0x32] sm:$0xff]
        %v606 = vld [vmem:[%s408 + $0x3a] sm:$0xff]
        %v607 = vld [vmem:[%s408 + $0x4a] sm:$0xff]
        %v608 = vld [vmem:[%s408 + $0x52] sm:$0xff]
        %v609 = vld [vmem:[%s408 + $0x62] sm:$0xff]
        %v610 = vld [vmem:[%s408 + $0x6a] sm:$0xff]
        %v611 = vld [vmem:[%s408 + $0x7a] sm:$0xff]
        %v612 = vld [vmem:[%s408 + $0x82] sm:$0xff]
        %v613 = vld [vmem:[%s408 + $0x92] sm:$0xff]
        %v614 = vld [vmem:[%s408 + $0x9a] sm:$0xff]
        %v615 = vld [vmem:[%s408 + $0xaa] sm:$0xff]
        %v616 = vld [vmem:[%s408 + $0xb2] sm:$0xff]
        %v617 = vld [vmem:[%s408 + $0xc2] sm:$0xff]
        %v618 = vld [vmem:[%s408 + $0xca] sm:$0xff]
        %v619 = vld [vmem:[%s408 + $0xda] sm:$0xff]
        %v620 = vld [vmem:[%s408 + $0xe2] sm:$0xff]
        %v621 = vld [vmem:[%s408 + $0xf2] sm:$0xff]
        %v622 = vld [vmem:[%s408 + $0xfa] sm:$0xff]
        %v623 = vld [vmem:[%s408 + $0x10a] sm:$0xff]
        %v624 = vld [vmem:[%s408 + $0x112] sm:$0xff]
        %v625 = vld [vmem:[%s408 + $0x122] sm:$0xff]
        %v626 = vld [vmem:[%s408 + $0x12a] sm:$0xff]
        %v627 = vld [vmem:[%s408 + $0x13a] sm:$0xff]
        %v628 = vld [vmem:[%s408 + $0x142] sm:$0xff]
        %v629 = vld [vmem:[%s408 + $0x152] sm:$0xff]
        %v630 = vld [vmem:[%s408 + $0x15a] sm:$0xff]
        %v631 = vld [vmem:[%s408 + $0x16a] sm:$0xff]
        %v632 = vld [vmem:[%s408 + $0x172] sm:$0xff]
        %s633 = scalar_lea.vmem [#allocation2], 48
        %v634 = vld [vmem:[%s633] sm:$0xff]
        %v635 = vld [vmem:[%s633 + $0x8] sm:$0xff]
        %v636 = vld [vmem:[%s633 + $0x18] sm:$0xff]
        %v637 = vld [vmem:[%s633 + $0x20] sm:$0xff]
        %v638 = vld [vmem:[%s633 + $0x30] sm:$0xff]
        %v639 = vld [vmem:[%s633 + $0x38] sm:$0xff]
        %v640 = vld [vmem:[%s633 + $0x48] sm:$0xff]
        %v641 = vld [vmem:[%s633 + $0x50] sm:$0xff]
        %v642 = vld [vmem:[%s633 + $0x60] sm:$0xff]
        %v643 = vld [vmem:[%s633 + $0x68] sm:$0xff]
        %v644 = vld [vmem:[%s633 + $0x78] sm:$0xff]
        %v645 = vld [vmem:[%s633 + $0x80] sm:$0xff]
        %v646 = vld [vmem:[%s633 + $0x90] sm:$0xff]
        %v647 = vld [vmem:[%s633 + $0x98] sm:$0xff]
        %v648 = vld [vmem:[%s633 + $0xa8] sm:$0xff]
        %v649 = vld [vmem:[%s633 + $0xb0] sm:$0xff]
        %v650 = vld [vmem:[%s633 + $0xc0] sm:$0xff]
        %v651 = vld [vmem:[%s633 + $0xc8] sm:$0xff]
        %v652 = vld [vmem:[%s633 + $0xd8] sm:$0xff]
        %v653 = vld [vmem:[%s633 + $0xe0] sm:$0xff]
        %v654 = vld [vmem:[%s633 + $0xf0] sm:$0xff]
        %v655 = vld [vmem:[%s633 + $0xf8] sm:$0xff]
        %v656 = vld [vmem:[%s633 + $0x108] sm:$0xff]
        %v657 = vld [vmem:[%s633 + $0x110] sm:$0xff]
        %v658 = vld [vmem:[%s633 + $0x120] sm:$0xff]
        %v659 = vld [vmem:[%s633 + $0x128] sm:$0xff]
        %v660 = vld [vmem:[%s633 + $0x138] sm:$0xff]
        %v661 = vld [vmem:[%s633 + $0x140] sm:$0xff]
        %v662 = vld [vmem:[%s633 + $0x150] sm:$0xff]
        %v663 = vld [vmem:[%s633 + $0x158] sm:$0xff]
        %v664 = vld [vmem:[%s633 + $0x168] sm:$0xff]
        %v665 = vld [vmem:[%s633 + $0x170] sm:$0xff]
        %v666 = vld [vmem:[%s633 + $0x1] sm:$0xff]
        %v667 = vld [vmem:[%s633 + $0x9] sm:$0xff]
        %v668 = vld [vmem:[%s633 + $0x19] sm:$0xff]
        %v669 = vld [vmem:[%s633 + $0x21] sm:$0xff]
        %v670 = vld [vmem:[%s633 + $0x31] sm:$0xff]
        %v671 = vld [vmem:[%s633 + $0x39] sm:$0xff]
        %v672 = vld [vmem:[%s633 + $0x49] sm:$0xff]
        %v673 = vld [vmem:[%s633 + $0x51] sm:$0xff]
        %v674 = vld [vmem:[%s633 + $0x61] sm:$0xff]
        %v675 = vld [vmem:[%s633 + $0x69] sm:$0xff]
        %v676 = vld [vmem:[%s633 + $0x79] sm:$0xff]
        %v677 = vld [vmem:[%s633 + $0x81] sm:$0xff]
        %v678 = vld [vmem:[%s633 + $0x91] sm:$0xff]
        %v679 = vld [vmem:[%s633 + $0x99] sm:$0xff]
        %v680 = vld [vmem:[%s633 + $0xa9] sm:$0xff]
        %v681 = vld [vmem:[%s633 + $0xb1] sm:$0xff]
        %v682 = vld [vmem:[%s633 + $0xc1] sm:$0xff]
        %v683 = vld [vmem:[%s633 + $0xc9] sm:$0xff]
        %v684 = vld [vmem:[%s633 + $0xd9] sm:$0xff]
        %v685 = vld [vmem:[%s633 + $0xe1] sm:$0xff]
        %v686 = vld [vmem:[%s633 + $0xf1] sm:$0xff]
        %v687 = vld [vmem:[%s633 + $0xf9] sm:$0xff]
        %v688 = vld [vmem:[%s633 + $0x109] sm:$0xff]
        %v689 = vld [vmem:[%s633 + $0x111] sm:$0xff]
        %v690 = vld [vmem:[%s633 + $0x121] sm:$0xff]
        %v691 = vld [vmem:[%s633 + $0x129] sm:$0xff]
        %v692 = vld [vmem:[%s633 + $0x139] sm:$0xff]
        %v693 = vld [vmem:[%s633 + $0x141] sm:$0xff]
        %v694 = vld [vmem:[%s633 + $0x151] sm:$0xff]
        %v695 = vld [vmem:[%s633 + $0x159] sm:$0xff]
        %v696 = vld [vmem:[%s633 + $0x169] sm:$0xff]
        %v697 = vld [vmem:[%s633 + $0x171] sm:$0xff]
        %v698 = vld [vmem:[%s633 + $0x2] sm:$0xff]
        %v699 = vld [vmem:[%s633 + $0xa] sm:$0xff]
        %v700 = vld [vmem:[%s633 + $0x1a] sm:$0xff]
        %v701 = vld [vmem:[%s633 + $0x22] sm:$0xff]
        %v702 = vld [vmem:[%s633 + $0x32] sm:$0xff]
        %v703 = vld [vmem:[%s633 + $0x3a] sm:$0xff]
        %v704 = vld [vmem:[%s633 + $0x4a] sm:$0xff]
        %v705 = vld [vmem:[%s633 + $0x52] sm:$0xff]
        %v706 = vld [vmem:[%s633 + $0x62] sm:$0xff]
        %v707 = vld [vmem:[%s633 + $0x6a] sm:$0xff]
        %v708 = vld [vmem:[%s633 + $0x7a] sm:$0xff]
        %v709 = vld [vmem:[%s633 + $0x82] sm:$0xff]
        %v710 = vld [vmem:[%s633 + $0x92] sm:$0xff]
        %v711 = vld [vmem:[%s633 + $0x9a] sm:$0xff]
        %v712 = vld [vmem:[%s633 + $0xaa] sm:$0xff]
        %v713 = vld [vmem:[%s633 + $0xb2] sm:$0xff]
        %v714 = vld [vmem:[%s633 + $0xc2] sm:$0xff]
        %v715 = vld [vmem:[%s633 + $0xca] sm:$0xff]
        %v716 = vld [vmem:[%s633 + $0xda] sm:$0xff]
        %v717 = vld [vmem:[%s633 + $0xe2] sm:$0xff]
        %v718 = vld [vmem:[%s633 + $0xf2] sm:$0xff]
        %v719 = vld [vmem:[%s633 + $0xfa] sm:$0xff]
        %v720 = vld [vmem:[%s633 + $0x10a] sm:$0xff]
        %v721 = vld [vmem:[%s633 + $0x112] sm:$0xff]
        %v722 = vld [vmem:[%s633 + $0x122] sm:$0xff]
        %v723 = vld [vmem:[%s633 + $0x12a] sm:$0xff]
        %v724 = vld [vmem:[%s633 + $0x13a] sm:$0xff]
        %v725 = vld [vmem:[%s633 + $0x142] sm:$0xff]
        %v726 = vld [vmem:[%s633 + $0x152] sm:$0xff]
        %v727 = vld [vmem:[%s633 + $0x15a] sm:$0xff]
        %v728 = vld [vmem:[%s633 + $0x16a] sm:$0xff]
        %v729 = vld [vmem:[%s633 + $0x172] sm:$0xff]
        %762 = vrot.lane.b32.xlu0 %v473, 32
        %v763 = vpop.permute.xlu0 %762
        %764 = vrot.lane.b32.xlu0 %v474, 32
        %v765 = vpop.permute.xlu0 %764
        %766 = vrot.lane.b32.xlu0 %v475, 32
        %v767 = vpop.permute.xlu0 %766
        %768 = vrot.lane.b32.xlu0 %v476, 32
        %v769 = vpop.permute.xlu0 %768
        %770 = vrot.lane.b32.xlu0 %v477, 32
        %v771 = vpop.permute.xlu0 %770
        %772 = vrot.lane.b32.xlu0 %v478, 32
        %v773 = vpop.permute.xlu0 %772
        %774 = vrot.lane.b32.xlu0 %v479, 32
        %v775 = vpop.permute.xlu0 %774
        %776 = vrot.lane.b32.xlu0 %v480, 32
        %v777 = vpop.permute.xlu0 %776
        %778 = vrot.lane.b32.xlu0 %v481, 32
        %v779 = vpop.permute.xlu0 %778
        %780 = vrot.lane.b32.xlu0 %v482, 32
        %v781 = vpop.permute.xlu0 %780
        %782 = vrot.lane.b32.xlu0 %v483, 32
        %v783 = vpop.permute.xlu0 %782
        %784 = vrot.lane.b32.xlu0 %v484, 32
        %v785 = vpop.permute.xlu0 %784
        %786 = vrot.lane.b32.xlu0 %v485, 32
        %v787 = vpop.permute.xlu0 %786
        %788 = vrot.lane.b32.xlu0 %v486, 32
        %v789 = vpop.permute.xlu0 %788
        %790 = vrot.lane.b32.xlu0 %v487, 32
        %v791 = vpop.permute.xlu0 %790
        %792 = vrot.lane.b32.xlu0 %v488, 32
        %v793 = vpop.permute.xlu0 %792
        %794 = vrot.lane.b32.xlu0 %v489, 32
        %v795 = vpop.permute.xlu0 %794
        %796 = vrot.lane.b32.xlu0 %v490, 32
        %v797 = vpop.permute.xlu0 %796
        %798 = vrot.lane.b32.xlu0 %v491, 32
        %v799 = vpop.permute.xlu0 %798
        %800 = vrot.lane.b32.xlu0 %v492, 32
        %v801 = vpop.permute.xlu0 %800
        %802 = vrot.lane.b32.xlu0 %v493, 32
        %v803 = vpop.permute.xlu0 %802
        %804 = vrot.lane.b32.xlu0 %v494, 32
        %v805 = vpop.permute.xlu0 %804
        %806 = vrot.lane.b32.xlu0 %v495, 32
        %v807 = vpop.permute.xlu0 %806
        %808 = vrot.lane.b32.xlu0 %v496, 32
        %v809 = vpop.permute.xlu0 %808
        %810 = vrot.lane.b32.xlu0 %v497, 32
        %v811 = vpop.permute.xlu0 %810
        %812 = vrot.lane.b32.xlu0 %v498, 32
        %v813 = vpop.permute.xlu0 %812
        %814 = vrot.lane.b32.xlu0 %v499, 32
        %v815 = vpop.permute.xlu0 %814
        %816 = vrot.lane.b32.xlu0 %v500, 32
        %v817 = vpop.permute.xlu0 %816
        %818 = vrot.lane.b32.xlu0 %v501, 32
        %v819 = vpop.permute.xlu0 %818
        %820 = vrot.lane.b32.xlu0 %v502, 32
        %v821 = vpop.permute.xlu0 %820
        %822 = vrot.lane.b32.xlu0 %v503, 32
        %v823 = vpop.permute.xlu0 %822
        %824 = vrot.lane.b32.xlu0 %v504, 32
        %v825 = vpop.permute.xlu0 %824
        %890 = vrot.lane.b32.xlu0 %v505, 64
        %v891 = vpop.permute.xlu0 %890
        %892 = vrot.lane.b32.xlu0 %v506, 64
        %v893 = vpop.permute.xlu0 %892
        %894 = vrot.lane.b32.xlu0 %v507, 64
        %v895 = vpop.permute.xlu0 %894
        %896 = vrot.lane.b32.xlu0 %v508, 64
        %v897 = vpop.permute.xlu0 %896
        %898 = vrot.lane.b32.xlu0 %v509, 64
        %v899 = vpop.permute.xlu0 %898
        %900 = vrot.lane.b32.xlu0 %v510, 64
        %v901 = vpop.permute.xlu0 %900
        %902 = vrot.lane.b32.xlu0 %v511, 64
        %v903 = vpop.permute.xlu0 %902
        %904 = vrot.lane.b32.xlu0 %v512, 64
        %v905 = vpop.permute.xlu0 %904
        %906 = vrot.lane.b32.xlu0 %v513, 64
        %v907 = vpop.permute.xlu0 %906
        %908 = vrot.lane.b32.xlu0 %v514, 64
        %v909 = vpop.permute.xlu0 %908
        %910 = vrot.lane.b32.xlu0 %v515, 64
        %v911 = vpop.permute.xlu0 %910
        %912 = vrot.lane.b32.xlu0 %v516, 64
        %v913 = vpop.permute.xlu0 %912
        %914 = vrot.lane.b32.xlu0 %v517, 64
        %v915 = vpop.permute.xlu0 %914
        %916 = vrot.lane.b32.xlu0 %v518, 64
        %v917 = vpop.permute.xlu0 %916
        %918 = vrot.lane.b32.xlu0 %v519, 64
        %v919 = vpop.permute.xlu0 %918
        %920 = vrot.lane.b32.xlu0 %v520, 64
        %v921 = vpop.permute.xlu0 %920
        %922 = vrot.lane.b32.xlu0 %v521, 64
        %v923 = vpop.permute.xlu0 %922
        %924 = vrot.lane.b32.xlu0 %v522, 64
        %v925 = vpop.permute.xlu0 %924
        %926 = vrot.lane.b32.xlu0 %v523, 64
        %v927 = vpop.permute.xlu0 %926
        %928 = vrot.lane.b32.xlu0 %v524, 64
        %v929 = vpop.permute.xlu0 %928
        %930 = vrot.lane.b32.xlu0 %v525, 64
        %v931 = vpop.permute.xlu0 %930
        %932 = vrot.lane.b32.xlu0 %v526, 64
        %v933 = vpop.permute.xlu0 %932
        %934 = vrot.lane.b32.xlu0 %v527, 64
        %v935 = vpop.permute.xlu0 %934
        %936 = vrot.lane.b32.xlu0 %v528, 64
        %v937 = vpop.permute.xlu0 %936
        %938 = vrot.lane.b32.xlu0 %v529, 64
        %v939 = vpop.permute.xlu0 %938
        %940 = vrot.lane.b32.xlu0 %v530, 64
        %v941 = vpop.permute.xlu0 %940
        %942 = vrot.lane.b32.xlu0 %v531, 64
        %v943 = vpop.permute.xlu0 %942
        %944 = vrot.lane.b32.xlu0 %v532, 64
        %v945 = vpop.permute.xlu0 %944
        %946 = vrot.lane.b32.xlu0 %v533, 64
        %v947 = vpop.permute.xlu0 %946
        %948 = vrot.lane.b32.xlu0 %v534, 64
        %v949 = vpop.permute.xlu0 %948
        %950 = vrot.lane.b32.xlu0 %v535, 64
        %v951 = vpop.permute.xlu0 %950
        %952 = vrot.lane.b32.xlu0 %v536, 64
        %v953 = vpop.permute.xlu0 %952
        %1018 = vrot.lane.b32.xlu0 %v537, 96
        %v1019 = vpop.permute.xlu0 %1018
        %1020 = vrot.lane.b32.xlu0 %v538, 96
        %v1021 = vpop.permute.xlu0 %1020
        %1022 = vrot.lane.b32.xlu0 %v539, 96
        %v1023 = vpop.permute.xlu0 %1022
        %1024 = vrot.lane.b32.xlu0 %v540, 96
        %v1025 = vpop.permute.xlu0 %1024
        %1026 = vrot.lane.b32.xlu0 %v541, 96
        %v1027 = vpop.permute.xlu0 %1026
        %1028 = vrot.lane.b32.xlu0 %v542, 96
        %v1029 = vpop.permute.xlu0 %1028
        %1030 = vrot.lane.b32.xlu0 %v543, 96
        %v1031 = vpop.permute.xlu0 %1030
        %1032 = vrot.lane.b32.xlu0 %v544, 96
        %v1033 = vpop.permute.xlu0 %1032
        %1034 = vrot.lane.b32.xlu0 %v545, 96
        %v1035 = vpop.permute.xlu0 %1034
        %1036 = vrot.lane.b32.xlu0 %v546, 96
        %v1037 = vpop.permute.xlu0 %1036
        %1038 = vrot.lane.b32.xlu0 %v547, 96
        %v1039 = vpop.permute.xlu0 %1038
        %1040 = vrot.lane.b32.xlu0 %v548, 96
        %v1041 = vpop.permute.xlu0 %1040
        %1042 = vrot.lane.b32.xlu0 %v549, 96
        %v1043 = vpop.permute.xlu0 %1042
        %1044 = vrot.lane.b32.xlu0 %v550, 96
        %v1045 = vpop.permute.xlu0 %1044
        %1046 = vrot.lane.b32.xlu0 %v551, 96
        %v1047 = vpop.permute.xlu0 %1046
        %1048 = vrot.lane.b32.xlu0 %v552, 96
        %v1049 = vpop.permute.xlu0 %1048
        %1050 = vrot.lane.b32.xlu0 %v553, 96
        %v1051 = vpop.permute.xlu0 %1050
        %1052 = vrot.lane.b32.xlu0 %v554, 96
        %v1053 = vpop.permute.xlu0 %1052
        %1054 = vrot.lane.b32.xlu0 %v555, 96
        %v1055 = vpop.permute.xlu0 %1054
        %1056 = vrot.lane.b32.xlu0 %v556, 96
        %v1057 = vpop.permute.xlu0 %1056
        %1058 = vrot.lane.b32.xlu0 %v557, 96
        %v1059 = vpop.permute.xlu0 %1058
        %1060 = vrot.lane.b32.xlu0 %v558, 96
        %v1061 = vpop.permute.xlu0 %1060
        %1062 = vrot.lane.b32.xlu0 %v559, 96
        %v1063 = vpop.permute.xlu0 %1062
        %1064 = vrot.lane.b32.xlu0 %v560, 96
        %v1065 = vpop.permute.xlu0 %1064
        %1066 = vrot.lane.b32.xlu0 %v561, 96
        %v1067 = vpop.permute.xlu0 %1066
        %1068 = vrot.lane.b32.xlu0 %v562, 96
        %v1069 = vpop.permute.xlu0 %1068
        %1070 = vrot.lane.b32.xlu0 %v563, 96
        %v1071 = vpop.permute.xlu0 %1070
        %1072 = vrot.lane.b32.xlu0 %v564, 96
        %v1073 = vpop.permute.xlu0 %1072
        %1074 = vrot.lane.b32.xlu0 %v565, 96
        %v1075 = vpop.permute.xlu0 %1074
        %1076 = vrot.lane.b32.xlu0 %v566, 96
        %v1077 = vpop.permute.xlu0 %1076
        %1078 = vrot.lane.b32.xlu0 %v567, 96
        %v1079 = vpop.permute.xlu0 %1078
        %1080 = vrot.lane.b32.xlu0 %v568, 96
        %v1081 = vpop.permute.xlu0 %1080
        %1146 = vrot.lane.b32.xlu0 %v601, 32
        %v1147 = vpop.permute.xlu0 %1146
        %1148 = vrot.lane.b32.xlu0 %v602, 32
        %v1149 = vpop.permute.xlu0 %1148
        %1150 = vrot.lane.b32.xlu0 %v603, 32
        %v1151 = vpop.permute.xlu0 %1150
        %1152 = vrot.lane.b32.xlu0 %v604, 32
        %v1153 = vpop.permute.xlu0 %1152
        %1154 = vrot.lane.b32.xlu0 %v605, 32
        %v1155 = vpop.permute.xlu0 %1154
        %1156 = vrot.lane.b32.xlu0 %v606, 32
        %v1157 = vpop.permute.xlu0 %1156
        %1158 = vrot.lane.b32.xlu0 %v607, 32
        %v1159 = vpop.permute.xlu0 %1158
        %1160 = vrot.lane.b32.xlu0 %v608, 32
        %v1161 = vpop.permute.xlu0 %1160
        %1162 = vrot.lane.b32.xlu0 %v609, 32
        %v1163 = vpop.permute.xlu0 %1162
        %1164 = vrot.lane.b32.xlu0 %v610, 32
        %v1165 = vpop.permute.xlu0 %1164
        %1166 = vrot.lane.b32.xlu0 %v611, 32
        %v1167 = vpop.permute.xlu0 %1166
        %1168 = vrot.lane.b32.xlu0 %v612, 32
        %v1169 = vpop.permute.xlu0 %1168
        %1170 = vrot.lane.b32.xlu0 %v613, 32
        %v1171 = vpop.permute.xlu0 %1170
        %1172 = vrot.lane.b32.xlu0 %v614, 32
        %v1173 = vpop.permute.xlu0 %1172
        %1174 = vrot.lane.b32.xlu0 %v615, 32
        %v1175 = vpop.permute.xlu0 %1174
        %1176 = vrot.lane.b32.xlu0 %v616, 32
        %v1177 = vpop.permute.xlu0 %1176
        %1178 = vrot.lane.b32.xlu0 %v617, 32
        %v1179 = vpop.permute.xlu0 %1178
        %1180 = vrot.lane.b32.xlu0 %v618, 32
        %v1181 = vpop.permute.xlu0 %1180
        %1182 = vrot.lane.b32.xlu0 %v619, 32
        %v1183 = vpop.permute.xlu0 %1182
        %1184 = vrot.lane.b32.xlu0 %v620, 32
        %v1185 = vpop.permute.xlu0 %1184
        %1186 = vrot.lane.b32.xlu0 %v621, 32
        %v1187 = vpop.permute.xlu0 %1186
        %1188 = vrot.lane.b32.xlu0 %v622, 32
        %v1189 = vpop.permute.xlu0 %1188
        %1190 = vrot.lane.b32.xlu0 %v623, 32
        %v1191 = vpop.permute.xlu0 %1190
        %1192 = vrot.lane.b32.xlu0 %v624, 32
        %v1193 = vpop.permute.xlu0 %1192
        %1194 = vrot.lane.b32.xlu0 %v625, 32
        %v1195 = vpop.permute.xlu0 %1194
        %1196 = vrot.lane.b32.xlu0 %v626, 32
        %v1197 = vpop.permute.xlu0 %1196
        %1198 = vrot.lane.b32.xlu0 %v627, 32
        %v1199 = vpop.permute.xlu0 %1198
        %1200 = vrot.lane.b32.xlu0 %v628, 32
        %v1201 = vpop.permute.xlu0 %1200
        %1202 = vrot.lane.b32.xlu0 %v629, 32
        %v1203 = vpop.permute.xlu0 %1202
        %1204 = vrot.lane.b32.xlu0 %v630, 32
        %v1205 = vpop.permute.xlu0 %1204
        %1206 = vrot.lane.b32.xlu0 %v631, 32
        %v1207 = vpop.permute.xlu0 %1206
        %1208 = vrot.lane.b32.xlu0 %v632, 32
        %v1209 = vpop.permute.xlu0 %1208
        %1274 = vrot.lane.b32.xlu0 %v634, 64
        %v1275 = vpop.permute.xlu0 %1274
        %1276 = vrot.lane.b32.xlu0 %v635, 64
        %v1277 = vpop.permute.xlu0 %1276
        %1278 = vrot.lane.b32.xlu0 %v636, 64
        %v1279 = vpop.permute.xlu0 %1278
        %1280 = vrot.lane.b32.xlu0 %v637, 64
        %v1281 = vpop.permute.xlu0 %1280
        %1282 = vrot.lane.b32.xlu0 %v638, 64
        %v1283 = vpop.permute.xlu0 %1282
        %1284 = vrot.lane.b32.xlu0 %v639, 64
        %v1285 = vpop.permute.xlu0 %1284
        %1286 = vrot.lane.b32.xlu0 %v640, 64
        %v1287 = vpop.permute.xlu0 %1286
        %1288 = vrot.lane.b32.xlu0 %v641, 64
        %v1289 = vpop.permute.xlu0 %1288
        %1290 = vrot.lane.b32.xlu0 %v642, 64
        %v1291 = vpop.permute.xlu0 %1290
        %1292 = vrot.lane.b32.xlu0 %v643, 64
        %v1293 = vpop.permute.xlu0 %1292
        %1294 = vrot.lane.b32.xlu0 %v644, 64
        %v1295 = vpop.permute.xlu0 %1294
        %1296 = vrot.lane.b32.xlu0 %v645, 64
        %v1297 = vpop.permute.xlu0 %1296
        %1298 = vrot.lane.b32.xlu0 %v646, 64
        %v1299 = vpop.permute.xlu0 %1298
        %1300 = vrot.lane.b32.xlu0 %v647, 64
        %v1301 = vpop.permute.xlu0 %1300
        %1302 = vrot.lane.b32.xlu0 %v648, 64
        %v1303 = vpop.permute.xlu0 %1302
        %1304 = vrot.lane.b32.xlu0 %v649, 64
        %v1305 = vpop.permute.xlu0 %1304
        %1306 = vrot.lane.b32.xlu0 %v650, 64
        %v1307 = vpop.permute.xlu0 %1306
        %1308 = vrot.lane.b32.xlu0 %v651, 64
        %v1309 = vpop.permute.xlu0 %1308
        %1310 = vrot.lane.b32.xlu0 %v652, 64
        %v1311 = vpop.permute.xlu0 %1310
        %1312 = vrot.lane.b32.xlu0 %v653, 64
        %v1313 = vpop.permute.xlu0 %1312
        %1314 = vrot.lane.b32.xlu0 %v654, 64
        %v1315 = vpop.permute.xlu0 %1314
        %1316 = vrot.lane.b32.xlu0 %v655, 64
        %v1317 = vpop.permute.xlu0 %1316
        %1318 = vrot.lane.b32.xlu0 %v656, 64
        %v1319 = vpop.permute.xlu0 %1318
        %1320 = vrot.lane.b32.xlu0 %v657, 64
        %v1321 = vpop.permute.xlu0 %1320
        %1322 = vrot.lane.b32.xlu0 %v658, 64
        %v1323 = vpop.permute.xlu0 %1322
        %1324 = vrot.lane.b32.xlu0 %v659, 64
        %v1325 = vpop.permute.xlu0 %1324
        %1326 = vrot.lane.b32.xlu0 %v660, 64
        %v1327 = vpop.permute.xlu0 %1326
        %1328 = vrot.lane.b32.xlu0 %v661, 64
        %v1329 = vpop.permute.xlu0 %1328
        %1330 = vrot.lane.b32.xlu0 %v662, 64
        %v1331 = vpop.permute.xlu0 %1330
        %1332 = vrot.lane.b32.xlu0 %v663, 64
        %v1333 = vpop.permute.xlu0 %1332
        %1334 = vrot.lane.b32.xlu0 %v664, 64
        %v1335 = vpop.permute.xlu0 %1334
        %1336 = vrot.lane.b32.xlu0 %v665, 64
        %v1337 = vpop.permute.xlu0 %1336
        %1402 = vrot.lane.b32.xlu0 %v666, 96
        %v1403 = vpop.permute.xlu0 %1402
        %1404 = vrot.lane.b32.xlu0 %v667, 96
        %v1405 = vpop.permute.xlu0 %1404
        %1406 = vrot.lane.b32.xlu0 %v668, 96
        %v1407 = vpop.permute.xlu0 %1406
        %1408 = vrot.lane.b32.xlu0 %v669, 96
        %v1409 = vpop.permute.xlu0 %1408
        %1410 = vrot.lane.b32.xlu0 %v670, 96
        %v1411 = vpop.permute.xlu0 %1410
        %1412 = vrot.lane.b32.xlu0 %v671, 96
        %v1413 = vpop.permute.xlu0 %1412
        %1414 = vrot.lane.b32.xlu0 %v672, 96
        %v1415 = vpop.permute.xlu0 %1414
        %1416 = vrot.lane.b32.xlu0 %v673, 96
        %v1417 = vpop.permute.xlu0 %1416
        %1418 = vrot.lane.b32.xlu0 %v674, 96
        %v1419 = vpop.permute.xlu0 %1418
        %1420 = vrot.lane.b32.xlu0 %v675, 96
        %v1421 = vpop.permute.xlu0 %1420
        %1422 = vrot.lane.b32.xlu0 %v676, 96
        %v1423 = vpop.permute.xlu0 %1422
        %1424 = vrot.lane.b32.xlu0 %v677, 96
        %v1425 = vpop.permute.xlu0 %1424
        %1426 = vrot.lane.b32.xlu0 %v678, 96
        %v1427 = vpop.permute.xlu0 %1426
        %1428 = vrot.lane.b32.xlu0 %v679, 96
        %v1429 = vpop.permute.xlu0 %1428
        %1430 = vrot.lane.b32.xlu0 %v680, 96
        %v1431 = vpop.permute.xlu0 %1430
        %1432 = vrot.lane.b32.xlu0 %v681, 96
        %v1433 = vpop.permute.xlu0 %1432
        %1434 = vrot.lane.b32.xlu0 %v682, 96
        %v1435 = vpop.permute.xlu0 %1434
        %1436 = vrot.lane.b32.xlu0 %v683, 96
        %v1437 = vpop.permute.xlu0 %1436
        %1438 = vrot.lane.b32.xlu0 %v684, 96
        %v1439 = vpop.permute.xlu0 %1438
        %1440 = vrot.lane.b32.xlu0 %v685, 96
        %v1441 = vpop.permute.xlu0 %1440
        %1442 = vrot.lane.b32.xlu0 %v686, 96
        %v1443 = vpop.permute.xlu0 %1442
        %1444 = vrot.lane.b32.xlu0 %v687, 96
        %v1445 = vpop.permute.xlu0 %1444
        %1446 = vrot.lane.b32.xlu0 %v688, 96
        %v1447 = vpop.permute.xlu0 %1446
        %1448 = vrot.lane.b32.xlu0 %v689, 96
        %v1449 = vpop.permute.xlu0 %1448
        %1450 = vrot.lane.b32.xlu0 %v690, 96
        %v1451 = vpop.permute.xlu0 %1450
        %1452 = vrot.lane.b32.xlu0 %v691, 96
        %v1453 = vpop.permute.xlu0 %1452
        %1454 = vrot.lane.b32.xlu0 %v692, 96
        %v1455 = vpop.permute.xlu0 %1454
        %1456 = vrot.lane.b32.xlu0 %v693, 96
        %v1457 = vpop.permute.xlu0 %1456
        %1458 = vrot.lane.b32.xlu0 %v694, 96
        %v1459 = vpop.permute.xlu0 %1458
        %1460 = vrot.lane.b32.xlu0 %v695, 96
        %v1461 = vpop.permute.xlu0 %1460
        %1462 = vrot.lane.b32.xlu0 %v696, 96
        %v1463 = vpop.permute.xlu0 %1462
        %1464 = vrot.lane.b32.xlu0 %v697, 96
        %v1465 = vpop.permute.xlu0 %1464
        %v1498 = vsel %vm256, %v441, %v763
        %v1499 = vsel %vm256, %v442, %v765
        %v1500 = vsel %vm256, %v443, %v767
        %v1501 = vsel %vm256, %v444, %v769
        %v1502 = vsel %vm256, %v445, %v771
        %v1503 = vsel %vm256, %v446, %v773
        %v1504 = vsel %vm256, %v447, %v775
        %v1505 = vsel %vm256, %v448, %v777
        %v1506 = vsel %vm256, %v449, %v779
        %v1507 = vsel %vm256, %v450, %v781
        %v1508 = vsel %vm256, %v451, %v783
        %v1509 = vsel %vm256, %v452, %v785
        %v1510 = vsel %vm256, %v453, %v787
        %v1511 = vsel %vm256, %v454, %v789
        %v1512 = vsel %vm256, %v455, %v791
        %v1513 = vsel %vm256, %v456, %v793
        %v1514 = vsel %vm256, %v457, %v795
        %v1515 = vsel %vm256, %v458, %v797
        %v1516 = vsel %vm256, %v459, %v799
        %v1517 = vsel %vm256, %v460, %v801
        %v1518 = vsel %vm256, %v461, %v803
        %v1519 = vsel %vm256, %v462, %v805
        %v1520 = vsel %vm256, %v463, %v807
        %v1521 = vsel %vm256, %v464, %v809
        %v1522 = vsel %vm256, %v465, %v811
        %v1523 = vsel %vm256, %v466, %v813
        %v1524 = vsel %vm256, %v467, %v815
        %v1525 = vsel %vm256, %v468, %v817
        %v1526 = vsel %vm256, %v469, %v819
        %v1527 = vsel %vm256, %v470, %v821
        %v1528 = vsel %vm256, %v471, %v823
        %v1529 = vsel %vm256, %v472, %v825
        %vm1530 = vcmask 523264
        %v1531 = vsel %vm1530, %v1498, %v891
        %v1532 = vsel %vm1530, %v1499, %v893
        %v1533 = vsel %vm1530, %v1500, %v895
        %v1534 = vsel %vm1530, %v1501, %v897
        %v1535 = vsel %vm1530, %v1502, %v899
        %v1536 = vsel %vm1530, %v1503, %v901
        %v1537 = vsel %vm1530, %v1504, %v903
        %v1538 = vsel %vm1530, %v1505, %v905
        %v1539 = vsel %vm1530, %v1506, %v907
        %v1540 = vsel %vm1530, %v1507, %v909
        %v1541 = vsel %vm1530, %v1508, %v911
        %v1542 = vsel %vm1530, %v1509, %v913
        %v1543 = vsel %vm1530, %v1510, %v915
        %v1544 = vsel %vm1530, %v1511, %v917
        %v1545 = vsel %vm1530, %v1512, %v919
        %v1546 = vsel %vm1530, %v1513, %v921
        %v1547 = vsel %vm1530, %v1514, %v923
        %v1548 = vsel %vm1530, %v1515, %v925
        %v1549 = vsel %vm1530, %v1516, %v927
        %v1550 = vsel %vm1530, %v1517, %v929
        %v1551 = vsel %vm1530, %v1518, %v931
        %v1552 = vsel %vm1530, %v1519, %v933
        %v1553 = vsel %vm1530, %v1520, %v935
        %v1554 = vsel %vm1530, %v1521, %v937
        %v1555 = vsel %vm1530, %v1522, %v939
        %v1556 = vsel %vm1530, %v1523, %v941
        %v1557 = vsel %vm1530, %v1524, %v943
        %v1558 = vsel %vm1530, %v1525, %v945
        %v1559 = vsel %vm1530, %v1526, %v947
        %v1560 = vsel %vm1530, %v1527, %v949
        %v1561 = vsel %vm1530, %v1528, %v951
        %v1562 = vsel %vm1530, %v1529, %v953
        %vm1563 = vcmask 785408
        %v1564 = vsel %vm1563, %v1531, %v1019
        %v1565 = vsel %vm1563, %v1532, %v1021
        %v1566 = vsel %vm1563, %v1533, %v1023
        %v1567 = vsel %vm1563, %v1534, %v1025
        %v1568 = vsel %vm1563, %v1535, %v1027
        %v1569 = vsel %vm1563, %v1536, %v1029
        %v1570 = vsel %vm1563, %v1537, %v1031
        %v1571 = vsel %vm1563, %v1538, %v1033
        %v1572 = vsel %vm1563, %v1539, %v1035
        %v1573 = vsel %vm1563, %v1540, %v1037
        %v1574 = vsel %vm1563, %v1541, %v1039
        %v1575 = vsel %vm1563, %v1542, %v1041
        %v1576 = vsel %vm1563, %v1543, %v1043
        %v1577 = vsel %vm1563, %v1544, %v1045
        %v1578 = vsel %vm1563, %v1545, %v1047
        %v1579 = vsel %vm1563, %v1546, %v1049
        %v1580 = vsel %vm1563, %v1547, %v1051
        %v1581 = vsel %vm1563, %v1548, %v1053
        %v1582 = vsel %vm1563, %v1549, %v1055
        %v1583 = vsel %vm1563, %v1550, %v1057
        %v1584 = vsel %vm1563, %v1551, %v1059
        %v1585 = vsel %vm1563, %v1552, %v1061
        %v1586 = vsel %vm1563, %v1553, %v1063
        %v1587 = vsel %vm1563, %v1554, %v1065
        %v1588 = vsel %vm1563, %v1555, %v1067
        %v1589 = vsel %vm1563, %v1556, %v1069
        %v1590 = vsel %vm1563, %v1557, %v1071
        %v1591 = vsel %vm1563, %v1558, %v1073
        %v1592 = vsel %vm1563, %v1559, %v1075
        %v1593 = vsel %vm1563, %v1560, %v1077
        %v1594 = vsel %vm1563, %v1561, %v1079
        %v1595 = vsel %vm1563, %v1562, %v1081
        %v1596 = vsel %vm256, %v569, %v1147
        %v1597 = vsel %vm256, %v570, %v1149
        %v1598 = vsel %vm256, %v571, %v1151
        %v1599 = vsel %vm256, %v572, %v1153
        %v1600 = vsel %vm256, %v573, %v1155
        %v1601 = vsel %vm256, %v574, %v1157
        %v1602 = vsel %vm256, %v575, %v1159
        %v1603 = vsel %vm256, %v576, %v1161
        %v1604 = vsel %vm256, %v577, %v1163
        %v1605 = vsel %vm256, %v578, %v1165
        %v1606 = vsel %vm256, %v579, %v1167
        %v1607 = vsel %vm256, %v580, %v1169
        %v1608 = vsel %vm256, %v581, %v1171
        %v1609 = vsel %vm256, %v582, %v1173
        %v1610 = vsel %vm256, %v583, %v1175
        %v1611 = vsel %vm256, %v584, %v1177
        %v1612 = vsel %vm256, %v585, %v1179
        %v1613 = vsel %vm256, %v586, %v1181
        %v1614 = vsel %vm256, %v587, %v1183
        %v1615 = vsel %vm256, %v588, %v1185
        %v1616 = vsel %vm256, %v589, %v1187
        %v1617 = vsel %vm256, %v590, %v1189
        %v1618 = vsel %vm256, %v591, %v1191
        %v1619 = vsel %vm256, %v592, %v1193
        %v1620 = vsel %vm256, %v593, %v1195
        %v1621 = vsel %vm256, %v594, %v1197
        %v1622 = vsel %vm256, %v595, %v1199
        %v1623 = vsel %vm256, %v596, %v1201
        %v1624 = vsel %vm256, %v597, %v1203
        %v1625 = vsel %vm256, %v598, %v1205
        %v1626 = vsel %vm256, %v599, %v1207
        %v1627 = vsel %vm256, %v600, %v1209
        %v1628 = vsel %vm1530, %v1596, %v1275
        %v1629 = vsel %vm1530, %v1597, %v1277
        %v1630 = vsel %vm1530, %v1598, %v1279
        %v1631 = vsel %vm1530, %v1599, %v1281
        %v1632 = vsel %vm1530, %v1600, %v1283
        %v1633 = vsel %vm1530, %v1601, %v1285
        %v1634 = vsel %vm1530, %v1602, %v1287
        %v1635 = vsel %vm1530, %v1603, %v1289
        %v1636 = vsel %vm1530, %v1604, %v1291
        %v1637 = vsel %vm1530, %v1605, %v1293
        %v1638 = vsel %vm1530, %v1606, %v1295
        %v1639 = vsel %vm1530, %v1607, %v1297
        %v1640 = vsel %vm1530, %v1608, %v1299
        %v1641 = vsel %vm1530, %v1609, %v1301
        %v1642 = vsel %vm1530, %v1610, %v1303
        %v1643 = vsel %vm1530, %v1611, %v1305
        %v1644 = vsel %vm1530, %v1612, %v1307
        %v1645 = vsel %vm1530, %v1613, %v1309
        %v1646 = vsel %vm1530, %v1614, %v1311
        %v1647 = vsel %vm1530, %v1615, %v1313
        %v1648 = vsel %vm1530, %v1616, %v1315
        %v1649 = vsel %vm1530, %v1617, %v1317
        %v1650 = vsel %vm1530, %v1618, %v1319
        %v1651 = vsel %vm1530, %v1619, %v1321
        %v1652 = vsel %vm1530, %v1620, %v1323
        %v1653 = vsel %vm1530, %v1621, %v1325
        %v1654 = vsel %vm1530, %v1622, %v1327
        %v1655 = vsel %vm1530, %v1623, %v1329
        %v1656 = vsel %vm1530, %v1624, %v1331
        %v1657 = vsel %vm1530, %v1625, %v1333
        %v1658 = vsel %vm1530, %v1626, %v1335
        %v1659 = vsel %vm1530, %v1627, %v1337
        %v1660 = vsel %vm1563, %v1628, %v1403
        %v1661 = vsel %vm1563, %v1629, %v1405
        %v1662 = vsel %vm1563, %v1630, %v1407
        %v1663 = vsel %vm1563, %v1631, %v1409
        %v1664 = vsel %vm1563, %v1632, %v1411
        %v1665 = vsel %vm1563, %v1633, %v1413
        %v1666 = vsel %vm1563, %v1634, %v1415
        %v1667 = vsel %vm1563, %v1635, %v1417
        %v1668 = vsel %vm1563, %v1636, %v1419
        %v1669 = vsel %vm1563, %v1637, %v1421
        %v1670 = vsel %vm1563, %v1638, %v1423
        %v1671 = vsel %vm1563, %v1639, %v1425
        %v1672 = vsel %vm1563, %v1640, %v1427
        %v1673 = vsel %vm1563, %v1641, %v1429
        %v1674 = vsel %vm1563, %v1642, %v1431
        %v1675 = vsel %vm1563, %v1643, %v1433
        %v1676 = vsel %vm1563, %v1644, %v1435
        %v1677 = vsel %vm1563, %v1645, %v1437
        %v1678 = vsel %vm1563, %v1646, %v1439
        %v1679 = vsel %vm1563, %v1647, %v1441
        %v1680 = vsel %vm1563, %v1648, %v1443
        %v1681 = vsel %vm1563, %v1649, %v1445
        %v1682 = vsel %vm1563, %v1650, %v1447
        %v1683 = vsel %vm1563, %v1651, %v1449
        %v1684 = vsel %vm1563, %v1652, %v1451
        %v1685 = vsel %vm1563, %v1653, %v1453
        %v1686 = vsel %vm1563, %v1654, %v1455
        %v1687 = vsel %vm1563, %v1655, %v1457
        %v1688 = vsel %vm1563, %v1656, %v1459
        %v1689 = vsel %vm1563, %v1657, %v1461
        %v1690 = vsel %vm1563, %v1658, %v1463
        %v1691 = vsel %vm1563, %v1659, %v1465
        %v1692 = vpack.c.bf16 %v1565, %v1564
        %v1693 = vpack.c.bf16 %v1661, %v1660
        %v1694 = vpack.c.bf16 %v699, %v698
        %v1695 = vpack.c.bf16 %v1567, %v1566
        %v1696 = vpack.c.bf16 %v1663, %v1662
        %v1697 = vpack.c.bf16 %v701, %v700
        %v1698 = vpack.c.bf16 %v1569, %v1568
        %v1699 = vpack.c.bf16 %v1665, %v1664
        %v1700 = vpack.c.bf16 %v703, %v702
        %v1701 = vpack.c.bf16 %v1571, %v1570
        %v1702 = vpack.c.bf16 %v1667, %v1666
        %v1703 = vpack.c.bf16 %v705, %v704
        %v1704 = vpack.c.bf16 %v1573, %v1572
        %v1705 = vpack.c.bf16 %v1669, %v1668
        %v1706 = vpack.c.bf16 %v707, %v706
        %v1707 = vpack.c.bf16 %v1575, %v1574
        %v1708 = vpack.c.bf16 %v1671, %v1670
        %v1709 = vpack.c.bf16 %v709, %v708
        %v1710 = vpack.c.bf16 %v1577, %v1576
        %v1711 = vpack.c.bf16 %v1673, %v1672
        %v1712 = vpack.c.bf16 %v711, %v710
        %v1713 = vpack.c.bf16 %v1579, %v1578
        %v1714 = vpack.c.bf16 %v1675, %v1674
        %v1715 = vpack.c.bf16 %v713, %v712
        %v1716 = vpack.c.bf16 %v1581, %v1580
        %v1717 = vpack.c.bf16 %v1677, %v1676
        %v1718 = vpack.c.bf16 %v715, %v714
        %v1719 = vpack.c.bf16 %v1583, %v1582
        %v1720 = vpack.c.bf16 %v1679, %v1678
        %v1721 = vpack.c.bf16 %v717, %v716
        %v1722 = vpack.c.bf16 %v1585, %v1584
        %v1723 = vpack.c.bf16 %v1681, %v1680
        %v1724 = vpack.c.bf16 %v719, %v718
        %v1725 = vpack.c.bf16 %v1587, %v1586
        %v1726 = vpack.c.bf16 %v1683, %v1682
        %v1727 = vpack.c.bf16 %v721, %v720
        %v1728 = vpack.c.bf16 %v1589, %v1588
        %v1729 = vpack.c.bf16 %v1685, %v1684
        %v1730 = vpack.c.bf16 %v723, %v722
        %v1731 = vpack.c.bf16 %v1591, %v1590
        %v1732 = vpack.c.bf16 %v1687, %v1686
        %v1733 = vpack.c.bf16 %v725, %v724
        %v1734 = vpack.c.bf16 %v1593, %v1592
        %v1735 = vpack.c.bf16 %v1689, %v1688
        %v1736 = vpack.c.bf16 %v727, %v726
        %v1737 = vpack.c.bf16 %v1595, %v1594
        %v1738 = vpack.c.bf16 %v1691, %v1690
        %v1739 = vpack.c.bf16 %v729, %v728
        %v1740 = vld [vmem:[%s1] sm:$0xf]
        %v1741 = vld [vmem:[%s1 + $0x4] sm:$0xf]
        %v1742 = vld [vmem:[%s1 + $0x8] sm:$0xf]
        %v1743 = vld [vmem:[%s1 + $0xc] sm:$0xf]
        %v1744 = vld [vmem:[%s1 + $0x10] sm:$0xf]
        %v1745 = vld [vmem:[%s1 + $0x14] sm:$0xf]
        %v1746 = vld [vmem:[%s1 + $0x18] sm:$0xf]
        %v1747 = vld [vmem:[%s1 + $0x1c] sm:$0xf]
        %v1748 = vld [vmem:[%s1 + $0x20] sm:$0xf]
        %v1749 = vld [vmem:[%s1 + $0x24] sm:$0xf]
        %v1750 = vld [vmem:[%s1 + $0x28] sm:$0xf]
        %v1751 = vld [vmem:[%s1 + $0x2c] sm:$0xf]
        %v1752 = vld [vmem:[%s1 + $0x30] sm:$0xf]
        %v1753 = vld [vmem:[%s1 + $0x34] sm:$0xf]
        %v1754 = vld [vmem:[%s1 + $0x38] sm:$0xf]
        %v1755 = vld [vmem:[%s1 + $0x3c] sm:$0xf]
        %v1756 = vld [vmem:[%s1 + $0x40] sm:$0xf]
        %v1757 = vld [vmem:[%s1 + $0x44] sm:$0xf]
        %v1758 = vld [vmem:[%s1 + $0x48] sm:$0xf]
        %v1759 = vld [vmem:[%s1 + $0x4c] sm:$0xf]
        %v1760 = vld [vmem:[%s1 + $0x50] sm:$0xf]
        %v1761 = vld [vmem:[%s1 + $0x54] sm:$0xf]
        %v1762 = vld [vmem:[%s1 + $0x58] sm:$0xf]
        %v1763 = vld [vmem:[%s1 + $0x5c] sm:$0xf]
        %v1764 = vld [vmem:[%s1 + $0x60] sm:$0xf]
        %v1765 = vld [vmem:[%s1 + $0x64] sm:$0xf]
        %v1766 = vld [vmem:[%s1 + $0x68] sm:$0xf]
        %v1767 = vld [vmem:[%s1 + $0x6c] sm:$0xf]
        %v1768 = vld [vmem:[%s1 + $0x70] sm:$0xf]
        %v1769 = vld [vmem:[%s1 + $0x74] sm:$0xf]
        %v1770 = vld [vmem:[%s1 + $0x78] sm:$0xf]
        %v1771 = vld [vmem:[%s1 + $0x7c] sm:$0xf]
        %v1772 = vld [vmem:[%s1 + $0x80] sm:$0xf]
        %v1773 = vld [vmem:[%s1 + $0x84] sm:$0xf]
        %v1774 = vld [vmem:[%s1 + $0x88] sm:$0xf]
        %v1775 = vld [vmem:[%s1 + $0x8c] sm:$0xf]
        %v1776 = vld [vmem:[%s2] sm:$0x1]
        %v1778 = vlaneseq
        %v1779 = vshrl.u32 %v1778, 7
        %v1780 = vsub.s32 0, %v1779
        %v1781 = vrot.slane %v1776, %v1780
        %v1819 = vunpack.c.l.b16 %v1740
        %v1820 = vunpack.c.l.b16 %v1741
        %v1821 = vunpack.c.l.b16 %v1742
        %v1822 = vunpack.c.l.b16 %v1743
        %v1823 = vunpack.c.l.b16 %v1744
        %v1824 = vunpack.c.l.b16 %v1745
        %v1825 = vunpack.c.l.b16 %v1746
        %v1826 = vunpack.c.l.b16 %v1747
        %v1827 = vunpack.c.l.b16 %v1748
        %v1828 = vunpack.c.l.b16 %v1749
        %v1829 = vunpack.c.l.b16 %v1750
        %v1830 = vunpack.c.l.b16 %v1751
        %v1831 = vunpack.c.l.b16 %v1752
        %v1832 = vunpack.c.l.b16 %v1753
        %v1833 = vunpack.c.l.b16 %v1754
        %v1834 = vunpack.c.l.b16 %v1755
        %v1835 = vunpack.c.l.b16 %v1756
        %v1836 = vunpack.c.l.b16 %v1757
        %v1837 = vunpack.c.l.b16 %v1758
        %v1838 = vunpack.c.l.b16 %v1759
        %v1839 = vunpack.c.l.b16 %v1760
        %v1840 = vunpack.c.l.b16 %v1761
        %v1841 = vunpack.c.l.b16 %v1762
        %v1842 = vunpack.c.l.b16 %v1763
        %v1843 = vunpack.c.l.b16 %v1764
        %v1844 = vunpack.c.l.b16 %v1765
        %v1845 = vunpack.c.l.b16 %v1766
        %v1846 = vunpack.c.l.b16 %v1767
        %v1847 = vunpack.c.l.b16 %v1768
        %v1848 = vunpack.c.l.b16 %v1769
        %v1849 = vunpack.c.l.b16 %v1770
        %v1850 = vunpack.c.l.b16 %v1771
        %v1851 = vunpack.c.l.b16 %v1772
        %v1852 = vunpack.c.l.b16 %v1773
        %v1853 = vunpack.c.l.b16 %v1774
        %v1854 = vunpack.c.l.b16 %v1775
        %v1855 = vpack.c.b16 %v1820, %v1819
        %v1856 = vpack.c.b16 %v1822, %v1821
        %v1857 = vpack.c.b16 %v1824, %v1823
        %v1858 = vpack.c.b16 %v1826, %v1825
        %v1859 = vpack.c.b16 %v1828, %v1827
        %v1860 = vpack.c.b16 %v1830, %v1829
        %v1861 = vpack.c.b16 %v1832, %v1831
        %v1862 = vpack.c.b16 %v1834, %v1833
        %v1863 = vpack.c.b16 %v1836, %v1835
        %v1864 = vpack.c.b16 %v1838, %v1837
        %v1865 = vpack.c.b16 %v1840, %v1839
        %v1866 = vpack.c.b16 %v1842, %v1841
        %v1867 = vpack.c.b16 %v1844, %v1843
        %v1868 = vpack.c.b16 %v1846, %v1845
        %v1869 = vpack.c.b16 %v1848, %v1847
        %v1870 = vpack.c.b16 %v1850, %v1849
        %v1871 = vpack.c.b16 %v1852, %v1851
        %v1872 = vpack.c.b16 %v1854, %v1853
        %v1892 = vsel %vm256, %v1694, 0
        %v1895 = vsel %vm256, %v1697, 0
        %v1898 = vsel %vm256, %v1700, 0
        %v1901 = vsel %vm256, %v1703, 0
        %v1904 = vsel %vm256, %v1706, 0
        %v1907 = vsel %vm256, %v1709, 0
        %v1910 = vsel %vm256, %v1712, 0
        %v1913 = vsel %vm256, %v1715, 0
        %v1916 = vsel %vm256, %v1718, 0
        %v1919 = vsel %vm256, %v1721, 0
        %v1922 = vsel %vm256, %v1724, 0
        %v1925 = vsel %vm256, %v1727, 0
        %v1928 = vsel %vm256, %v1730, 0
        %v1931 = vsel %vm256, %v1733, 0
        %v1934 = vsel %vm256, %v1736, 0
        %v1937 = vsel %vm256, %v1739, 0
        %1939 = vmatprep.subr.bf16.mxu0 0
        %1940 = vmatpush1.bf16.msra.mxu0 %v1855
        %1941 = vmatprep.subr.bf16.mxu0 0
        %1942 = vmatpush1.bf16.msra.mxu0 %v1856
        %1943 = vmatprep.subr.bf16.mxu0 0
        %1944 = vmatpush1.bf16.msra.mxu0 %v1857
        %1945 = vmatprep.subr.bf16.mxu0 0
        %1946 = vmatpush1.bf16.msra.mxu0 %v1858
        %1947 = vmatprep.subr.bf16.mxu0 0
        %1948 = vmatpush1.bf16.msra.mxu0 %v1859
        %1949 = vmatprep.subr.bf16.mxu0 0
        %1950 = vmatpush1.bf16.msra.mxu0 %v1860
        %1951 = vmatprep.subr.bf16.mxu0 0
        %1952 = vmatpush1.bf16.msra.mxu0 %v1861
        %1953 = vmatprep.subr.bf16.mxu0 0
        %1954 = vmatpush1.bf16.msra.mxu0 %v1862
        %1955 = vmatprep.subr.bf16.mxu0 0
        %1956 = vmatpush1.bf16.msra.mxu0 %v1863
        %1957 = vmatprep.subr.bf16.mxu0 0
        %1958 = vmatpush1.bf16.msra.mxu0 %v1864
        %1959 = vmatprep.subr.bf16.mxu0 0
        %1960 = vmatpush1.bf16.msra.mxu0 %v1865
        %1961 = vmatprep.subr.bf16.mxu0 0
        %1962 = vmatpush1.bf16.msra.mxu0 %v1866
        %1963 = vmatprep.subr.bf16.mxu0 0
        %1964 = vmatpush1.bf16.msra.mxu0 %v1867
        %1965 = vmatprep.subr.bf16.mxu0 0
        %1966 = vmatpush1.bf16.msra.mxu0 %v1868
        %1967 = vmatprep.subr.bf16.mxu0 0
        %1968 = vmatpush1.bf16.msra.mxu0 %v1869
        %1969 = vmatprep.subr.bf16.mxu0 0
        %1970 = vmatpush1.bf16.msra.mxu0 %v1870
        %1971 = vmatprep.mubr.bf16.mxu0 %v1693
        %1972 = vmatmul.mubr.bf16.gmra.mrb[0].mxu0 %v1692
        %v1973 = vpop.f32.mrb[0].mxu0
        %v1974 = vadd.f32 %v1781, %v1973
        %v1975 = vpop.f32.mrb[0].mxu0
        %v1976 = vpop.f32.mrb[0].mxu0
        %v1977 = vadd.f32 %v1781, %v1976
        %v1978 = vpop.f32.mrb[0].mxu0
        %1979 = vmatprep.mubr.bf16.mxu0 %v1696
        %1980 = vmatmul.mubr.bf16.gmra.mrb[0].mxu0 %v1695
        %v1981 = vpop.f32.mrb[0].mxu0
        %v1982 = vadd.f32 %v1781, %v1981
        %v1983 = vpop.f32.mrb[0].mxu0
        %v1984 = vpop.f32.mrb[0].mxu0
        %v1985 = vadd.f32 %v1781, %v1984
        %v1986 = vpop.f32.mrb[0].mxu0
        %1987 = vmatprep.mubr.bf16.mxu0 %v1699
        %1988 = vmatmul.mubr.bf16.gmra.mrb[0].mxu0 %v1698
        %v1989 = vpop.f32.mrb[0].mxu0
        %v1990 = vadd.f32 %v1781, %v1989
        %v1991 = vpop.f32.mrb[0].mxu0
        %v1992 = vpop.f32.mrb[0].mxu0
        %v1993 = vadd.f32 %v1781, %v1992
        %v1994 = vpop.f32.mrb[0].mxu0
        %1995 = vmatprep.mubr.bf16.mxu0 %v1702
        %1996 = vmatmul.mubr.bf16.gmra.mrb[0].mxu0 %v1701
        %v1997 = vpop.f32.mrb[0].mxu0
        %v1998 = vadd.f32 %v1781, %v1997
        %v1999 = vpop.f32.mrb[0].mxu0
        %v2000 = vpop.f32.mrb[0].mxu0
        %v2001 = vadd.f32 %v1781, %v2000
        %v2002 = vpop.f32.mrb[0].mxu0
        %2003 = vmatprep.mubr.bf16.mxu0 %v1705
        %2004 = vmatmul.mubr.bf16.gmra.mrb[0].mxu0 %v1704
        %v2005 = vpop.f32.mrb[0].mxu0
        %v2006 = vadd.f32 %v1781, %v2005
        %v2007 = vpop.f32.mrb[0].mxu0
        %v2008 = vpop.f32.mrb[0].mxu0
        %v2009 = vadd.f32 %v1781, %v2008
        %v2010 = vpop.f32.mrb[0].mxu0
        %2011 = vmatprep.mubr.bf16.mxu0 %v1708
        %2012 = vmatmul.mubr.bf16.gmra.mrb[0].mxu0 %v1707
        %v2013 = vpop.f32.mrb[0].mxu0
        %v2014 = vadd.f32 %v1781, %v2013
        %v2015 = vpop.f32.mrb[0].mxu0
        %v2016 = vpop.f32.mrb[0].mxu0
        %v2017 = vadd.f32 %v1781, %v2016
        %v2018 = vpop.f32.mrb[0].mxu0
        %2019 = vmatprep.mubr.bf16.mxu0 %v1711
        %2020 = vmatmul.mubr.bf16.gmra.mrb[0].mxu0 %v1710
        %v2021 = vpop.f32.mrb[0].mxu0
        %v2022 = vadd.f32 %v1781, %v2021
        %v2023 = vpop.f32.mrb[0].mxu0
        %v2024 = vpop.f32.mrb[0].mxu0
        %v2025 = vadd.f32 %v1781, %v2024
        %v2026 = vpop.f32.mrb[0].mxu0
        %2027 = vmatprep.mubr.bf16.mxu0 %v1714
        %2028 = vmatmul.mubr.bf16.gmra.mrb[0].mxu0 %v1713
        %v2029 = vpop.f32.mrb[0].mxu0
        %v2030 = vadd.f32 %v1781, %v2029
        %v2031 = vpop.f32.mrb[0].mxu0
        %v2032 = vpop.f32.mrb[0].mxu0
        %v2033 = vadd.f32 %v1781, %v2032
        %v2034 = vpop.f32.mrb[0].mxu0
        %2035 = vmatprep.mubr.bf16.mxu0 %v1717
        %2036 = vmatmul.mubr.bf16.gmra.mrb[0].mxu0 %v1716
        %v2037 = vpop.f32.mrb[0].mxu0
        %v2038 = vadd.f32 %v1781, %v2037
        %v2039 = vpop.f32.mrb[0].mxu0
        %v2040 = vpop.f32.mrb[0].mxu0
        %v2041 = vadd.f32 %v1781, %v2040
        %v2042 = vpop.f32.mrb[0].mxu0
        %2043 = vmatprep.mubr.bf16.mxu0 %v1720
        %2044 = vmatmul.mubr.bf16.gmra.mrb[0].mxu0 %v1719
        %v2045 = vpop.f32.mrb[0].mxu0
        %v2046 = vadd.f32 %v1781, %v2045
        %v2047 = vpop.f32.mrb[0].mxu0
        %v2048 = vpop.f32.mrb[0].mxu0
        %v2049 = vadd.f32 %v1781, %v2048
        %v2050 = vpop.f32.mrb[0].mxu0
        %2051 = vmatprep.mubr.bf16.mxu0 %v1723
        %2052 = vmatmul.mubr.bf16.gmra.mrb[0].mxu0 %v1722
        %v2053 = vpop.f32.mrb[0].mxu0
        %v2054 = vadd.f32 %v1781, %v2053
        %v2055 = vpop.f32.mrb[0].mxu0
        %v2056 = vpop.f32.mrb[0].mxu0
        %v2057 = vadd.f32 %v1781, %v2056
        %v2058 = vpop.f32.mrb[0].mxu0
        %2059 = vmatprep.mubr.bf16.mxu0 %v1726
        %2060 = vmatmul.mubr.bf16.gmra.mrb[0].mxu0 %v1725
        %v2061 = vpop.f32.mrb[0].mxu0
        %v2062 = vadd.f32 %v1781, %v2061
        %v2063 = vpop.f32.mrb[0].mxu0
        %v2064 = vpop.f32.mrb[0].mxu0
        %v2065 = vadd.f32 %v1781, %v2064
        %v2066 = vpop.f32.mrb[0].mxu0
        %2067 = vmatprep.mubr.bf16.mxu0 %v1729
        %2068 = vmatmul.mubr.bf16.gmra.mrb[0].mxu0 %v1728
        %v2069 = vpop.f32.mrb[0].mxu0
        %v2070 = vadd.f32 %v1781, %v2069
        %v2071 = vpop.f32.mrb[0].mxu0
        %v2072 = vpop.f32.mrb[0].mxu0
        %v2073 = vadd.f32 %v1781, %v2072
        %v2074 = vpop.f32.mrb[0].mxu0
        %2075 = vmatprep.mubr.bf16.mxu0 %v1732
        %2076 = vmatmul.mubr.bf16.gmra.mrb[0].mxu0 %v1731
        %v2077 = vpop.f32.mrb[0].mxu0
        %v2078 = vadd.f32 %v1781, %v2077
        %v2079 = vpop.f32.mrb[0].mxu0
        %v2080 = vpop.f32.mrb[0].mxu0
        %v2081 = vadd.f32 %v1781, %v2080
        %v2082 = vpop.f32.mrb[0].mxu0
        %2083 = vmatprep.mubr.bf16.mxu0 %v1735
        %2084 = vmatmul.mubr.bf16.gmra.mrb[0].mxu0 %v1734
        %v2085 = vpop.f32.mrb[0].mxu0
        %v2086 = vadd.f32 %v1781, %v2085
        %v2087 = vpop.f32.mrb[0].mxu0
        %v2088 = vpop.f32.mrb[0].mxu0
        %v2089 = vadd.f32 %v1781, %v2088
        %v2090 = vpop.f32.mrb[0].mxu0
        %2091 = vmatprep.mubr.bf16.mxu0 %v1738
        %2092 = vmatmul.mubr.bf16.gmra.mrb[0].mxu0 %v1737
        %v2093 = vpop.f32.mrb[0].mxu0
        %v2094 = vadd.f32 %v1781, %v2093
        %v2095 = vpop.f32.mrb[0].mxu0
        %v2096 = vpop.f32.mrb[0].mxu0
        %v2097 = vadd.f32 %v1781, %v2096
        %v2098 = vpop.f32.mrb[0].mxu0
        %2099 = vdwg.mxu0
        %2100 = vmatprep.subr.bf16.mxu0 0
        %2101 = vmatpush1.bf16.msra.mxu0 %v1871
        %2102 = vmatprep.subr.bf16.mxu0 0
        %2103 = vmatpush1.bf16.msra.mxu0 %v1872
        %2104 = vmatprep.subr.bf16.mxu0 0
        %2105 = vmatpush1.bf16.msra.mxu0 0
        %2106 = vmatprep.subr.bf16.mxu0 0
        %2107 = vmatpush1.bf16.msra.mxu0 0
        %2108 = vmatprep.subr.bf16.mxu0 0
        %2109 = vmatpush1.bf16.msra.mxu0 0
        %2110 = vmatprep.subr.bf16.mxu0 0
        %2111 = vmatpush1.bf16.msra.mxu0 0
        %2112 = vmatprep.subr.bf16.mxu0 0
        %2113 = vmatpush1.bf16.msra.mxu0 0
        %2114 = vmatprep.subr.bf16.mxu0 0
        %2115 = vmatpush1.bf16.msra.mxu0 0
        %2116 = vmatprep.subr.bf16.mxu0 0
        %2117 = vmatpush1.bf16.msra.mxu0 0
        %2118 = vmatprep.subr.bf16.mxu0 0
        %2119 = vmatpush1.bf16.msra.mxu0 0
        %2120 = vmatprep.subr.bf16.mxu0 0
        %2121 = vmatpush1.bf16.msra.mxu0 0
        %2122 = vmatprep.subr.bf16.mxu0 0
        %2123 = vmatpush1.bf16.msra.mxu0 0
        %2124 = vmatprep.subr.bf16.mxu0 0
        %2125 = vmatpush1.bf16.msra.mxu0 0
        %2126 = vmatprep.subr.bf16.mxu0 0
        %2127 = vmatpush1.bf16.msra.mxu0 0
        %2128 = vmatprep.subr.bf16.mxu0 0
        %2129 = vmatpush1.bf16.msra.mxu0 0
        %2130 = vmatprep.subr.bf16.mxu0 0
        %2131 = vmatpush1.bf16.msra.mxu0 0
        %2132 = vmatprep.mubr.bf16.mxu0 0
        %2133 = vmatmul.mubr.bf16.gmra.mrb[0].mxu0 %v1892
        %v2134 = vpop.f32.mrb[0].mxu0
        %v2135 = vadd.f32 %v1974, %v2134
        %v2136 = vpop.f32.mrb[0].mxu0
        %v2137 = vpop.f32.mrb[0].mxu0
        %v2138 = vadd.f32 %v1977, %v2137
        %v2139 = vpop.f32.mrb[0].mxu0
        %2140 = vmatprep.mubr.bf16.mxu0 0
        %2141 = vmatmul.mubr.bf16.gmra.mrb[0].mxu0 %v1895
        %v2142 = vpop.f32.mrb[0].mxu0
        %v2143 = vadd.f32 %v1982, %v2142
        %v2144 = vpop.f32.mrb[0].mxu0
        %v2145 = vpop.f32.mrb[0].mxu0
        %v2146 = vadd.f32 %v1985, %v2145
        %v2147 = vpop.f32.mrb[0].mxu0
        %2148 = vmatprep.mubr.bf16.mxu0 0
        %2149 = vmatmul.mubr.bf16.gmra.mrb[0].mxu0 %v1898
        %v2150 = vpop.f32.mrb[0].mxu0
        %v2151 = vadd.f32 %v1990, %v2150
        %v2152 = vpop.f32.mrb[0].mxu0
        %v2153 = vpop.f32.mrb[0].mxu0
        %v2154 = vadd.f32 %v1993, %v2153
        %v2155 = vpop.f32.mrb[0].mxu0
        %2156 = vmatprep.mubr.bf16.mxu0 0
        %2157 = vmatmul.mubr.bf16.gmra.mrb[0].mxu0 %v1901
        %v2158 = vpop.f32.mrb[0].mxu0
        %v2159 = vadd.f32 %v1998, %v2158
        %v2160 = vpop.f32.mrb[0].mxu0
        %v2161 = vpop.f32.mrb[0].mxu0
        %v2162 = vadd.f32 %v2001, %v2161
        %v2163 = vpop.f32.mrb[0].mxu0
        %2164 = vmatprep.mubr.bf16.mxu0 0
        %2165 = vmatmul.mubr.bf16.gmra.mrb[0].mxu0 %v1904
        %v2166 = vpop.f32.mrb[0].mxu0
        %v2167 = vadd.f32 %v2006, %v2166
        %v2168 = vpop.f32.mrb[0].mxu0
        %v2169 = vpop.f32.mrb[0].mxu0
        %v2170 = vadd.f32 %v2009, %v2169
        %v2171 = vpop.f32.mrb[0].mxu0
        %2172 = vmatprep.mubr.bf16.mxu0 0
        %2173 = vmatmul.mubr.bf16.gmra.mrb[0].mxu0 %v1907
        %v2174 = vpop.f32.mrb[0].mxu0
        %v2175 = vadd.f32 %v2014, %v2174
        %v2176 = vpop.f32.mrb[0].mxu0
        %v2177 = vpop.f32.mrb[0].mxu0
        %v2178 = vadd.f32 %v2017, %v2177
        %v2179 = vpop.f32.mrb[0].mxu0
        %2180 = vmatprep.mubr.bf16.mxu0 0
        %2181 = vmatmul.mubr.bf16.gmra.mrb[0].mxu0 %v1910
        %v2182 = vpop.f32.mrb[0].mxu0
        %v2183 = vadd.f32 %v2022, %v2182
        %v2184 = vpop.f32.mrb[0].mxu0
        %v2185 = vpop.f32.mrb[0].mxu0
        %v2186 = vadd.f32 %v2025, %v2185
        %v2187 = vpop.f32.mrb[0].mxu0
        %2188 = vmatprep.mubr.bf16.mxu0 0
        %2189 = vmatmul.mubr.bf16.gmra.mrb[0].mxu0 %v1913
        %v2190 = vpop.f32.mrb[0].mxu0
        %v2191 = vadd.f32 %v2030, %v2190
        %v2192 = vpop.f32.mrb[0].mxu0
        %v2193 = vpop.f32.mrb[0].mxu0
        %v2194 = vadd.f32 %v2033, %v2193
        %v2195 = vpop.f32.mrb[0].mxu0
        %2196 = vmatprep.mubr.bf16.mxu0 0
        %2197 = vmatmul.mubr.bf16.gmra.mrb[0].mxu0 %v1916
        %v2198 = vpop.f32.mrb[0].mxu0
        %v2199 = vadd.f32 %v2038, %v2198
        %v2200 = vpop.f32.mrb[0].mxu0
        %v2201 = vpop.f32.mrb[0].mxu0
        %v2202 = vadd.f32 %v2041, %v2201
        %v2203 = vpop.f32.mrb[0].mxu0
        %2204 = vmatprep.mubr.bf16.mxu0 0
        %2205 = vmatmul.mubr.bf16.gmra.mrb[0].mxu0 %v1919
        %v2206 = vpop.f32.mrb[0].mxu0
        %v2207 = vadd.f32 %v2046, %v2206
        %v2208 = vpop.f32.mrb[0].mxu0
        %v2209 = vpop.f32.mrb[0].mxu0
        %v2210 = vadd.f32 %v2049, %v2209
        %v2211 = vpop.f32.mrb[0].mxu0
        %2212 = vmatprep.mubr.bf16.mxu0 0
        %2213 = vmatmul.mubr.bf16.gmra.mrb[0].mxu0 %v1922
        %v2214 = vpop.f32.mrb[0].mxu0
        %v2215 = vadd.f32 %v2054, %v2214
        %v2216 = vpop.f32.mrb[0].mxu0
        %v2217 = vpop.f32.mrb[0].mxu0
        %v2218 = vadd.f32 %v2057, %v2217
        %v2219 = vpop.f32.mrb[0].mxu0
        %2220 = vmatprep.mubr.bf16.mxu0 0
        %2221 = vmatmul.mubr.bf16.gmra.mrb[0].mxu0 %v1925
        %v2222 = vpop.f32.mrb[0].mxu0
        %v2223 = vadd.f32 %v2062, %v2222
        %v2224 = vpop.f32.mrb[0].mxu0
        %v2225 = vpop.f32.mrb[0].mxu0
        %v2226 = vadd.f32 %v2065, %v2225
        %v2227 = vpop.f32.mrb[0].mxu0
        %2228 = vmatprep.mubr.bf16.mxu0 0
        %2229 = vmatmul.mubr.bf16.gmra.mrb[0].mxu0 %v1928
        %v2230 = vpop.f32.mrb[0].mxu0
        %v2231 = vadd.f32 %v2070, %v2230
        %v2232 = vpop.f32.mrb[0].mxu0
        %v2233 = vpop.f32.mrb[0].mxu0
        %v2234 = vadd.f32 %v2073, %v2233
        %v2235 = vpop.f32.mrb[0].mxu0
        %2236 = vmatprep.mubr.bf16.mxu0 0
        %2237 = vmatmul.mubr.bf16.gmra.mrb[0].mxu0 %v1931
        %v2238 = vpop.f32.mrb[0].mxu0
        %v2239 = vadd.f32 %v2078, %v2238
        %v2240 = vpop.f32.mrb[0].mxu0
        %v2241 = vpop.f32.mrb[0].mxu0
        %v2242 = vadd.f32 %v2081, %v2241
        %v2243 = vpop.f32.mrb[0].mxu0
        %2244 = vmatprep.mubr.bf16.mxu0 0
        %2245 = vmatmul.mubr.bf16.gmra.mrb[0].mxu0 %v1934
        %v2246 = vpop.f32.mrb[0].mxu0
        %v2247 = vadd.f32 %v2086, %v2246
        %v2248 = vpop.f32.mrb[0].mxu0
        %v2249 = vpop.f32.mrb[0].mxu0
        %v2250 = vadd.f32 %v2089, %v2249
        %v2251 = vpop.f32.mrb[0].mxu0
        %2252 = vmatprep.mubr.bf16.mxu0 0
        %2253 = vmatmul.mubr.bf16.gmra.mrb[0].mxu0 %v1937
        %v2254 = vpop.f32.mrb[0].mxu0
        %v2255 = vadd.f32 %v2094, %v2254
        %v2256 = vpop.f32.mrb[0].mxu0
        %v2257 = vpop.f32.mrb[0].mxu0
        %v2258 = vadd.f32 %v2097, %v2257
        %v2259 = vpop.f32.mrb[0].mxu0
        %2260 = vdwg.mxu0
        %v2261 = vmax.f32 %v2135, 0.0
        %v2262 = vmax.f32 %v2138, 0.0
        %v2263 = vmax.f32 %v2143, 0.0
        %v2264 = vmax.f32 %v2146, 0.0
        %v2265 = vmax.f32 %v2151, 0.0
        %v2266 = vmax.f32 %v2154, 0.0
        %v2267 = vmax.f32 %v2159, 0.0
        %v2268 = vmax.f32 %v2162, 0.0
        %v2269 = vmax.f32 %v2167, 0.0
        %v2270 = vmax.f32 %v2170, 0.0
        %v2271 = vmax.f32 %v2175, 0.0
        %v2272 = vmax.f32 %v2178, 0.0
        %v2273 = vmax.f32 %v2183, 0.0
        %v2274 = vmax.f32 %v2186, 0.0
        %v2275 = vmax.f32 %v2191, 0.0
        %v2276 = vmax.f32 %v2194, 0.0
        %v2277 = vmax.f32 %v2199, 0.0
        %v2278 = vmax.f32 %v2202, 0.0
        %v2279 = vmax.f32 %v2207, 0.0
        %v2280 = vmax.f32 %v2210, 0.0
        %v2281 = vmax.f32 %v2215, 0.0
        %v2282 = vmax.f32 %v2218, 0.0
        %v2283 = vmax.f32 %v2223, 0.0
        %v2284 = vmax.f32 %v2226, 0.0
        %v2285 = vmax.f32 %v2231, 0.0
        %v2286 = vmax.f32 %v2234, 0.0
        %v2287 = vmax.f32 %v2239, 0.0
        %v2288 = vmax.f32 %v2242, 0.0
        %v2289 = vmax.f32 %v2247, 0.0
        %v2290 = vmax.f32 %v2250, 0.0
        %v2291 = vmax.f32 %v2255, 0.0
        %v2292 = vmax.f32 %v2258, 0.0
        %v2293 = vpack.c.bf16 %v2262, %v2261
        %v2294 = vpack.c.bf16 %v2264, %v2263
        %v2295 = vpack.c.bf16 %v2266, %v2265
        %v2296 = vpack.c.bf16 %v2268, %v2267
        %v2297 = vpack.c.bf16 %v2270, %v2269
        %v2298 = vpack.c.bf16 %v2272, %v2271
        %v2299 = vpack.c.bf16 %v2274, %v2273
        %v2300 = vpack.c.bf16 %v2276, %v2275
        %v2301 = vpack.c.bf16 %v2278, %v2277
        %v2302 = vpack.c.bf16 %v2280, %v2279
        %v2303 = vpack.c.bf16 %v2282, %v2281
        %v2304 = vpack.c.bf16 %v2284, %v2283
        %v2305 = vpack.c.bf16 %v2286, %v2285
        %v2306 = vpack.c.bf16 %v2288, %v2287
        %v2307 = vpack.c.bf16 %v2290, %v2289
        %v2308 = vpack.c.bf16 %v2292, %v2291
        %v2309 = vld [vmem:[%s3] sm:$0xf]
        %v2310 = vld [vmem:[%s3 + $0x4] sm:$0xf]
        %v2311 = vld [vmem:[%s3 + $0x8] sm:$0xf]
        %v2312 = vld [vmem:[%s3 + $0xc] sm:$0xf]
        %v2313 = vld [vmem:[%s3 + $0x10] sm:$0xf]
        %v2314 = vld [vmem:[%s3 + $0x14] sm:$0xf]
        %v2315 = vld [vmem:[%s3 + $0x18] sm:$0xf]
        %v2316 = vld [vmem:[%s3 + $0x1c] sm:$0xf]
        %v2325 = vunpack.c.l.b16 %v2309
        %v2326 = vunpack.c.l.b16 %v2310
        %v2327 = vunpack.c.l.b16 %v2311
        %v2328 = vunpack.c.l.b16 %v2312
        %v2329 = vunpack.c.l.b16 %v2313
        %v2330 = vunpack.c.l.b16 %v2314
        %v2331 = vunpack.c.l.b16 %v2315
        %v2332 = vunpack.c.l.b16 %v2316
        %v2333 = vpack.c.b16 %v2326, %v2325
        %v2334 = vpack.c.b16 %v2328, %v2327
        %v2335 = vpack.c.b16 %v2330, %v2329
        %v2336 = vpack.c.b16 %v2332, %v2331
        %v2342 = vsel %vm1530, %v2293, 0
        %v2345 = vsel %vm1530, %v2294, 0
        %v2348 = vsel %vm1530, %v2295, 0
        %v2351 = vsel %vm1530, %v2296, 0
        %v2354 = vsel %vm1530, %v2297, 0
        %v2357 = vsel %vm1530, %v2298, 0
        %v2360 = vsel %vm1530, %v2299, 0
        %v2363 = vsel %vm1530, %v2300, 0
        %v2366 = vsel %vm1530, %v2301, 0
        %v2369 = vsel %vm1530, %v2302, 0
        %v2372 = vsel %vm1530, %v2303, 0
        %v2375 = vsel %vm1530, %v2304, 0
        %v2378 = vsel %vm1530, %v2305, 0
        %v2381 = vsel %vm1530, %v2306, 0
        %v2384 = vsel %vm1530, %v2307, 0
        %v2387 = vsel %vm1530, %v2308, 0
        %2389 = vmatprep.subr.bf16.mxu0 0
        %2390 = vmatpush1.bf16.msra.mxu0 %v2333
        %2391 = vmatprep.subr.bf16.mxu0 0
        %2392 = vmatpush1.bf16.msra.mxu0 %v2334
        %2393 = vmatprep.subr.bf16.mxu0 0
        %2394 = vmatpush1.bf16.msra.mxu0 %v2335
        %2395 = vmatprep.subr.bf16.mxu0 0
        %2396 = vmatpush1.bf16.msra.mxu0 %v2336
        %2397 = vmatprep.subr.bf16.mxu0 0
        %2398 = vmatpush1.bf16.msra.mxu0 0
        %2399 = vmatprep.subr.bf16.mxu0 0
        %2400 = vmatpush1.bf16.msra.mxu0 0
        %2401 = vmatprep.subr.bf16.mxu0 0
        %2402 = vmatpush1.bf16.msra.mxu0 0
        %2403 = vmatprep.subr.bf16.mxu0 0
        %2404 = vmatpush1.bf16.msra.mxu0 0
        %2405 = vmatprep.subr.bf16.mxu0 0
        %2406 = vmatpush1.bf16.msra.mxu0 0
        %2407 = vmatprep.subr.bf16.mxu0 0
        %2408 = vmatpush1.bf16.msra.mxu0 0
        %2409 = vmatprep.subr.bf16.mxu0 0
        %2410 = vmatpush1.bf16.msra.mxu0 0
        %2411 = vmatprep.subr.bf16.mxu0 0
        %2412 = vmatpush1.bf16.msra.mxu0 0
        %2413 = vmatprep.subr.bf16.mxu0 0
        %2414 = vmatpush1.bf16.msra.mxu0 0
        %2415 = vmatprep.subr.bf16.mxu0 0
        %2416 = vmatpush1.bf16.msra.mxu0 0
        %2417 = vmatprep.subr.bf16.mxu0 0
        %2418 = vmatpush1.bf16.msra.mxu0 0
        %2419 = vmatprep.subr.bf16.mxu0 0
        %2420 = vmatpush1.bf16.msra.mxu0 0
        %2421 = vmatprep.mubr.bf16.mxu0 0
        %2422 = vmatmul.mubr.bf16.gmra.mrb[0].mxu0 %v2342
        %v2423 = vpop.f32.mrb[0].mxu0
        %v2424 = vadd.f32 0.0, %v2423
        %v2425 = vpop.f32.mrb[0].mxu0
        %v2426 = vpop.f32.mrb[0].mxu0
        %v2427 = vadd.f32 0.0, %v2426
        %v2428 = vpop.f32.mrb[0].mxu0
        %2429 = vmatprep.mubr.bf16.mxu0 0
        %2430 = vmatmul.mubr.bf16.gmra.mrb[0].mxu0 %v2345
        %v2431 = vpop.f32.mrb[0].mxu0
        %v2432 = vadd.f32 0.0, %v2431
        %v2433 = vpop.f32.mrb[0].mxu0
        %v2434 = vpop.f32.mrb[0].mxu0
        %v2435 = vadd.f32 0.0, %v2434
        %v2436 = vpop.f32.mrb[0].mxu0
        %2437 = vmatprep.mubr.bf16.mxu0 0
        %2438 = vmatmul.mubr.bf16.gmra.mrb[0].mxu0 %v2348
        %v2439 = vpop.f32.mrb[0].mxu0
        %v2440 = vadd.f32 0.0, %v2439
        %v2441 = vpop.f32.mrb[0].mxu0
        %v2442 = vpop.f32.mrb[0].mxu0
        %v2443 = vadd.f32 0.0, %v2442
        %v2444 = vpop.f32.mrb[0].mxu0
        %2445 = vmatprep.mubr.bf16.mxu0 0
        %2446 = vmatmul.mubr.bf16.gmra.mrb[0].mxu0 %v2351
        %v2447 = vpop.f32.mrb[0].mxu0
        %v2448 = vadd.f32 0.0, %v2447
        %v2449 = vpop.f32.mrb[0].mxu0
        %v2450 = vpop.f32.mrb[0].mxu0
        %v2451 = vadd.f32 0.0, %v2450
        %v2452 = vpop.f32.mrb[0].mxu0
        %2453 = vmatprep.mubr.bf16.mxu0 0
        %2454 = vmatmul.mubr.bf16.gmra.mrb[0].mxu0 %v2354
        %v2455 = vpop.f32.mrb[0].mxu0
        %v2456 = vadd.f32 0.0, %v2455
        %v2457 = vpop.f32.mrb[0].mxu0
        %v2458 = vpop.f32.mrb[0].mxu0
        %v2459 = vadd.f32 0.0, %v2458
        %v2460 = vpop.f32.mrb[0].mxu0
        %2461 = vmatprep.mubr.bf16.mxu0 0
        %2462 = vmatmul.mubr.bf16.gmra.mrb[0].mxu0 %v2357
        %v2463 = vpop.f32.mrb[0].mxu0
        %v2464 = vadd.f32 0.0, %v2463
        %v2465 = vpop.f32.mrb[0].mxu0
        %v2466 = vpop.f32.mrb[0].mxu0
        %v2467 = vadd.f32 0.0, %v2466
        %v2468 = vpop.f32.mrb[0].mxu0
        %2469 = vmatprep.mubr.bf16.mxu0 0
        %2470 = vmatmul.mubr.bf16.gmra.mrb[0].mxu0 %v2360
        %v2471 = vpop.f32.mrb[0].mxu0
        %v2472 = vadd.f32 0.0, %v2471
        %v2473 = vpop.f32.mrb[0].mxu0
        %v2474 = vpop.f32.mrb[0].mxu0
        %v2475 = vadd.f32 0.0, %v2474
        %v2476 = vpop.f32.mrb[0].mxu0
        %2477 = vmatprep.mubr.bf16.mxu0 0
        %2478 = vmatmul.mubr.bf16.gmra.mrb[0].mxu0 %v2363
        %v2479 = vpop.f32.mrb[0].mxu0
        %v2480 = vadd.f32 0.0, %v2479
        %v2481 = vpop.f32.mrb[0].mxu0
        %v2482 = vpop.f32.mrb[0].mxu0
        %v2483 = vadd.f32 0.0, %v2482
        %v2484 = vpop.f32.mrb[0].mxu0
        %2485 = vmatprep.mubr.bf16.mxu0 0
        %2486 = vmatmul.mubr.bf16.gmra.mrb[0].mxu0 %v2366
        %v2487 = vpop.f32.mrb[0].mxu0
        %v2488 = vadd.f32 0.0, %v2487
        %v2489 = vpop.f32.mrb[0].mxu0
        %v2490 = vpop.f32.mrb[0].mxu0
        %v2491 = vadd.f32 0.0, %v2490
        %v2492 = vpop.f32.mrb[0].mxu0
        %2493 = vmatprep.mubr.bf16.mxu0 0
        %2494 = vmatmul.mubr.bf16.gmra.mrb[0].mxu0 %v2369
        %v2495 = vpop.f32.mrb[0].mxu0
        %v2496 = vadd.f32 0.0, %v2495
        %v2497 = vpop.f32.mrb[0].mxu0
        %v2498 = vpop.f32.mrb[0].mxu0
        %v2499 = vadd.f32 0.0, %v2498
        %v2500 = vpop.f32.mrb[0].mxu0
        %2501 = vmatprep.mubr.bf16.mxu0 0
        %2502 = vmatmul.mubr.bf16.gmra.mrb[0].mxu0 %v2372
        %v2503 = vpop.f32.mrb[0].mxu0
        %v2504 = vadd.f32 0.0, %v2503
        %v2505 = vpop.f32.mrb[0].mxu0
        %v2506 = vpop.f32.mrb[0].mxu0
        %v2507 = vadd.f32 0.0, %v2506
        %v2508 = vpop.f32.mrb[0].mxu0
        %2509 = vmatprep.mubr.bf16.mxu0 0
        %2510 = vmatmul.mubr.bf16.gmra.mrb[0].mxu0 %v2375
        %v2511 = vpop.f32.mrb[0].mxu0
        %v2512 = vadd.f32 0.0, %v2511
        %v2513 = vpop.f32.mrb[0].mxu0
        %v2514 = vpop.f32.mrb[0].mxu0
        %v2515 = vadd.f32 0.0, %v2514
        %v2516 = vpop.f32.mrb[0].mxu0
        %2517 = vmatprep.mubr.bf16.mxu0 0
        %2518 = vmatmul.mubr.bf16.gmra.mrb[0].mxu0 %v2378
        %v2519 = vpop.f32.mrb[0].mxu0
        %v2520 = vadd.f32 0.0, %v2519
        %v2521 = vpop.f32.mrb[0].mxu0
        %v2522 = vpop.f32.mrb[0].mxu0
        %v2523 = vadd.f32 0.0, %v2522
        %v2524 = vpop.f32.mrb[0].mxu0
        %2525 = vmatprep.mubr.bf16.mxu0 0
        %2526 = vmatmul.mubr.bf16.gmra.mrb[0].mxu0 %v2381
        %v2527 = vpop.f32.mrb[0].mxu0
        %v2528 = vadd.f32 0.0, %v2527
        %v2529 = vpop.f32.mrb[0].mxu0
        %v2530 = vpop.f32.mrb[0].mxu0
        %v2531 = vadd.f32 0.0, %v2530
        %v2532 = vpop.f32.mrb[0].mxu0
        %2533 = vmatprep.mubr.bf16.mxu0 0
        %2534 = vmatmul.mubr.bf16.gmra.mrb[0].mxu0 %v2384
        %v2535 = vpop.f32.mrb[0].mxu0
        %v2536 = vadd.f32 0.0, %v2535
        %v2537 = vpop.f32.mrb[0].mxu0
        %v2538 = vpop.f32.mrb[0].mxu0
        %v2539 = vadd.f32 0.0, %v2538
        %v2540 = vpop.f32.mrb[0].mxu0
        %2541 = vmatprep.mubr.bf16.mxu0 0
        %2542 = vmatmul.mubr.bf16.gmra.mrb[0].mxu0 %v2387
        %v2543 = vpop.f32.mrb[0].mxu0
        %v2544 = vadd.f32 0.0, %v2543
        %v2545 = vpop.f32.mrb[0].mxu0
        %v2546 = vpop.f32.mrb[0].mxu0
        %v2547 = vadd.f32 0.0, %v2546
        %v2548 = vpop.f32.mrb[0].mxu0
        %2549 = vdwg.mxu0
        %v2550 = vld [vmem:[#allocation3] sm:$0xff]
        %v2551 = vld [vmem:[#allocation3 + $0x8] sm:$0xff]
        %v2552 = vld [vmem:[#allocation3 + $0x10] sm:$0xff]
        %v2553 = vld [vmem:[#allocation3 + $0x18] sm:$0xff]
        %v2554 = vld [vmem:[#allocation3 + $0x20] sm:$0xff]
        %v2555 = vld [vmem:[#allocation3 + $0x28] sm:$0xff]
        %v2556 = vld [vmem:[#allocation3 + $0x30] sm:$0xff]
        %v2557 = vld [vmem:[#allocation3 + $0x38] sm:$0xff]
        %v2558 = vld [vmem:[#allocation3 + $0x40] sm:$0xff]
        %v2559 = vld [vmem:[#allocation3 + $0x48] sm:$0xff]
        %v2560 = vld [vmem:[#allocation3 + $0x50] sm:$0xff]
        %v2561 = vld [vmem:[#allocation3 + $0x58] sm:$0xff]
        %v2562 = vld [vmem:[#allocation3 + $0x60] sm:$0xff]
        %v2563 = vld [vmem:[#allocation3 + $0x68] sm:$0xff]
        %v2564 = vld [vmem:[#allocation3 + $0x70] sm:$0xff]
        %v2565 = vld [vmem:[#allocation3 + $0x78] sm:$0xff]
        %v2566 = vld [vmem:[#allocation3 + $0x80] sm:$0xff]
        %v2567 = vld [vmem:[#allocation3 + $0x88] sm:$0xff]
        %v2568 = vld [vmem:[#allocation3 + $0x90] sm:$0xff]
        %v2569 = vld [vmem:[#allocation3 + $0x98] sm:$0xff]
        %v2570 = vld [vmem:[#allocation3 + $0xa0] sm:$0xff]
        %v2571 = vld [vmem:[#allocation3 + $0xa8] sm:$0xff]
        %v2572 = vld [vmem:[#allocation3 + $0xb0] sm:$0xff]
        %v2573 = vld [vmem:[#allocation3 + $0xb8] sm:$0xff]
        %v2574 = vld [vmem:[#allocation3 + $0xc0] sm:$0xff]
        %v2575 = vld [vmem:[#allocation3 + $0xc8] sm:$0xff]
        %v2576 = vld [vmem:[#allocation3 + $0xd0] sm:$0xff]
        %v2577 = vld [vmem:[#allocation3 + $0xd8] sm:$0xff]
        %v2578 = vld [vmem:[#allocation3 + $0xe0] sm:$0xff]
        %v2579 = vld [vmem:[#allocation3 + $0xe8] sm:$0xff]
        %v2580 = vld [vmem:[#allocation3 + $0xf0] sm:$0xff]
        %v2581 = vld [vmem:[#allocation3 + $0xf8] sm:$0xff]
        %v2582 = vadd.f32 %v2550, %v2424
        %v2583 = vadd.f32 %v2551, %v2427
        %v2584 = vadd.f32 %v2552, %v2432
        %v2585 = vadd.f32 %v2553, %v2435
        %v2586 = vadd.f32 %v2554, %v2440
        %v2587 = vadd.f32 %v2555, %v2443
        %v2588 = vadd.f32 %v2556, %v2448
        %v2589 = vadd.f32 %v2557, %v2451
        %v2590 = vadd.f32 %v2558, %v2456
        %v2591 = vadd.f32 %v2559, %v2459
        %v2592 = vadd.f32 %v2560, %v2464
        %v2593 = vadd.f32 %v2561, %v2467
        %v2594 = vadd.f32 %v2562, %v2472
        %v2595 = vadd.f32 %v2563, %v2475
        %v2596 = vadd.f32 %v2564, %v2480
        %v2597 = vadd.f32 %v2565, %v2483
        %v2598 = vadd.f32 %v2566, %v2488
        %v2599 = vadd.f32 %v2567, %v2491
        %v2600 = vadd.f32 %v2568, %v2496
        %v2601 = vadd.f32 %v2569, %v2499
        %v2602 = vadd.f32 %v2570, %v2504
        %v2603 = vadd.f32 %v2571, %v2507
        %v2604 = vadd.f32 %v2572, %v2512
        %v2605 = vadd.f32 %v2573, %v2515
        %v2606 = vadd.f32 %v2574, %v2520
        %v2607 = vadd.f32 %v2575, %v2523
        %v2608 = vadd.f32 %v2576, %v2528
        %v2609 = vadd.f32 %v2577, %v2531
        %v2610 = vadd.f32 %v2578, %v2536
        %v2611 = vadd.f32 %v2579, %v2539
        %v2612 = vadd.f32 %v2580, %v2544
        %v2613 = vadd.f32 %v2581, %v2547
        %v2614 = vld [vmem:[%s4] sm:$0x1]
        %v2616 = vlaneseq
        %v2617 = vshrl.u32 %v2616, 7
        %v2618 = vsub.s32 0, %v2617
        %v2619 = vrot.slane %v2614, %v2618
        %v2621 = vadd.f32 %v2582, %v2619
        %v2622 = vadd.f32 %v2583, %v2619
        %v2623 = vadd.f32 %v2584, %v2619
        %v2624 = vadd.f32 %v2585, %v2619
        %v2625 = vadd.f32 %v2586, %v2619
        %v2626 = vadd.f32 %v2587, %v2619
        %v2627 = vadd.f32 %v2588, %v2619
        %v2628 = vadd.f32 %v2589, %v2619
        %v2629 = vadd.f32 %v2590, %v2619
        %v2630 = vadd.f32 %v2591, %v2619
        %v2631 = vadd.f32 %v2592, %v2619
        %v2632 = vadd.f32 %v2593, %v2619
        %v2633 = vadd.f32 %v2594, %v2619
        %v2634 = vadd.f32 %v2595, %v2619
        %v2635 = vadd.f32 %v2596, %v2619
        %v2636 = vadd.f32 %v2597, %v2619
        %v2637 = vadd.f32 %v2598, %v2619
        %v2638 = vadd.f32 %v2599, %v2619
        %v2639 = vadd.f32 %v2600, %v2619
        %v2640 = vadd.f32 %v2601, %v2619
        %v2641 = vadd.f32 %v2602, %v2619
        %v2642 = vadd.f32 %v2603, %v2619
        %v2643 = vadd.f32 %v2604, %v2619
        %v2644 = vadd.f32 %v2605, %v2619
        %v2645 = vadd.f32 %v2606, %v2619
        %v2646 = vadd.f32 %v2607, %v2619
        %v2647 = vadd.f32 %v2608, %v2619
        %v2648 = vadd.f32 %v2609, %v2619
        %v2649 = vadd.f32 %v2610, %v2619
        %v2650 = vadd.f32 %v2611, %v2619
        %v2651 = vadd.f32 %v2612, %v2619
        %v2652 = vadd.f32 %v2613, %v2619
        %2653 = vst.msk [vmem:[#allocation3] sm:$0xff] %vm256, %v2621
        %2654 = vst.msk [vmem:[#allocation3 + $0x8] sm:$0xff] %vm256, %v2622
        %2655 = vst.msk [vmem:[#allocation3 + $0x10] sm:$0xff] %vm256, %v2623
        %2656 = vst.msk [vmem:[#allocation3 + $0x18] sm:$0xff] %vm256, %v2624
        %2657 = vst.msk [vmem:[#allocation3 + $0x20] sm:$0xff] %vm256, %v2625
        %2658 = vst.msk [vmem:[#allocation3 + $0x28] sm:$0xff] %vm256, %v2626
        %2659 = vst.msk [vmem:[#allocation3 + $0x30] sm:$0xff] %vm256, %v2627
        %2660 = vst.msk [vmem:[#allocation3 + $0x38] sm:$0xff] %vm256, %v2628
        %2661 = vst.msk [vmem:[#allocation3 + $0x40] sm:$0xff] %vm256, %v2629
        %2662 = vst.msk [vmem:[#allocation3 + $0x48] sm:$0xff] %vm256, %v2630
        %2663 = vst.msk [vmem:[#allocation3 + $0x50] sm:$0xff] %vm256, %v2631
        %2664 = vst.msk [vmem:[#allocation3 + $0x58] sm:$0xff] %vm256, %v2632
        %2665 = vst.msk [vmem:[#allocation3 + $0x60] sm:$0xff] %vm256, %v2633
        %2666 = vst.msk [vmem:[#allocation3 + $0x68] sm:$0xff] %vm256, %v2634
        %2667 = vst.msk [vmem:[#allocation3 + $0x70] sm:$0xff] %vm256, %v2635
        %2668 = vst.msk [vmem:[#allocation3 + $0x78] sm:$0xff] %vm256, %v2636
        %2669 = vst.msk [vmem:[#allocation3 + $0x80] sm:$0xff] %vm256, %v2637
        %2670 = vst.msk [vmem:[#allocation3 + $0x88] sm:$0xff] %vm256, %v2638
        %2671 = vst.msk [vmem:[#allocation3 + $0x90] sm:$0xff] %vm256, %v2639
        %2672 = vst.msk [vmem:[#allocation3 + $0x98] sm:$0xff] %vm256, %v2640
        %2673 = vst.msk [vmem:[#allocation3 + $0xa0] sm:$0xff] %vm256, %v2641
        %2674 = vst.msk [vmem:[#allocation3 + $0xa8] sm:$0xff] %vm256, %v2642
        %2675 = vst.msk [vmem:[#allocation3 + $0xb0] sm:$0xff] %vm256, %v2643
        %2676 = vst.msk [vmem:[#allocation3 + $0xb8] sm:$0xff] %vm256, %v2644
        %2677 = vst.msk [vmem:[#allocation3 + $0xc0] sm:$0xff] %vm256, %v2645
        %2678 = vst.msk [vmem:[#allocation3 + $0xc8] sm:$0xff] %vm256, %v2646
        %2679 = vst.msk [vmem:[#allocation3 + $0xd0] sm:$0xff] %vm256, %v2647
        %2680 = vst.msk [vmem:[#allocation3 + $0xd8] sm:$0xff] %vm256, %v2648
        %2681 = vst.msk [vmem:[#allocation3 + $0xe0] sm:$0xff] %vm256, %v2649
        %2682 = vst.msk [vmem:[#allocation3 + $0xe8] sm:$0xff] %vm256, %v2650
        %2683 = vst.msk [vmem:[#allocation3 + $0xf0] sm:$0xff] %vm256, %v2651
        %2684 = vst.msk [vmem:[#allocation3 + $0xf8] sm:$0xff] %vm256, %v2652
        %v2685 = vld [vmem:[#allocation3] sm:$0xff]
        %v2686 = vld [vmem:[#allocation3 + $0x8] sm:$0xff]
        %v2687 = vld [vmem:[#allocation3 + $0x10] sm:$0xff]
        %v2688 = vld [vmem:[#allocation3 + $0x18] sm:$0xff]
        %v2689 = vld [vmem:[#allocation3 + $0x20] sm:$0xff]
        %v2690 = vld [vmem:[#allocation3 + $0x28] sm:$0xff]
        %v2691 = vld [vmem:[#allocation3 + $0x30] sm:$0xff]
        %v2692 = vld [vmem:[#allocation3 + $0x38] sm:$0xff]
        %v2693 = vld [vmem:[#allocation3 + $0x40] sm:$0xff]
        %v2694 = vld [vmem:[#allocation3 + $0x48] sm:$0xff]
        %v2695 = vld [vmem:[#allocation3 + $0x50] sm:$0xff]
        %v2696 = vld [vmem:[#allocation3 + $0x58] sm:$0xff]
        %v2697 = vld [vmem:[#allocation3 + $0x60] sm:$0xff]
        %v2698 = vld [vmem:[#allocation3 + $0x68] sm:$0xff]
        %v2699 = vld [vmem:[#allocation3 + $0x70] sm:$0xff]
        %v2700 = vld [vmem:[#allocation3 + $0x78] sm:$0xff]
        %v2701 = vld [vmem:[#allocation3 + $0x80] sm:$0xff]
        %v2702 = vld [vmem:[#allocation3 + $0x88] sm:$0xff]
        %v2703 = vld [vmem:[#allocation3 + $0x90] sm:$0xff]
        %v2704 = vld [vmem:[#allocation3 + $0x98] sm:$0xff]
        %v2705 = vld [vmem:[#allocation3 + $0xa0] sm:$0xff]
        %v2706 = vld [vmem:[#allocation3 + $0xa8] sm:$0xff]
        %v2707 = vld [vmem:[#allocation3 + $0xb0] sm:$0xff]
        %v2708 = vld [vmem:[#allocation3 + $0xb8] sm:$0xff]
        %v2709 = vld [vmem:[#allocation3 + $0xc0] sm:$0xff]
        %v2710 = vld [vmem:[#allocation3 + $0xc8] sm:$0xff]
        %v2711 = vld [vmem:[#allocation3 + $0xd0] sm:$0xff]
        %v2712 = vld [vmem:[#allocation3 + $0xd8] sm:$0xff]
        %v2713 = vld [vmem:[#allocation3 + $0xe0] sm:$0xff]
        %v2714 = vld [vmem:[#allocation3 + $0xe8] sm:$0xff]
        %v2715 = vld [vmem:[#allocation3 + $0xf0] sm:$0xff]
        %v2716 = vld [vmem:[#allocation3 + $0xf8] sm:$0xff]
        %v2717 = vmax.f32 %v2685, 0.0
        %v2718 = vmax.f32 %v2686, 0.0
        %v2719 = vmax.f32 %v2687, 0.0
        %v2720 = vmax.f32 %v2688, 0.0
        %v2721 = vmax.f32 %v2689, 0.0
        %v2722 = vmax.f32 %v2690, 0.0
        %v2723 = vmax.f32 %v2691, 0.0
        %v2724 = vmax.f32 %v2692, 0.0
        %v2725 = vmax.f32 %v2693, 0.0
        %v2726 = vmax.f32 %v2694, 0.0
        %v2727 = vmax.f32 %v2695, 0.0
        %v2728 = vmax.f32 %v2696, 0.0
        %v2729 = vmax.f32 %v2697, 0.0
        %v2730 = vmax.f32 %v2698, 0.0
        %v2731 = vmax.f32 %v2699, 0.0
        %v2732 = vmax.f32 %v2700, 0.0
        %v2733 = vmax.f32 %v2701, 0.0
        %v2734 = vmax.f32 %v2702, 0.0
        %v2735 = vmax.f32 %v2703, 0.0
        %v2736 = vmax.f32 %v2704, 0.0
        %v2737 = vmax.f32 %v2705, 0.0
        %v2738 = vmax.f32 %v2706, 0.0
        %v2739 = vmax.f32 %v2707, 0.0
        %v2740 = vmax.f32 %v2708, 0.0
        %v2741 = vmax.f32 %v2709, 0.0
        %v2742 = vmax.f32 %v2710, 0.0
        %v2743 = vmax.f32 %v2711, 0.0
        %v2744 = vmax.f32 %v2712, 0.0
        %v2745 = vmax.f32 %v2713, 0.0
        %v2746 = vmax.f32 %v2714, 0.0
        %v2747 = vmax.f32 %v2715, 0.0
        %v2748 = vmax.f32 %v2716, 0.0
        %2749 = vst.msk [vmem:[%s408 + $0x1] sm:$0xff] %vm256, %v2717
        %2750 = vst.msk [vmem:[%s408 + $0x9] sm:$0xff] %vm256, %v2718
        %2751 = vst.msk [vmem:[%s408 + $0x19] sm:$0xff] %vm256, %v2719
        %2752 = vst.msk [vmem:[%s408 + $0x21] sm:$0xff] %vm256, %v2720
        %2753 = vst.msk [vmem:[%s408 + $0x31] sm:$0xff] %vm256, %v2721
        %2754 = vst.msk [vmem:[%s408 + $0x39] sm:$0xff] %vm256, %v2722
        %2755 = vst.msk [vmem:[%s408 + $0x49] sm:$0xff] %vm256, %v2723
        %2756 = vst.msk [vmem:[%s408 + $0x51] sm:$0xff] %vm256, %v2724
        %2757 = vst.msk [vmem:[%s408 + $0x61] sm:$0xff] %vm256, %v2725
        %2758 = vst.msk [vmem:[%s408 + $0x69] sm:$0xff] %vm256, %v2726
        %2759 = vst.msk [vmem:[%s408 + $0x79] sm:$0xff] %vm256, %v2727
        %2760 = vst.msk [vmem:[%s408 + $0x81] sm:$0xff] %vm256, %v2728
        %2761 = vst.msk [vmem:[%s408 + $0x91] sm:$0xff] %vm256, %v2729
        %2762 = vst.msk [vmem:[%s408 + $0x99] sm:$0xff] %vm256, %v2730
        %2763 = vst.msk [vmem:[%s408 + $0xa9] sm:$0xff] %vm256, %v2731
        %2764 = vst.msk [vmem:[%s408 + $0xb1] sm:$0xff] %vm256, %v2732
        %2765 = vst.msk [vmem:[%s408 + $0xc1] sm:$0xff] %vm256, %v2733
        %2766 = vst.msk [vmem:[%s408 + $0xc9] sm:$0xff] %vm256, %v2734
        %2767 = vst.msk [vmem:[%s408 + $0xd9] sm:$0xff] %vm256, %v2735
        %2768 = vst.msk [vmem:[%s408 + $0xe1] sm:$0xff] %vm256, %v2736
        %2769 = vst.msk [vmem:[%s408 + $0xf1] sm:$0xff] %vm256, %v2737
        %2770 = vst.msk [vmem:[%s408 + $0xf9] sm:$0xff] %vm256, %v2738
        %2771 = vst.msk [vmem:[%s408 + $0x109] sm:$0xff] %vm256, %v2739
        %2772 = vst.msk [vmem:[%s408 + $0x111] sm:$0xff] %vm256, %v2740
        %2773 = vst.msk [vmem:[%s408 + $0x121] sm:$0xff] %vm256, %v2741
        %2774 = vst.msk [vmem:[%s408 + $0x129] sm:$0xff] %vm256, %v2742
        %2775 = vst.msk [vmem:[%s408 + $0x139] sm:$0xff] %vm256, %v2743
        %2776 = vst.msk [vmem:[%s408 + $0x141] sm:$0xff] %vm256, %v2744
        %2777 = vst.msk [vmem:[%s408 + $0x151] sm:$0xff] %vm256, %v2745
        %2778 = vst.msk [vmem:[%s408 + $0x159] sm:$0xff] %vm256, %v2746
        %2779 = vst.msk [vmem:[%s408 + $0x169] sm:$0xff] %vm256, %v2747
        %2780 = vst.msk [vmem:[%s408 + $0x171] sm:$0xff] %vm256, %v2748
        %v2781 = vld [vmem:[#allocation2] sm:$0xff]
        %v2782 = vld [vmem:[#allocation2 + $0x8] sm:$0xff]
        %v2783 = vld [vmem:[#allocation2 + $0x18] sm:$0xff]
        %v2784 = vld [vmem:[#allocation2 + $0x20] sm:$0xff]
        %v2785 = vld [vmem:[#allocation2 + $0x30] sm:$0xff]
        %v2786 = vld [vmem:[#allocation2 + $0x38] sm:$0xff]
        %v2787 = vld [vmem:[#allocation2 + $0x48] sm:$0xff]
        %v2788 = vld [vmem:[#allocation2 + $0x50] sm:$0xff]
        %v2789 = vld [vmem:[#allocation2 + $0x60] sm:$0xff]
        %v2790 = vld [vmem:[#allocation2 + $0x68] sm:$0xff]
        %v2791 = vld [vmem:[#allocation2 + $0x78] sm:$0xff]
        %v2792 = vld [vmem:[#allocation2 + $0x80] sm:$0xff]
        %v2793 = vld [vmem:[#allocation2 + $0x90] sm:$0xff]
        %v2794 = vld [vmem:[#allocation2 + $0x98] sm:$0xff]
        %v2795 = vld [vmem:[#allocation2 + $0xa8] sm:$0xff]
        %v2796 = vld [vmem:[#allocation2 + $0xb0] sm:$0xff]
        %v2797 = vld [vmem:[#allocation2 + $0xc0] sm:$0xff]
        %v2798 = vld [vmem:[#allocation2 + $0xc8] sm:$0xff]
        %v2799 = vld [vmem:[#allocation2 + $0xd8] sm:$0xff]
        %v2800 = vld [vmem:[#allocation2 + $0xe0] sm:$0xff]
        %v2801 = vld [vmem:[#allocation2 + $0xf0] sm:$0xff]
        %v2802 = vld [vmem:[#allocation2 + $0xf8] sm:$0xff]
        %v2803 = vld [vmem:[#allocation2 + $0x108] sm:$0xff]
        %v2804 = vld [vmem:[#allocation2 + $0x110] sm:$0xff]
        %v2805 = vld [vmem:[#allocation2 + $0x120] sm:$0xff]
        %v2806 = vld [vmem:[#allocation2 + $0x128] sm:$0xff]
        %v2807 = vld [vmem:[#allocation2 + $0x138] sm:$0xff]
        %v2808 = vld [vmem:[#allocation2 + $0x140] sm:$0xff]
        %v2809 = vld [vmem:[#allocation2 + $0x150] sm:$0xff]
        %v2810 = vld [vmem:[#allocation2 + $0x158] sm:$0xff]
        %v2811 = vld [vmem:[#allocation2 + $0x168] sm:$0xff]
        %v2812 = vld [vmem:[#allocation2 + $0x170] sm:$0xff]
        %v2813 = vld [vmem:[#allocation2 + $0x1] sm:$0xff]
        %v2814 = vld [vmem:[#allocation2 + $0x9] sm:$0xff]
        %v2815 = vld [vmem:[#allocation2 + $0x19] sm:$0xff]
        %v2816 = vld [vmem:[#allocation2 + $0x21] sm:$0xff]
        %v2817 = vld [vmem:[#allocation2 + $0x31] sm:$0xff]
        %v2818 = vld [vmem:[#allocation2 + $0x39] sm:$0xff]
        %v2819 = vld [vmem:[#allocation2 + $0x49] sm:$0xff]
        %v2820 = vld [vmem:[#allocation2 + $0x51] sm:$0xff]
        %v2821 = vld [vmem:[#allocation2 + $0x61] sm:$0xff]
        %v2822 = vld [vmem:[#allocation2 + $0x69] sm:$0xff]
        %v2823 = vld [vmem:[#allocation2 + $0x79] sm:$0xff]
        %v2824 = vld [vmem:[#allocation2 + $0x81] sm:$0xff]
        %v2825 = vld [vmem:[#allocation2 + $0x91] sm:$0xff]
        %v2826 = vld [vmem:[#allocation2 + $0x99] sm:$0xff]
        %v2827 = vld [vmem:[#allocation2 + $0xa9] sm:$0xff]
        %v2828 = vld [vmem:[#allocation2 + $0xb1] sm:$0xff]
        %v2829 = vld [vmem:[#allocation2 + $0xc1] sm:$0xff]
        %v2830 = vld [vmem:[#allocation2 + $0xc9] sm:$0xff]
        %v2831 = vld [vmem:[#allocation2 + $0xd9] sm:$0xff]
        %v2832 = vld [vmem:[#allocation2 + $0xe1] sm:$0xff]
        %v2833 = vld [vmem:[#allocation2 + $0xf1] sm:$0xff]
        %v2834 = vld [vmem:[#allocation2 + $0xf9] sm:$0xff]
        %v2835 = vld [vmem:[#allocation2 + $0x109] sm:$0xff]
        %v2836 = vld [vmem:[#allocation2 + $0x111] sm:$0xff]
        %v2837 = vld [vmem:[#allocation2 + $0x121] sm:$0xff]
        %v2838 = vld [vmem:[#allocation2 + $0x129] sm:$0xff]
        %v2839 = vld [vmem:[#allocation2 + $0x139] sm:$0xff]
        %v2840 = vld [vmem:[#allocation2 + $0x141] sm:$0xff]
        %v2841 = vld [vmem:[#allocation2 + $0x151] sm:$0xff]
        %v2842 = vld [vmem:[#allocation2 + $0x159] sm:$0xff]
        %v2843 = vld [vmem:[#allocation2 + $0x169] sm:$0xff]
        %v2844 = vld [vmem:[#allocation2 + $0x171] sm:$0xff]
        %v2845 = vld [vmem:[#allocation2 + $0x2] sm:$0xff]
        %v2846 = vld [vmem:[#allocation2 + $0xa] sm:$0xff]
        %v2847 = vld [vmem:[#allocation2 + $0x1a] sm:$0xff]
        %v2848 = vld [vmem:[#allocation2 + $0x22] sm:$0xff]
        %v2849 = vld [vmem:[#allocation2 + $0x32] sm:$0xff]
        %v2850 = vld [vmem:[#allocation2 + $0x3a] sm:$0xff]
        %v2851 = vld [vmem:[#allocation2 + $0x4a] sm:$0xff]
        %v2852 = vld [vmem:[#allocation2 + $0x52] sm:$0xff]
        %v2853 = vld [vmem:[#allocation2 + $0x62] sm:$0xff]
        %v2854 = vld [vmem:[#allocation2 + $0x6a] sm:$0xff]
        %v2855 = vld [vmem:[#allocation2 + $0x7a] sm:$0xff]
        %v2856 = vld [vmem:[#allocation2 + $0x82] sm:$0xff]
        %v2857 = vld [vmem:[#allocation2 + $0x92] sm:$0xff]
        %v2858 = vld [vmem:[#allocation2 + $0x9a] sm:$0xff]
        %v2859 = vld [vmem:[#allocation2 + $0xaa] sm:$0xff]
        %v2860 = vld [vmem:[#allocation2 + $0xb2] sm:$0xff]
        %v2861 = vld [vmem:[#allocation2 + $0xc2] sm:$0xff]
        %v2862 = vld [vmem:[#allocation2 + $0xca] sm:$0xff]
        %v2863 = vld [vmem:[#allocation2 + $0xda] sm:$0xff]
        %v2864 = vld [vmem:[#allocation2 + $0xe2] sm:$0xff]
        %v2865 = vld [vmem:[#allocation2 + $0xf2] sm:$0xff]
        %v2866 = vld [vmem:[#allocation2 + $0xfa] sm:$0xff]
        %v2867 = vld [vmem:[#allocation2 + $0x10a] sm:$0xff]
        %v2868 = vld [vmem:[#allocation2 + $0x112] sm:$0xff]
        %v2869 = vld [vmem:[#allocation2 + $0x122] sm:$0xff]
        %v2870 = vld [vmem:[#allocation2 + $0x12a] sm:$0xff]
        %v2871 = vld [vmem:[#allocation2 + $0x13a] sm:$0xff]
        %v2872 = vld [vmem:[#allocation2 + $0x142] sm:$0xff]
        %v2873 = vld [vmem:[#allocation2 + $0x152] sm:$0xff]
        %v2874 = vld [vmem:[#allocation2 + $0x15a] sm:$0xff]
        %v2875 = vld [vmem:[#allocation2 + $0x16a] sm:$0xff]
        %v2876 = vld [vmem:[#allocation2 + $0x172] sm:$0xff]
        %v2877 = vld [vmem:[%s408] sm:$0xff]
        %v2878 = vld [vmem:[%s408 + $0x8] sm:$0xff]
        %v2879 = vld [vmem:[%s408 + $0x18] sm:$0xff]
        %v2880 = vld [vmem:[%s408 + $0x20] sm:$0xff]
        %v2881 = vld [vmem:[%s408 + $0x30] sm:$0xff]
        %v2882 = vld [vmem:[%s408 + $0x38] sm:$0xff]
        %v2883 = vld [vmem:[%s408 + $0x48] sm:$0xff]
        %v2884 = vld [vmem:[%s408 + $0x50] sm:$0xff]
        %v2885 = vld [vmem:[%s408 + $0x60] sm:$0xff]
        %v2886 = vld [vmem:[%s408 + $0x68] sm:$0xff]
        %v2887 = vld [vmem:[%s408 + $0x78] sm:$0xff]
        %v2888 = vld [vmem:[%s408 + $0x80] sm:$0xff]
        %v2889 = vld [vmem:[%s408 + $0x90] sm:$0xff]
        %v2890 = vld [vmem:[%s408 + $0x98] sm:$0xff]
        %v2891 = vld [vmem:[%s408 + $0xa8] sm:$0xff]
        %v2892 = vld [vmem:[%s408 + $0xb0] sm:$0xff]
        %v2893 = vld [vmem:[%s408 + $0xc0] sm:$0xff]
        %v2894 = vld [vmem:[%s408 + $0xc8] sm:$0xff]
        %v2895 = vld [vmem:[%s408 + $0xd8] sm:$0xff]
        %v2896 = vld [vmem:[%s408 + $0xe0] sm:$0xff]
        %v2897 = vld [vmem:[%s408 + $0xf0] sm:$0xff]
        %v2898 = vld [vmem:[%s408 + $0xf8] sm:$0xff]
        %v2899 = vld [vmem:[%s408 + $0x108] sm:$0xff]
        %v2900 = vld [vmem:[%s408 + $0x110] sm:$0xff]
        %v2901 = vld [vmem:[%s408 + $0x120] sm:$0xff]
        %v2902 = vld [vmem:[%s408 + $0x128] sm:$0xff]
        %v2903 = vld [vmem:[%s408 + $0x138] sm:$0xff]
        %v2904 = vld [vmem:[%s408 + $0x140] sm:$0xff]
        %v2905 = vld [vmem:[%s408 + $0x150] sm:$0xff]
        %v2906 = vld [vmem:[%s408 + $0x158] sm:$0xff]
        %v2907 = vld [vmem:[%s408 + $0x168] sm:$0xff]
        %v2908 = vld [vmem:[%s408 + $0x170] sm:$0xff]
        %v2909 = vld [vmem:[%s408 + $0x1] sm:$0xff]
        %v2910 = vld [vmem:[%s408 + $0x9] sm:$0xff]
        %v2911 = vld [vmem:[%s408 + $0x19] sm:$0xff]
        %v2912 = vld [vmem:[%s408 + $0x21] sm:$0xff]
        %v2913 = vld [vmem:[%s408 + $0x31] sm:$0xff]
        %v2914 = vld [vmem:[%s408 + $0x39] sm:$0xff]
        %v2915 = vld [vmem:[%s408 + $0x49] sm:$0xff]
        %v2916 = vld [vmem:[%s408 + $0x51] sm:$0xff]
        %v2917 = vld [vmem:[%s408 + $0x61] sm:$0xff]
        %v2918 = vld [vmem:[%s408 + $0x69] sm:$0xff]
        %v2919 = vld [vmem:[%s408 + $0x79] sm:$0xff]
        %v2920 = vld [vmem:[%s408 + $0x81] sm:$0xff]
        %v2921 = vld [vmem:[%s408 + $0x91] sm:$0xff]
        %v2922 = vld [vmem:[%s408 + $0x99] sm:$0xff]
        %v2923 = vld [vmem:[%s408 + $0xa9] sm:$0xff]
        %v2924 = vld [vmem:[%s408 + $0xb1] sm:$0xff]
        %v2925 = vld [vmem:[%s408 + $0xc1] sm:$0xff]
        %v2926 = vld [vmem:[%s408 + $0xc9] sm:$0xff]
        %v2927 = vld [vmem:[%s408 + $0xd9] sm:$0xff]
        %v2928 = vld [vmem:[%s408 + $0xe1] sm:$0xff]
        %v2929 = vld [vmem:[%s408 + $0xf1] sm:$0xff]
        %v2930 = vld [vmem:[%s408 + $0xf9] sm:$0xff]
        %v2931 = vld [vmem:[%s408 + $0x109] sm:$0xff]
        %v2932 = vld [vmem:[%s408 + $0x111] sm:$0xff]
        %v2933 = vld [vmem:[%s408 + $0x121] sm:$0xff]
        %v2934 = vld [vmem:[%s408 + $0x129] sm:$0xff]
        %v2935 = vld [vmem:[%s408 + $0x139] sm:$0xff]
        %v2936 = vld [vmem:[%s408 + $0x141] sm:$0xff]
        %v2937 = vld [vmem:[%s408 + $0x151] sm:$0xff]
        %v2938 = vld [vmem:[%s408 + $0x159] sm:$0xff]
        %v2939 = vld [vmem:[%s408 + $0x169] sm:$0xff]
        %v2940 = vld [vmem:[%s408 + $0x171] sm:$0xff]
        %v2941 = vld [vmem:[%s408 + $0x2] sm:$0xff]
        %v2942 = vld [vmem:[%s408 + $0xa] sm:$0xff]
        %v2943 = vld [vmem:[%s408 + $0x1a] sm:$0xff]
        %v2944 = vld [vmem:[%s408 + $0x22] sm:$0xff]
        %v2945 = vld [vmem:[%s408 + $0x32] sm:$0xff]
        %v2946 = vld [vmem:[%s408 + $0x3a] sm:$0xff]
        %v2947 = vld [vmem:[%s408 + $0x4a] sm:$0xff]
        %v2948 = vld [vmem:[%s408 + $0x52] sm:$0xff]
        %v2949 = vld [vmem:[%s408 + $0x62] sm:$0xff]
        %v2950 = vld [vmem:[%s408 + $0x6a] sm:$0xff]
        %v2951 = vld [vmem:[%s408 + $0x7a] sm:$0xff]
        %v2952 = vld [vmem:[%s408 + $0x82] sm:$0xff]
        %v2953 = vld [vmem:[%s408 + $0x92] sm:$0xff]
        %v2954 = vld [vmem:[%s408 + $0x9a] sm:$0xff]
        %v2955 = vld [vmem:[%s408 + $0xaa] sm:$0xff]
        %v2956 = vld [vmem:[%s408 + $0xb2] sm:$0xff]
        %v2957 = vld [vmem:[%s408 + $0xc2] sm:$0xff]
        %v2958 = vld [vmem:[%s408 + $0xca] sm:$0xff]
        %v2959 = vld [vmem:[%s408 + $0xda] sm:$0xff]
        %v2960 = vld [vmem:[%s408 + $0xe2] sm:$0xff]
        %v2961 = vld [vmem:[%s408 + $0xf2] sm:$0xff]
        %v2962 = vld [vmem:[%s408 + $0xfa] sm:$0xff]
        %v2963 = vld [vmem:[%s408 + $0x10a] sm:$0xff]
        %v2964 = vld [vmem:[%s408 + $0x112] sm:$0xff]
        %v2965 = vld [vmem:[%s408 + $0x122] sm:$0xff]
        %v2966 = vld [vmem:[%s408 + $0x12a] sm:$0xff]
        %v2967 = vld [vmem:[%s408 + $0x13a] sm:$0xff]
        %v2968 = vld [vmem:[%s408 + $0x142] sm:$0xff]
        %v2969 = vld [vmem:[%s408 + $0x152] sm:$0xff]
        %v2970 = vld [vmem:[%s408 + $0x15a] sm:$0xff]
        %v2971 = vld [vmem:[%s408 + $0x16a] sm:$0xff]
        %v2972 = vld [vmem:[%s408 + $0x172] sm:$0xff]
        %v2973 = vld [vmem:[%s633] sm:$0xff]
        %v2974 = vld [vmem:[%s633 + $0x8] sm:$0xff]
        %v2975 = vld [vmem:[%s633 + $0x18] sm:$0xff]
        %v2976 = vld [vmem:[%s633 + $0x20] sm:$0xff]
        %v2977 = vld [vmem:[%s633 + $0x30] sm:$0xff]
        %v2978 = vld [vmem:[%s633 + $0x38] sm:$0xff]
        %v2979 = vld [vmem:[%s633 + $0x48] sm:$0xff]
        %v2980 = vld [vmem:[%s633 + $0x50] sm:$0xff]
        %v2981 = vld [vmem:[%s633 + $0x60] sm:$0xff]
        %v2982 = vld [vmem:[%s633 + $0x68] sm:$0xff]
        %v2983 = vld [vmem:[%s633 + $0x78] sm:$0xff]
        %v2984 = vld [vmem:[%s633 + $0x80] sm:$0xff]
        %v2985 = vld [vmem:[%s633 + $0x90] sm:$0xff]
        %v2986 = vld [vmem:[%s633 + $0x98] sm:$0xff]
        %v2987 = vld [vmem:[%s633 + $0xa8] sm:$0xff]
        %v2988 = vld [vmem:[%s633 + $0xb0] sm:$0xff]
        %v2989 = vld [vmem:[%s633 + $0xc0] sm:$0xff]
        %v2990 = vld [vmem:[%s633 + $0xc8] sm:$0xff]
        %v2991 = vld [vmem:[%s633 + $0xd8] sm:$0xff]
        %v2992 = vld [vmem:[%s633 + $0xe0] sm:$0xff]
        %v2993 = vld [vmem:[%s633 + $0xf0] sm:$0xff]
        %v2994 = vld [vmem:[%s633 + $0xf8] sm:$0xff]
        %v2995 = vld [vmem:[%s633 + $0x108] sm:$0xff]
        %v2996 = vld [vmem:[%s633 + $0x110] sm:$0xff]
        %v2997 = vld [vmem:[%s633 + $0x120] sm:$0xff]
        %v2998 = vld [vmem:[%s633 + $0x128] sm:$0xff]
        %v2999 = vld [vmem:[%s633 + $0x138] sm:$0xff]
        %v3000 = vld [vmem:[%s633 + $0x140] sm:$0xff]
        %v3001 = vld [vmem:[%s633 + $0x150] sm:$0xff]
        %v3002 = vld [vmem:[%s633 + $0x158] sm:$0xff]
        %v3003 = vld [vmem:[%s633 + $0x168] sm:$0xff]
        %v3004 = vld [vmem:[%s633 + $0x170] sm:$0xff]
        %v3005 = vld [vmem:[%s633 + $0x1] sm:$0xff]
        %v3006 = vld [vmem:[%s633 + $0x9] sm:$0xff]
        %v3007 = vld [vmem:[%s633 + $0x19] sm:$0xff]
        %v3008 = vld [vmem:[%s633 + $0x21] sm:$0xff]
        %v3009 = vld [vmem:[%s633 + $0x31] sm:$0xff]
        %v3010 = vld [vmem:[%s633 + $0x39] sm:$0xff]
        %v3011 = vld [vmem:[%s633 + $0x49] sm:$0xff]
        %v3012 = vld [vmem:[%s633 + $0x51] sm:$0xff]
        %v3013 = vld [vmem:[%s633 + $0x61] sm:$0xff]
        %v3014 = vld [vmem:[%s633 + $0x69] sm:$0xff]
        %v3015 = vld [vmem:[%s633 + $0x79] sm:$0xff]
        %v3016 = vld [vmem:[%s633 + $0x81] sm:$0xff]
        %v3017 = vld [vmem:[%s633 + $0x91] sm:$0xff]
        %v3018 = vld [vmem:[%s633 + $0x99] sm:$0xff]
        %v3019 = vld [vmem:[%s633 + $0xa9] sm:$0xff]
        %v3020 = vld [vmem:[%s633 + $0xb1] sm:$0xff]
        %v3021 = vld [vmem:[%s633 + $0xc1] sm:$0xff]
        %v3022 = vld [vmem:[%s633 + $0xc9] sm:$0xff]
        %v3023 = vld [vmem:[%s633 + $0xd9] sm:$0xff]
        %v3024 = vld [vmem:[%s633 + $0xe1] sm:$0xff]
        %v3025 = vld [vmem:[%s633 + $0xf1] sm:$0xff]
        %v3026 = vld [vmem:[%s633 + $0xf9] sm:$0xff]
        %v3027 = vld [vmem:[%s633 + $0x109] sm:$0xff]
        %v3028 = vld [vmem:[%s633 + $0x111] sm:$0xff]
        %v3029 = vld [vmem:[%s633 + $0x121] sm:$0xff]
        %v3030 = vld [vmem:[%s633 + $0x129] sm:$0xff]
        %v3031 = vld [vmem:[%s633 + $0x139] sm:$0xff]
        %v3032 = vld [vmem:[%s633 + $0x141] sm:$0xff]
        %v3033 = vld [vmem:[%s633 + $0x151] sm:$0xff]
        %v3034 = vld [vmem:[%s633 + $0x159] sm:$0xff]
        %v3035 = vld [vmem:[%s633 + $0x169] sm:$0xff]
        %v3036 = vld [vmem:[%s633 + $0x171] sm:$0xff]
        %v3037 = vld [vmem:[%s633 + $0x2] sm:$0xff]
        %v3038 = vld [vmem:[%s633 + $0xa] sm:$0xff]
        %v3039 = vld [vmem:[%s633 + $0x1a] sm:$0xff]
        %v3040 = vld [vmem:[%s633 + $0x22] sm:$0xff]
        %v3041 = vld [vmem:[%s633 + $0x32] sm:$0xff]
        %v3042 = vld [vmem:[%s633 + $0x3a] sm:$0xff]
        %v3043 = vld [vmem:[%s633 + $0x4a] sm:$0xff]
        %v3044 = vld [vmem:[%s633 + $0x52] sm:$0xff]
        %v3045 = vld [vmem:[%s633 + $0x62] sm:$0xff]
        %v3046 = vld [vmem:[%s633 + $0x6a] sm:$0xff]
        %v3047 = vld [vmem:[%s633 + $0x7a] sm:$0xff]
        %v3048 = vld [vmem:[%s633 + $0x82] sm:$0xff]
        %v3049 = vld [vmem:[%s633 + $0x92] sm:$0xff]
        %v3050 = vld [vmem:[%s633 + $0x9a] sm:$0xff]
        %v3051 = vld [vmem:[%s633 + $0xaa] sm:$0xff]
        %v3052 = vld [vmem:[%s633 + $0xb2] sm:$0xff]
        %v3053 = vld [vmem:[%s633 + $0xc2] sm:$0xff]
        %v3054 = vld [vmem:[%s633 + $0xca] sm:$0xff]
        %v3055 = vld [vmem:[%s633 + $0xda] sm:$0xff]
        %v3056 = vld [vmem:[%s633 + $0xe2] sm:$0xff]
        %v3057 = vld [vmem:[%s633 + $0xf2] sm:$0xff]
        %v3058 = vld [vmem:[%s633 + $0xfa] sm:$0xff]
        %v3059 = vld [vmem:[%s633 + $0x10a] sm:$0xff]
        %v3060 = vld [vmem:[%s633 + $0x112] sm:$0xff]
        %v3061 = vld [vmem:[%s633 + $0x122] sm:$0xff]
        %v3062 = vld [vmem:[%s633 + $0x12a] sm:$0xff]
        %v3063 = vld [vmem:[%s633 + $0x13a] sm:$0xff]
        %v3064 = vld [vmem:[%s633 + $0x142] sm:$0xff]
        %v3065 = vld [vmem:[%s633 + $0x152] sm:$0xff]
        %v3066 = vld [vmem:[%s633 + $0x15a] sm:$0xff]
        %v3067 = vld [vmem:[%s633 + $0x16a] sm:$0xff]
        %v3068 = vld [vmem:[%s633 + $0x172] sm:$0xff]
        %3101 = vrot.lane.b32.xlu0 %v2813, 32
        %v3102 = vpop.permute.xlu0 %3101
        %3103 = vrot.lane.b32.xlu0 %v2814, 32
        %v3104 = vpop.permute.xlu0 %3103
        %3105 = vrot.lane.b32.xlu0 %v2815, 32
        %v3106 = vpop.permute.xlu0 %3105
        %3107 = vrot.lane.b32.xlu0 %v2816, 32
        %v3108 = vpop.permute.xlu0 %3107
        %3109 = vrot.lane.b32.xlu0 %v2817, 32
        %v3110 = vpop.permute.xlu0 %3109
        %3111 = vrot.lane.b32.xlu0 %v2818, 32
        %v3112 = vpop.permute.xlu0 %3111
        %3113 = vrot.lane.b32.xlu0 %v2819, 32
        %v3114 = vpop.permute.xlu0 %3113
        %3115 = vrot.lane.b32.xlu0 %v2820, 32
        %v3116 = vpop.permute.xlu0 %3115
        %3117 = vrot.lane.b32.xlu0 %v2821, 32
        %v3118 = vpop.permute.xlu0 %3117
        %3119 = vrot.lane.b32.xlu0 %v2822, 32
        %v3120 = vpop.permute.xlu0 %3119
        %3121 = vrot.lane.b32.xlu0 %v2823, 32
        %v3122 = vpop.permute.xlu0 %3121
        %3123 = vrot.lane.b32.xlu0 %v2824, 32
        %v3124 = vpop.permute.xlu0 %3123
        %3125 = vrot.lane.b32.xlu0 %v2825, 32
        %v3126 = vpop.permute.xlu0 %3125
        %3127 = vrot.lane.b32.xlu0 %v2826, 32
        %v3128 = vpop.permute.xlu0 %3127
        %3129 = vrot.lane.b32.xlu0 %v2827, 32
        %v3130 = vpop.permute.xlu0 %3129
        %3131 = vrot.lane.b32.xlu0 %v2828, 32
        %v3132 = vpop.permute.xlu0 %3131
        %3133 = vrot.lane.b32.xlu0 %v2829, 32
        %v3134 = vpop.permute.xlu0 %3133
        %3135 = vrot.lane.b32.xlu0 %v2830, 32
        %v3136 = vpop.permute.xlu0 %3135
        %3137 = vrot.lane.b32.xlu0 %v2831, 32
        %v3138 = vpop.permute.xlu0 %3137
        %3139 = vrot.lane.b32.xlu0 %v2832, 32
        %v3140 = vpop.permute.xlu0 %3139
        %3141 = vrot.lane.b32.xlu0 %v2833, 32
        %v3142 = vpop.permute.xlu0 %3141
        %3143 = vrot.lane.b32.xlu0 %v2834, 32
        %v3144 = vpop.permute.xlu0 %3143
        %3145 = vrot.lane.b32.xlu0 %v2835, 32
        %v3146 = vpop.permute.xlu0 %3145
        %3147 = vrot.lane.b32.xlu0 %v2836, 32
        %v3148 = vpop.permute.xlu0 %3147
        %3149 = vrot.lane.b32.xlu0 %v2837, 32
        %v3150 = vpop.permute.xlu0 %3149
        %3151 = vrot.lane.b32.xlu0 %v2838, 32
        %v3152 = vpop.permute.xlu0 %3151
        %3153 = vrot.lane.b32.xlu0 %v2839, 32
        %v3154 = vpop.permute.xlu0 %3153
        %3155 = vrot.lane.b32.xlu0 %v2840, 32
        %v3156 = vpop.permute.xlu0 %3155
        %3157 = vrot.lane.b32.xlu0 %v2841, 32
        %v3158 = vpop.permute.xlu0 %3157
        %3159 = vrot.lane.b32.xlu0 %v2842, 32
        %v3160 = vpop.permute.xlu0 %3159
        %3161 = vrot.lane.b32.xlu0 %v2843, 32
        %v3162 = vpop.permute.xlu0 %3161
        %3163 = vrot.lane.b32.xlu0 %v2844, 32
        %v3164 = vpop.permute.xlu0 %3163
        %3229 = vrot.lane.b32.xlu0 %v2845, 64
        %v3230 = vpop.permute.xlu0 %3229
        %3231 = vrot.lane.b32.xlu0 %v2846, 64
        %v3232 = vpop.permute.xlu0 %3231
        %3233 = vrot.lane.b32.xlu0 %v2847, 64
        %v3234 = vpop.permute.xlu0 %3233
        %3235 = vrot.lane.b32.xlu0 %v2848, 64
        %v3236 = vpop.permute.xlu0 %3235
        %3237 = vrot.lane.b32.xlu0 %v2849, 64
        %v3238 = vpop.permute.xlu0 %3237
        %3239 = vrot.lane.b32.xlu0 %v2850, 64
        %v3240 = vpop.permute.xlu0 %3239
        %3241 = vrot.lane.b32.xlu0 %v2851, 64
        %v3242 = vpop.permute.xlu0 %3241
        %3243 = vrot.lane.b32.xlu0 %v2852, 64
        %v3244 = vpop.permute.xlu0 %3243
        %3245 = vrot.lane.b32.xlu0 %v2853, 64
        %v3246 = vpop.permute.xlu0 %3245
        %3247 = vrot.lane.b32.xlu0 %v2854, 64
        %v3248 = vpop.permute.xlu0 %3247
        %3249 = vrot.lane.b32.xlu0 %v2855, 64
        %v3250 = vpop.permute.xlu0 %3249
        %3251 = vrot.lane.b32.xlu0 %v2856, 64
        %v3252 = vpop.permute.xlu0 %3251
        %3253 = vrot.lane.b32.xlu0 %v2857, 64
        %v3254 = vpop.permute.xlu0 %3253
        %3255 = vrot.lane.b32.xlu0 %v2858, 64
        %v3256 = vpop.permute.xlu0 %3255
        %3257 = vrot.lane.b32.xlu0 %v2859, 64
        %v3258 = vpop.permute.xlu0 %3257
        %3259 = vrot.lane.b32.xlu0 %v2860, 64
        %v3260 = vpop.permute.xlu0 %3259
        %3261 = vrot.lane.b32.xlu0 %v2861, 64
        %v3262 = vpop.permute.xlu0 %3261
        %3263 = vrot.lane.b32.xlu0 %v2862, 64
        %v3264 = vpop.permute.xlu0 %3263
        %3265 = vrot.lane.b32.xlu0 %v2863, 64
        %v3266 = vpop.permute.xlu0 %3265
        %3267 = vrot.lane.b32.xlu0 %v2864, 64
        %v3268 = vpop.permute.xlu0 %3267
        %3269 = vrot.lane.b32.xlu0 %v2865, 64
        %v3270 = vpop.permute.xlu0 %3269
        %3271 = vrot.lane.b32.xlu0 %v2866, 64
        %v3272 = vpop.permute.xlu0 %3271
        %3273 = vrot.lane.b32.xlu0 %v2867, 64
        %v3274 = vpop.permute.xlu0 %3273
        %3275 = vrot.lane.b32.xlu0 %v2868, 64
        %v3276 = vpop.permute.xlu0 %3275
        %3277 = vrot.lane.b32.xlu0 %v2869, 64
        %v3278 = vpop.permute.xlu0 %3277
        %3279 = vrot.lane.b32.xlu0 %v2870, 64
        %v3280 = vpop.permute.xlu0 %3279
        %3281 = vrot.lane.b32.xlu0 %v2871, 64
        %v3282 = vpop.permute.xlu0 %3281
        %3283 = vrot.lane.b32.xlu0 %v2872, 64
        %v3284 = vpop.permute.xlu0 %3283
        %3285 = vrot.lane.b32.xlu0 %v2873, 64
        %v3286 = vpop.permute.xlu0 %3285
        %3287 = vrot.lane.b32.xlu0 %v2874, 64
        %v3288 = vpop.permute.xlu0 %3287
        %3289 = vrot.lane.b32.xlu0 %v2875, 64
        %v3290 = vpop.permute.xlu0 %3289
        %3291 = vrot.lane.b32.xlu0 %v2876, 64
        %v3292 = vpop.permute.xlu0 %3291
        %3357 = vrot.lane.b32.xlu0 %v2877, 96
        %v3358 = vpop.permute.xlu0 %3357
        %3359 = vrot.lane.b32.xlu0 %v2878, 96
        %v3360 = vpop.permute.xlu0 %3359
        %3361 = vrot.lane.b32.xlu0 %v2879, 96
        %v3362 = vpop.permute.xlu0 %3361
        %3363 = vrot.lane.b32.xlu0 %v2880, 96
        %v3364 = vpop.permute.xlu0 %3363
        %3365 = vrot.lane.b32.xlu0 %v2881, 96
        %v3366 = vpop.permute.xlu0 %3365
        %3367 = vrot.lane.b32.xlu0 %v2882, 96
        %v3368 = vpop.permute.xlu0 %3367
        %3369 = vrot.lane.b32.xlu0 %v2883, 96
        %v3370 = vpop.permute.xlu0 %3369
        %3371 = vrot.lane.b32.xlu0 %v2884, 96
        %v3372 = vpop.permute.xlu0 %3371
        %3373 = vrot.lane.b32.xlu0 %v2885, 96
        %v3374 = vpop.permute.xlu0 %3373
        %3375 = vrot.lane.b32.xlu0 %v2886, 96
        %v3376 = vpop.permute.xlu0 %3375
        %3377 = vrot.lane.b32.xlu0 %v2887, 96
        %v3378 = vpop.permute.xlu0 %3377
        %3379 = vrot.lane.b32.xlu0 %v2888, 96
        %v3380 = vpop.permute.xlu0 %3379
        %3381 = vrot.lane.b32.xlu0 %v2889, 96
        %v3382 = vpop.permute.xlu0 %3381
        %3383 = vrot.lane.b32.xlu0 %v2890, 96
        %v3384 = vpop.permute.xlu0 %3383
        %3385 = vrot.lane.b32.xlu0 %v2891, 96
        %v3386 = vpop.permute.xlu0 %3385
        %3387 = vrot.lane.b32.xlu0 %v2892, 96
        %v3388 = vpop.permute.xlu0 %3387
        %3389 = vrot.lane.b32.xlu0 %v2893, 96
        %v3390 = vpop.permute.xlu0 %3389
        %3391 = vrot.lane.b32.xlu0 %v2894, 96
        %v3392 = vpop.permute.xlu0 %3391
        %3393 = vrot.lane.b32.xlu0 %v2895, 96
        %v3394 = vpop.permute.xlu0 %3393
        %3395 = vrot.lane.b32.xlu0 %v2896, 96
        %v3396 = vpop.permute.xlu0 %3395
        %3397 = vrot.lane.b32.xlu0 %v2897, 96
        %v3398 = vpop.permute.xlu0 %3397
        %3399 = vrot.lane.b32.xlu0 %v2898, 96
        %v3400 = vpop.permute.xlu0 %3399
        %3401 = vrot.lane.b32.xlu0 %v2899, 96
        %v3402 = vpop.permute.xlu0 %3401
        %3403 = vrot.lane.b32.xlu0 %v2900, 96
        %v3404 = vpop.permute.xlu0 %3403
        %3405 = vrot.lane.b32.xlu0 %v2901, 96
        %v3406 = vpop.permute.xlu0 %3405
        %3407 = vrot.lane.b32.xlu0 %v2902, 96
        %v3408 = vpop.permute.xlu0 %3407
        %3409 = vrot.lane.b32.xlu0 %v2903, 96
        %v3410 = vpop.permute.xlu0 %3409
        %3411 = vrot.lane.b32.xlu0 %v2904, 96
        %v3412 = vpop.permute.xlu0 %3411
        %3413 = vrot.lane.b32.xlu0 %v2905, 96
        %v3414 = vpop.permute.xlu0 %3413
        %3415 = vrot.lane.b32.xlu0 %v2906, 96
        %v3416 = vpop.permute.xlu0 %3415
        %3417 = vrot.lane.b32.xlu0 %v2907, 96
        %v3418 = vpop.permute.xlu0 %3417
        %3419 = vrot.lane.b32.xlu0 %v2908, 96
        %v3420 = vpop.permute.xlu0 %3419
        %3485 = vrot.lane.b32.xlu0 %v2941, 32
        %v3486 = vpop.permute.xlu0 %3485
        %3487 = vrot.lane.b32.xlu0 %v2942, 32
        %v3488 = vpop.permute.xlu0 %3487
        %3489 = vrot.lane.b32.xlu0 %v2943, 32
        %v3490 = vpop.permute.xlu0 %3489
        %3491 = vrot.lane.b32.xlu0 %v2944, 32
        %v3492 = vpop.permute.xlu0 %3491
        %3493 = vrot.lane.b32.xlu0 %v2945, 32
        %v3494 = vpop.permute.xlu0 %3493
        %3495 = vrot.lane.b32.xlu0 %v2946, 32
        %v3496 = vpop.permute.xlu0 %3495
        %3497 = vrot.lane.b32.xlu0 %v2947, 32
        %v3498 = vpop.permute.xlu0 %3497
        %3499 = vrot.lane.b32.xlu0 %v2948, 32
        %v3500 = vpop.permute.xlu0 %3499
        %3501 = vrot.lane.b32.xlu0 %v2949, 32
        %v3502 = vpop.permute.xlu0 %3501
        %3503 = vrot.lane.b32.xlu0 %v2950, 32
        %v3504 = vpop.permute.xlu0 %3503
        %3505 = vrot.lane.b32.xlu0 %v2951, 32
        %v3506 = vpop.permute.xlu0 %3505
        %3507 = vrot.lane.b32.xlu0 %v2952, 32
        %v3508 = vpop.permute.xlu0 %3507
        %3509 = vrot.lane.b32.xlu0 %v2953, 32
        %v3510 = vpop.permute.xlu0 %3509
        %3511 = vrot.lane.b32.xlu0 %v2954, 32
        %v3512 = vpop.permute.xlu0 %3511
        %3513 = vrot.lane.b32.xlu0 %v2955, 32
        %v3514 = vpop.permute.xlu0 %3513
        %3515 = vrot.lane.b32.xlu0 %v2956, 32
        %v3516 = vpop.permute.xlu0 %3515
        %3517 = vrot.lane.b32.xlu0 %v2957, 32
        %v3518 = vpop.permute.xlu0 %3517
        %3519 = vrot.lane.b32.xlu0 %v2958, 32
        %v3520 = vpop.permute.xlu0 %3519
        %3521 = vrot.lane.b32.xlu0 %v2959, 32
        %v3522 = vpop.permute.xlu0 %3521
        %3523 = vrot.lane.b32.xlu0 %v2960, 32
        %v3524 = vpop.permute.xlu0 %3523
        %3525 = vrot.lane.b32.xlu0 %v2961, 32
        %v3526 = vpop.permute.xlu0 %3525
        %3527 = vrot.lane.b32.xlu0 %v2962, 32
        %v3528 = vpop.permute.xlu0 %3527
        %3529 = vrot.lane.b32.xlu0 %v2963, 32
        %v3530 = vpop.permute.xlu0 %3529
        %3531 = vrot.lane.b32.xlu0 %v2964, 32
        %v3532 = vpop.permute.xlu0 %3531
        %3533 = vrot.lane.b32.xlu0 %v2965, 32
        %v3534 = vpop.permute.xlu0 %3533
        %3535 = vrot.lane.b32.xlu0 %v2966, 32
        %v3536 = vpop.permute.xlu0 %3535
        %3537 = vrot.lane.b32.xlu0 %v2967, 32
        %v3538 = vpop.permute.xlu0 %3537
        %3539 = vrot.lane.b32.xlu0 %v2968, 32
        %v3540 = vpop.permute.xlu0 %3539
        %3541 = vrot.lane.b32.xlu0 %v2969, 32
        %v3542 = vpop.permute.xlu0 %3541
        %3543 = vrot.lane.b32.xlu0 %v2970, 32
        %v3544 = vpop.permute.xlu0 %3543
        %3545 = vrot.lane.b32.xlu0 %v2971, 32
        %v3546 = vpop.permute.xlu0 %3545
        %3547 = vrot.lane.b32.xlu0 %v2972, 32
        %v3548 = vpop.permute.xlu0 %3547
        %3613 = vrot.lane.b32.xlu0 %v2973, 64
        %v3614 = vpop.permute.xlu0 %3613
        %3615 = vrot.lane.b32.xlu0 %v2974, 64
        %v3616 = vpop.permute.xlu0 %3615
        %3617 = vrot.lane.b32.xlu0 %v2975, 64
        %v3618 = vpop.permute.xlu0 %3617
        %3619 = vrot.lane.b32.xlu0 %v2976, 64
        %v3620 = vpop.permute.xlu0 %3619
        %3621 = vrot.lane.b32.xlu0 %v2977, 64
        %v3622 = vpop.permute.xlu0 %3621
        %3623 = vrot.lane.b32.xlu0 %v2978, 64
        %v3624 = vpop.permute.xlu0 %3623
        %3625 = vrot.lane.b32.xlu0 %v2979, 64
        %v3626 = vpop.permute.xlu0 %3625
        %3627 = vrot.lane.b32.xlu0 %v2980, 64
        %v3628 = vpop.permute.xlu0 %3627
        %3629 = vrot.lane.b32.xlu0 %v2981, 64
        %v3630 = vpop.permute.xlu0 %3629
        %3631 = vrot.lane.b32.xlu0 %v2982, 64
        %v3632 = vpop.permute.xlu0 %3631
        %3633 = vrot.lane.b32.xlu0 %v2983, 64
        %v3634 = vpop.permute.xlu0 %3633
        %3635 = vrot.lane.b32.xlu0 %v2984, 64
        %v3636 = vpop.permute.xlu0 %3635
        %3637 = vrot.lane.b32.xlu0 %v2985, 64
        %v3638 = vpop.permute.xlu0 %3637
        %3639 = vrot.lane.b32.xlu0 %v2986, 64
        %v3640 = vpop.permute.xlu0 %3639
        %3641 = vrot.lane.b32.xlu0 %v2987, 64
        %v3642 = vpop.permute.xlu0 %3641
        %3643 = vrot.lane.b32.xlu0 %v2988, 64
        %v3644 = vpop.permute.xlu0 %3643
        %3645 = vrot.lane.b32.xlu0 %v2989, 64
        %v3646 = vpop.permute.xlu0 %3645
        %3647 = vrot.lane.b32.xlu0 %v2990, 64
        %v3648 = vpop.permute.xlu0 %3647
        %3649 = vrot.lane.b32.xlu0 %v2991, 64
        %v3650 = vpop.permute.xlu0 %3649
        %3651 = vrot.lane.b32.xlu0 %v2992, 64
        %v3652 = vpop.permute.xlu0 %3651
        %3653 = vrot.lane.b32.xlu0 %v2993, 64
        %v3654 = vpop.permute.xlu0 %3653
        %3655 = vrot.lane.b32.xlu0 %v2994, 64
        %v3656 = vpop.permute.xlu0 %3655
        %3657 = vrot.lane.b32.xlu0 %v2995, 64
        %v3658 = vpop.permute.xlu0 %3657
        %3659 = vrot.lane.b32.xlu0 %v2996, 64
        %v3660 = vpop.permute.xlu0 %3659
        %3661 = vrot.lane.b32.xlu0 %v2997, 64
        %v3662 = vpop.permute.xlu0 %3661
        %3663 = vrot.lane.b32.xlu0 %v2998, 64
        %v3664 = vpop.permute.xlu0 %3663
        %3665 = vrot.lane.b32.xlu0 %v2999, 64
        %v3666 = vpop.permute.xlu0 %3665
        %3667 = vrot.lane.b32.xlu0 %v3000, 64
        %v3668 = vpop.permute.xlu0 %3667
        %3669 = vrot.lane.b32.xlu0 %v3001, 64
        %v3670 = vpop.permute.xlu0 %3669
        %3671 = vrot.lane.b32.xlu0 %v3002, 64
        %v3672 = vpop.permute.xlu0 %3671
        %3673 = vrot.lane.b32.xlu0 %v3003, 64
        %v3674 = vpop.permute.xlu0 %3673
        %3675 = vrot.lane.b32.xlu0 %v3004, 64
        %v3676 = vpop.permute.xlu0 %3675
        %3741 = vrot.lane.b32.xlu0 %v3005, 96
        %v3742 = vpop.permute.xlu0 %3741
        %3743 = vrot.lane.b32.xlu0 %v3006, 96
        %v3744 = vpop.permute.xlu0 %3743
        %3745 = vrot.lane.b32.xlu0 %v3007, 96
        %v3746 = vpop.permute.xlu0 %3745
        %3747 = vrot.lane.b32.xlu0 %v3008, 96
        %v3748 = vpop.permute.xlu0 %3747
        %3749 = vrot.lane.b32.xlu0 %v3009, 96
        %v3750 = vpop.permute.xlu0 %3749
        %3751 = vrot.lane.b32.xlu0 %v3010, 96
        %v3752 = vpop.permute.xlu0 %3751
        %3753 = vrot.lane.b32.xlu0 %v3011, 96
        %v3754 = vpop.permute.xlu0 %3753
        %3755 = vrot.lane.b32.xlu0 %v3012, 96
        %v3756 = vpop.permute.xlu0 %3755
        %3757 = vrot.lane.b32.xlu0 %v3013, 96
        %v3758 = vpop.permute.xlu0 %3757
        %3759 = vrot.lane.b32.xlu0 %v3014, 96
        %v3760 = vpop.permute.xlu0 %3759
        %3761 = vrot.lane.b32.xlu0 %v3015, 96
        %v3762 = vpop.permute.xlu0 %3761
        %3763 = vrot.lane.b32.xlu0 %v3016, 96
        %v3764 = vpop.permute.xlu0 %3763
        %3765 = vrot.lane.b32.xlu0 %v3017, 96
        %v3766 = vpop.permute.xlu0 %3765
        %3767 = vrot.lane.b32.xlu0 %v3018, 96
        %v3768 = vpop.permute.xlu0 %3767
        %3769 = vrot.lane.b32.xlu0 %v3019, 96
        %v3770 = vpop.permute.xlu0 %3769
        %3771 = vrot.lane.b32.xlu0 %v3020, 96
        %v3772 = vpop.permute.xlu0 %3771
        %3773 = vrot.lane.b32.xlu0 %v3021, 96
        %v3774 = vpop.permute.xlu0 %3773
        %3775 = vrot.lane.b32.xlu0 %v3022, 96
        %v3776 = vpop.permute.xlu0 %3775
        %3777 = vrot.lane.b32.xlu0 %v3023, 96
        %v3778 = vpop.permute.xlu0 %3777
        %3779 = vrot.lane.b32.xlu0 %v3024, 96
        %v3780 = vpop.permute.xlu0 %3779
        %3781 = vrot.lane.b32.xlu0 %v3025, 96
        %v3782 = vpop.permute.xlu0 %3781
        %3783 = vrot.lane.b32.xlu0 %v3026, 96
        %v3784 = vpop.permute.xlu0 %3783
        %3785 = vrot.lane.b32.xlu0 %v3027, 96
        %v3786 = vpop.permute.xlu0 %3785
        %3787 = vrot.lane.b32.xlu0 %v3028, 96
        %v3788 = vpop.permute.xlu0 %3787
        %3789 = vrot.lane.b32.xlu0 %v3029, 96
        %v3790 = vpop.permute.xlu0 %3789
        %3791 = vrot.lane.b32.xlu0 %v3030, 96
        %v3792 = vpop.permute.xlu0 %3791
        %3793 = vrot.lane.b32.xlu0 %v3031, 96
        %v3794 = vpop.permute.xlu0 %3793
        %3795 = vrot.lane.b32.xlu0 %v3032, 96
        %v3796 = vpop.permute.xlu0 %3795
        %3797 = vrot.lane.b32.xlu0 %v3033, 96
        %v3798 = vpop.permute.xlu0 %3797
        %3799 = vrot.lane.b32.xlu0 %v3034, 96
        %v3800 = vpop.permute.xlu0 %3799
        %3801 = vrot.lane.b32.xlu0 %v3035, 96
        %v3802 = vpop.permute.xlu0 %3801
        %3803 = vrot.lane.b32.xlu0 %v3036, 96
        %v3804 = vpop.permute.xlu0 %3803
        %v3837 = vsel %vm256, %v2781, %v3102
        %v3838 = vsel %vm256, %v2782, %v3104
        %v3839 = vsel %vm256, %v2783, %v3106
        %v3840 = vsel %vm256, %v2784, %v3108
        %v3841 = vsel %vm256, %v2785, %v3110
        %v3842 = vsel %vm256, %v2786, %v3112
        %v3843 = vsel %vm256, %v2787, %v3114
        %v3844 = vsel %vm256, %v2788, %v3116
        %v3845 = vsel %vm256, %v2789, %v3118
        %v3846 = vsel %vm256, %v2790, %v3120
        %v3847 = vsel %vm256, %v2791, %v3122
        %v3848 = vsel %vm256, %v2792, %v3124
        %v3849 = vsel %vm256, %v2793, %v3126
        %v3850 = vsel %vm256, %v2794, %v3128
        %v3851 = vsel %vm256, %v2795, %v3130
        %v3852 = vsel %vm256, %v2796, %v3132
        %v3853 = vsel %vm256, %v2797, %v3134
        %v3854 = vsel %vm256, %v2798, %v3136
        %v3855 = vsel %vm256, %v2799, %v3138
        %v3856 = vsel %vm256, %v2800, %v3140
        %v3857 = vsel %vm256, %v2801, %v3142
        %v3858 = vsel %vm256, %v2802, %v3144
        %v3859 = vsel %vm256, %v2803, %v3146
        %v3860 = vsel %vm256, %v2804, %v3148
        %v3861 = vsel %vm256, %v2805, %v3150
        %v3862 = vsel %vm256, %v2806, %v3152
        %v3863 = vsel %vm256, %v2807, %v3154
        %v3864 = vsel %vm256, %v2808, %v3156
        %v3865 = vsel %vm256, %v2809, %v3158
        %v3866 = vsel %vm256, %v2810, %v3160
        %v3867 = vsel %vm256, %v2811, %v3162
        %v3868 = vsel %vm256, %v2812, %v3164
        %v3869 = vsel %vm1530, %v3837, %v3230
        %v3870 = vsel %vm1530, %v3838, %v3232
        %v3871 = vsel %vm1530, %v3839, %v3234
        %v3872 = vsel %vm1530, %v3840, %v3236
        %v3873 = vsel %vm1530, %v3841, %v3238
        %v3874 = vsel %vm1530, %v3842, %v3240
        %v3875 = vsel %vm1530, %v3843, %v3242
        %v3876 = vsel %vm1530, %v3844, %v3244
        %v3877 = vsel %vm1530, %v3845, %v3246
        %v3878 = vsel %vm1530, %v3846, %v3248
        %v3879 = vsel %vm1530, %v3847, %v3250
        %v3880 = vsel %vm1530, %v3848, %v3252
        %v3881 = vsel %vm1530, %v3849, %v3254
        %v3882 = vsel %vm1530, %v3850, %v3256
        %v3883 = vsel %vm1530, %v3851, %v3258
        %v3884 = vsel %vm1530, %v3852, %v3260
        %v3885 = vsel %vm1530, %v3853, %v3262
        %v3886 = vsel %vm1530, %v3854, %v3264
        %v3887 = vsel %vm1530, %v3855, %v3266
        %v3888 = vsel %vm1530, %v3856, %v3268
        %v3889 = vsel %vm1530, %v3857, %v3270
        %v3890 = vsel %vm1530, %v3858, %v3272
        %v3891 = vsel %vm1530, %v3859, %v3274
        %v3892 = vsel %vm1530, %v3860, %v3276
        %v3893 = vsel %vm1530, %v3861, %v3278
        %v3894 = vsel %vm1530, %v3862, %v3280
        %v3895 = vsel %vm1530, %v3863, %v3282
        %v3896 = vsel %vm1530, %v3864, %v3284
        %v3897 = vsel %vm1530, %v3865, %v3286
        %v3898 = vsel %vm1530, %v3866, %v3288
        %v3899 = vsel %vm1530, %v3867, %v3290
        %v3900 = vsel %vm1530, %v3868, %v3292
        %v3901 = vsel %vm1563, %v3869, %v3358
        %v3902 = vsel %vm1563, %v3870, %v3360
        %v3903 = vsel %vm1563, %v3871, %v3362
        %v3904 = vsel %vm1563, %v3872, %v3364
        %v3905 = vsel %vm1563, %v3873, %v3366
        %v3906 = vsel %vm1563, %v3874, %v3368
        %v3907 = vsel %vm1563, %v3875, %v3370
        %v3908 = vsel %vm1563, %v3876, %v3372
        %v3909 = vsel %vm1563, %v3877, %v3374
        %v3910 = vsel %vm1563, %v3878, %v3376
        %v3911 = vsel %vm1563, %v3879, %v3378
        %v3912 = vsel %vm1563, %v3880, %v3380
        %v3913 = vsel %vm1563, %v3881, %v3382
        %v3914 = vsel %vm1563, %v3882, %v3384
        %v3915 = vsel %vm1563, %v3883, %v3386
        %v3916 = vsel %vm1563, %v3884, %v3388
        %v3917 = vsel %vm1563, %v3885, %v3390
        %v3918 = vsel %vm1563, %v3886, %v3392
        %v3919 = vsel %vm1563, %v3887, %v3394
        %v3920 = vsel %vm1563, %v3888, %v3396
        %v3921 = vsel %vm1563, %v3889, %v3398
        %v3922 = vsel %vm1563, %v3890, %v3400
        %v3923 = vsel %vm1563, %v3891, %v3402
        %v3924 = vsel %vm1563, %v3892, %v3404
        %v3925 = vsel %vm1563, %v3893, %v3406
        %v3926 = vsel %vm1563, %v3894, %v3408
        %v3927 = vsel %vm1563, %v3895, %v3410
        %v3928 = vsel %vm1563, %v3896, %v3412
        %v3929 = vsel %vm1563, %v3897, %v3414
        %v3930 = vsel %vm1563, %v3898, %v3416
        %v3931 = vsel %vm1563, %v3899, %v3418
        %v3932 = vsel %vm1563, %v3900, %v3420
        %v3933 = vsel %vm256, %v2909, %v3486
        %v3934 = vsel %vm256, %v2910, %v3488
        %v3935 = vsel %vm256, %v2911, %v3490
        %v3936 = vsel %vm256, %v2912, %v3492
        %v3937 = vsel %vm256, %v2913, %v3494
        %v3938 = vsel %vm256, %v2914, %v3496
        %v3939 = vsel %vm256, %v2915, %v3498
        %v3940 = vsel %vm256, %v2916, %v3500
        %v3941 = vsel %vm256, %v2917, %v3502
        %v3942 = vsel %vm256, %v2918, %v3504
        %v3943 = vsel %vm256, %v2919, %v3506
        %v3944 = vsel %vm256, %v2920, %v3508
        %v3945 = vsel %vm256, %v2921, %v3510
        %v3946 = vsel %vm256, %v2922, %v3512
        %v3947 = vsel %vm256, %v2923, %v3514
        %v3948 = vsel %vm256, %v2924, %v3516
        %v3949 = vsel %vm256, %v2925, %v3518
        %v3950 = vsel %vm256, %v2926, %v3520
        %v3951 = vsel %vm256, %v2927, %v3522
        %v3952 = vsel %vm256, %v2928, %v3524
        %v3953 = vsel %vm256, %v2929, %v3526
        %v3954 = vsel %vm256, %v2930, %v3528
        %v3955 = vsel %vm256, %v2931, %v3530
        %v3956 = vsel %vm256, %v2932, %v3532
        %v3957 = vsel %vm256, %v2933, %v3534
        %v3958 = vsel %vm256, %v2934, %v3536
        %v3959 = vsel %vm256, %v2935, %v3538
        %v3960 = vsel %vm256, %v2936, %v3540
        %v3961 = vsel %vm256, %v2937, %v3542
        %v3962 = vsel %vm256, %v2938, %v3544
        %v3963 = vsel %vm256, %v2939, %v3546
        %v3964 = vsel %vm256, %v2940, %v3548
        %v3965 = vsel %vm1530, %v3933, %v3614
        %v3966 = vsel %vm1530, %v3934, %v3616
        %v3967 = vsel %vm1530, %v3935, %v3618
        %v3968 = vsel %vm1530, %v3936, %v3620
        %v3969 = vsel %vm1530, %v3937, %v3622
        %v3970 = vsel %vm1530, %v3938, %v3624
        %v3971 = vsel %vm1530, %v3939, %v3626
        %v3972 = vsel %vm1530, %v3940, %v3628
        %v3973 = vsel %vm1530, %v3941, %v3630
        %v3974 = vsel %vm1530, %v3942, %v3632
        %v3975 = vsel %vm1530, %v3943, %v3634
        %v3976 = vsel %vm1530, %v3944, %v3636
        %v3977 = vsel %vm1530, %v3945, %v3638
        %v3978 = vsel %vm1530, %v3946, %v3640
        %v3979 = vsel %vm1530, %v3947, %v3642
        %v3980 = vsel %vm1530, %v3948, %v3644
        %v3981 = vsel %vm1530, %v3949, %v3646
        %v3982 = vsel %vm1530, %v3950, %v3648
        %v3983 = vsel %vm1530, %v3951, %v3650
        %v3984 = vsel %vm1530, %v3952, %v3652
        %v3985 = vsel %vm1530, %v3953, %v3654
        %v3986 = vsel %vm1530, %v3954, %v3656
        %v3987 = vsel %vm1530, %v3955, %v3658
        %v3988 = vsel %vm1530, %v3956, %v3660
        %v3989 = vsel %vm1530, %v3957, %v3662
        %v3990 = vsel %vm1530, %v3958, %v3664
        %v3991 = vsel %vm1530, %v3959, %v3666
        %v3992 = vsel %vm1530, %v3960, %v3668
        %v3993 = vsel %vm1530, %v3961, %v3670
        %v3994 = vsel %vm1530, %v3962, %v3672
        %v3995 = vsel %vm1530, %v3963, %v3674
        %v3996 = vsel %vm1530, %v3964, %v3676
        %v3997 = vsel %vm1563, %v3965, %v3742
        %v3998 = vsel %vm1563, %v3966, %v3744
        %v3999 = vsel %vm1563, %v3967, %v3746
        %v4000 = vsel %vm1563, %v3968, %v3748
        %v4001 = vsel %vm1563, %v3969, %v3750
        %v4002 = vsel %vm1563, %v3970, %v3752
        %v4003 = vsel %vm1563, %v3971, %v3754
        %v4004 = vsel %vm1563, %v3972, %v3756
        %v4005 = vsel %vm1563, %v3973, %v3758
        %v4006 = vsel %vm1563, %v3974, %v3760
        %v4007 = vsel %vm1563, %v3975, %v3762
        %v4008 = vsel %vm1563, %v3976, %v3764
        %v4009 = vsel %vm1563, %v3977, %v3766
        %v4010 = vsel %vm1563, %v3978, %v3768
        %v4011 = vsel %vm1563, %v3979, %v3770
        %v4012 = vsel %vm1563, %v3980, %v3772
        %v4013 = vsel %vm1563, %v3981, %v3774
        %v4014 = vsel %vm1563, %v3982, %v3776
        %v4015 = vsel %vm1563, %v3983, %v3778
        %v4016 = vsel %vm1563, %v3984, %v3780
        %v4017 = vsel %vm1563, %v3985, %v3782
        %v4018 = vsel %vm1563, %v3986, %v3784
        %v4019 = vsel %vm1563, %v3987, %v3786
        %v4020 = vsel %vm1563, %v3988, %v3788
        %v4021 = vsel %vm1563, %v3989, %v3790
        %v4022 = vsel %vm1563, %v3990, %v3792
        %v4023 = vsel %vm1563, %v3991, %v3794
        %v4024 = vsel %vm1563, %v3992, %v3796
        %v4025 = vsel %vm1563, %v3993, %v3798
        %v4026 = vsel %vm1563, %v3994, %v3800
        %v4027 = vsel %vm1563, %v3995, %v3802
        %v4028 = vsel %vm1563, %v3996, %v3804
        %v4029 = vpack.c.bf16 %v3902, %v3901
        %v4030 = vpack.c.bf16 %v3998, %v3997
        %v4031 = vpack.c.bf16 %v3038, %v3037
        %v4032 = vpack.c.bf16 %v3904, %v3903
        %v4033 = vpack.c.bf16 %v4000, %v3999
        %v4034 = vpack.c.bf16 %v3040, %v3039
        %v4035 = vpack.c.bf16 %v3906, %v3905
        %v4036 = vpack.c.bf16 %v4002, %v4001
        %v4037 = vpack.c.bf16 %v3042, %v3041
        %v4038 = vpack.c.bf16 %v3908, %v3907
        %v4039 = vpack.c.bf16 %v4004, %v4003
        %v4040 = vpack.c.bf16 %v3044, %v3043
        %v4041 = vpack.c.bf16 %v3910, %v3909
        %v4042 = vpack.c.bf16 %v4006, %v4005
        %v4043 = vpack.c.bf16 %v3046, %v3045
        %v4044 = vpack.c.bf16 %v3912, %v3911
        %v4045 = vpack.c.bf16 %v4008, %v4007
        %v4046 = vpack.c.bf16 %v3048, %v3047
        %v4047 = vpack.c.bf16 %v3914, %v3913
        %v4048 = vpack.c.bf16 %v4010, %v4009
        %v4049 = vpack.c.bf16 %v3050, %v3049
        %v4050 = vpack.c.bf16 %v3916, %v3915
        %v4051 = vpack.c.bf16 %v4012, %v4011
        %v4052 = vpack.c.bf16 %v3052, %v3051
        %v4053 = vpack.c.bf16 %v3918, %v3917
        %v4054 = vpack.c.bf16 %v4014, %v4013
        %v4055 = vpack.c.bf16 %v3054, %v3053
        %v4056 = vpack.c.bf16 %v3920, %v3919
        %v4057 = vpack.c.bf16 %v4016, %v4015
        %v4058 = vpack.c.bf16 %v3056, %v3055
        %v4059 = vpack.c.bf16 %v3922, %v3921
        %v4060 = vpack.c.bf16 %v4018, %v4017
        %v4061 = vpack.c.bf16 %v3058, %v3057
        %v4062 = vpack.c.bf16 %v3924, %v3923
        %v4063 = vpack.c.bf16 %v4020, %v4019
        %v4064 = vpack.c.bf16 %v3060, %v3059
        %v4065 = vpack.c.bf16 %v3926, %v3925
        %v4066 = vpack.c.bf16 %v4022, %v4021
        %v4067 = vpack.c.bf16 %v3062, %v3061
        %v4068 = vpack.c.bf16 %v3928, %v3927
        %v4069 = vpack.c.bf16 %v4024, %v4023
        %v4070 = vpack.c.bf16 %v3064, %v3063
        %v4071 = vpack.c.bf16 %v3930, %v3929
        %v4072 = vpack.c.bf16 %v4026, %v4025
        %v4073 = vpack.c.bf16 %v3066, %v3065
        %v4074 = vpack.c.bf16 %v3932, %v3931
        %v4075 = vpack.c.bf16 %v4028, %v4027
        %v4076 = vpack.c.bf16 %v3068, %v3067
        %s4077 = scalar_lea.vmem %s1, 144
        %v4078 = vld [vmem:[%s4077] sm:$0xf]
        %v4079 = vld [vmem:[%s4077 + $0x4] sm:$0xf]
        %v4080 = vld [vmem:[%s4077 + $0x8] sm:$0xf]
        %v4081 = vld [vmem:[%s4077 + $0xc] sm:$0xf]
        %v4082 = vld [vmem:[%s4077 + $0x10] sm:$0xf]
        %v4083 = vld [vmem:[%s4077 + $0x14] sm:$0xf]
        %v4084 = vld [vmem:[%s4077 + $0x18] sm:$0xf]
        %v4085 = vld [vmem:[%s4077 + $0x1c] sm:$0xf]
        %v4086 = vld [vmem:[%s4077 + $0x20] sm:$0xf]
        %v4087 = vld [vmem:[%s4077 + $0x24] sm:$0xf]
        %v4088 = vld [vmem:[%s4077 + $0x28] sm:$0xf]
        %v4089 = vld [vmem:[%s4077 + $0x2c] sm:$0xf]
        %v4090 = vld [vmem:[%s4077 + $0x30] sm:$0xf]
        %v4091 = vld [vmem:[%s4077 + $0x34] sm:$0xf]
        %v4092 = vld [vmem:[%s4077 + $0x38] sm:$0xf]
        %v4093 = vld [vmem:[%s4077 + $0x3c] sm:$0xf]
        %v4094 = vld [vmem:[%s4077 + $0x40] sm:$0xf]
        %v4095 = vld [vmem:[%s4077 + $0x44] sm:$0xf]
        %v4096 = vld [vmem:[%s4077 + $0x48] sm:$0xf]
        %v4097 = vld [vmem:[%s4077 + $0x4c] sm:$0xf]
        %v4098 = vld [vmem:[%s4077 + $0x50] sm:$0xf]
        %v4099 = vld [vmem:[%s4077 + $0x54] sm:$0xf]
        %v4100 = vld [vmem:[%s4077 + $0x58] sm:$0xf]
        %v4101 = vld [vmem:[%s4077 + $0x5c] sm:$0xf]
        %v4102 = vld [vmem:[%s4077 + $0x60] sm:$0xf]
        %v4103 = vld [vmem:[%s4077 + $0x64] sm:$0xf]
        %v4104 = vld [vmem:[%s4077 + $0x68] sm:$0xf]
        %v4105 = vld [vmem:[%s4077 + $0x6c] sm:$0xf]
        %v4106 = vld [vmem:[%s4077 + $0x70] sm:$0xf]
        %v4107 = vld [vmem:[%s4077 + $0x74] sm:$0xf]
        %v4108 = vld [vmem:[%s4077 + $0x78] sm:$0xf]
        %v4109 = vld [vmem:[%s4077 + $0x7c] sm:$0xf]
        %v4110 = vld [vmem:[%s4077 + $0x80] sm:$0xf]
        %v4111 = vld [vmem:[%s4077 + $0x84] sm:$0xf]
        %v4112 = vld [vmem:[%s4077 + $0x88] sm:$0xf]
        %v4113 = vld [vmem:[%s4077 + $0x8c] sm:$0xf]
        %s4114 = scalar_lea.vmem %s2, 1
        %v4115 = vld [vmem:[%s4114] sm:$0x1]
        %v4117 = vlaneseq
        %v4118 = vshrl.u32 %v4117, 7
        %v4119 = vsub.s32 0, %v4118
        %v4120 = vrot.slane %v4115, %v4119
        %v4158 = vunpack.c.l.b16 %v4078
        %v4159 = vunpack.c.l.b16 %v4079
        %v4160 = vunpack.c.l.b16 %v4080
        %v4161 = vunpack.c.l.b16 %v4081
        %v4162 = vunpack.c.l.b16 %v4082
        %v4163 = vunpack.c.l.b16 %v4083
        %v4164 = vunpack.c.l.b16 %v4084
        %v4165 = vunpack.c.l.b16 %v4085
        %v4166 = vunpack.c.l.b16 %v4086
        %v4167 = vunpack.c.l.b16 %v4087
        %v4168 = vunpack.c.l.b16 %v4088
        %v4169 = vunpack.c.l.b16 %v4089
        %v4170 = vunpack.c.l.b16 %v4090
        %v4171 = vunpack.c.l.b16 %v4091
        %v4172 = vunpack.c.l.b16 %v4092
        %v4173 = vunpack.c.l.b16 %v4093
        %v4174 = vunpack.c.l.b16 %v4094
        %v4175 = vunpack.c.l.b16 %v4095
        %v4176 = vunpack.c.l.b16 %v4096
        %v4177 = vunpack.c.l.b16 %v4097
        %v4178 = vunpack.c.l.b16 %v4098
        %v4179 = vunpack.c.l.b16 %v4099
        %v4180 = vunpack.c.l.b16 %v4100
        %v4181 = vunpack.c.l.b16 %v4101
        %v4182 = vunpack.c.l.b16 %v4102
        %v4183 = vunpack.c.l.b16 %v4103
        %v4184 = vunpack.c.l.b16 %v4104
        %v4185 = vunpack.c.l.b16 %v4105
        %v4186 = vunpack.c.l.b16 %v4106
        %v4187 = vunpack.c.l.b16 %v4107
        %v4188 = vunpack.c.l.b16 %v4108
        %v4189 = vunpack.c.l.b16 %v4109
        %v4190 = vunpack.c.l.b16 %v4110
        %v4191 = vunpack.c.l.b16 %v4111
        %v4192 = vunpack.c.l.b16 %v4112
        %v4193 = vunpack.c.l.b16 %v4113
        %v4194 = vpack.c.b16 %v4159, %v4158
        %v4195 = vpack.c.b16 %v4161, %v4160
        %v4196 = vpack.c.b16 %v4163, %v4162
        %v4197 = vpack.c.b16 %v4165, %v4164
        %v4198 = vpack.c.b16 %v4167, %v4166
        %v4199 = vpack.c.b16 %v4169, %v4168
        %v4200 = vpack.c.b16 %v4171, %v4170
        %v4201 = vpack.c.b16 %v4173, %v4172
        %v4202 = vpack.c.b16 %v4175, %v4174
        %v4203 = vpack.c.b16 %v4177, %v4176
        %v4204 = vpack.c.b16 %v4179, %v4178
        %v4205 = vpack.c.b16 %v4181, %v4180
        %v4206 = vpack.c.b16 %v4183, %v4182
        %v4207 = vpack.c.b16 %v4185, %v4184
        %v4208 = vpack.c.b16 %v4187, %v4186
        %v4209 = vpack.c.b16 %v4189, %v4188
        %v4210 = vpack.c.b16 %v4191, %v4190
        %v4211 = vpack.c.b16 %v4193, %v4192
        %v4231 = vsel %vm256, %v4031, 0
        %v4234 = vsel %vm256, %v4034, 0
        %v4237 = vsel %vm256, %v4037, 0
        %v4240 = vsel %vm256, %v4040, 0
        %v4243 = vsel %vm256, %v4043, 0
        %v4246 = vsel %vm256, %v4046, 0
        %v4249 = vsel %vm256, %v4049, 0
        %v4252 = vsel %vm256, %v4052, 0
        %v4255 = vsel %vm256, %v4055, 0
        %v4258 = vsel %vm256, %v4058, 0
        %v4261 = vsel %vm256, %v4061, 0
        %v4264 = vsel %vm256, %v4064, 0
        %v4267 = vsel %vm256, %v4067, 0
        %v4270 = vsel %vm256, %v4070, 0
        %v4273 = vsel %vm256, %v4073, 0
        %v4276 = vsel %vm256, %v4076, 0
        %4278 = vmatprep.subr.bf16.mxu0 0
        %4279 = vmatpush1.bf16.msra.mxu0 %v4194
        %4280 = vmatprep.subr.bf16.mxu0 0
        %4281 = vmatpush1.bf16.msra.mxu0 %v4195
        %4282 = vmatprep.subr.bf16.mxu0 0
        %4283 = vmatpush1.bf16.msra.mxu0 %v4196
        %4284 = vmatprep.subr.bf16.mxu0 0
        %4285 = vmatpush1.bf16.msra.mxu0 %v4197
        %4286 = vmatprep.subr.bf16.mxu0 0
        %4287 = vmatpush1.bf16.msra.mxu0 %v4198
        %4288 = vmatprep.subr.bf16.mxu0 0
        %4289 = vmatpush1.bf16.msra.mxu0 %v4199
        %4290 = vmatprep.subr.bf16.mxu0 0
        %4291 = vmatpush1.bf16.msra.mxu0 %v4200
        %4292 = vmatprep.subr.bf16.mxu0 0
        %4293 = vmatpush1.bf16.msra.mxu0 %v4201
        %4294 = vmatprep.subr.bf16.mxu0 0
        %4295 = vmatpush1.bf16.msra.mxu0 %v4202
        %4296 = vmatprep.subr.bf16.mxu0 0
        %4297 = vmatpush1.bf16.msra.mxu0 %v4203
        %4298 = vmatprep.subr.bf16.mxu0 0
        %4299 = vmatpush1.bf16.msra.mxu0 %v4204
        %4300 = vmatprep.subr.bf16.mxu0 0
        %4301 = vmatpush1.bf16.msra.mxu0 %v4205
        %4302 = vmatprep.subr.bf16.mxu0 0
        %4303 = vmatpush1.bf16.msra.mxu0 %v4206
        %4304 = vmatprep.subr.bf16.mxu0 0
        %4305 = vmatpush1.bf16.msra.mxu0 %v4207
        %4306 = vmatprep.subr.bf16.mxu0 0
        %4307 = vmatpush1.bf16.msra.mxu0 %v4208
        %4308 = vmatprep.subr.bf16.mxu0 0
        %4309 = vmatpush1.bf16.msra.mxu0 %v4209
        %4310 = vmatprep.mubr.bf16.mxu0 %v4030
        %4311 = vmatmul.mubr.bf16.gmra.mrb[0].mxu0 %v4029
        %v4312 = vpop.f32.mrb[0].mxu0
        %v4313 = vadd.f32 %v4120, %v4312
        %v4314 = vpop.f32.mrb[0].mxu0
        %v4315 = vpop.f32.mrb[0].mxu0
        %v4316 = vadd.f32 %v4120, %v4315
        %v4317 = vpop.f32.mrb[0].mxu0
        %4318 = vmatprep.mubr.bf16.mxu0 %v4033
        %4319 = vmatmul.mubr.bf16.gmra.mrb[0].mxu0 %v4032
        %v4320 = vpop.f32.mrb[0].mxu0
        %v4321 = vadd.f32 %v4120, %v4320
        %v4322 = vpop.f32.mrb[0].mxu0
        %v4323 = vpop.f32.mrb[0].mxu0
        %v4324 = vadd.f32 %v4120, %v4323
        %v4325 = vpop.f32.mrb[0].mxu0
        %4326 = vmatprep.mubr.bf16.mxu0 %v4036
        %4327 = vmatmul.mubr.bf16.gmra.mrb[0].mxu0 %v4035
        %v4328 = vpop.f32.mrb[0].mxu0
        %v4329 = vadd.f32 %v4120, %v4328
        %v4330 = vpop.f32.mrb[0].mxu0
        %v4331 = vpop.f32.mrb[0].mxu0
        %v4332 = vadd.f32 %v4120, %v4331
        %v4333 = vpop.f32.mrb[0].mxu0
        %4334 = vmatprep.mubr.bf16.mxu0 %v4039
        %4335 = vmatmul.mubr.bf16.gmra.mrb[0].mxu0 %v4038
        %v4336 = vpop.f32.mrb[0].mxu0
        %v4337 = vadd.f32 %v4120, %v4336
        %v4338 = vpop.f32.mrb[0].mxu0
        %v4339 = vpop.f32.mrb[0].mxu0
        %v4340 = vadd.f32 %v4120, %v4339
        %v4341 = vpop.f32.mrb[0].mxu0
        %4342 = vmatprep.mubr.bf16.mxu0 %v4042
        %4343 = vmatmul.mubr.bf16.gmra.mrb[0].mxu0 %v4041
        %v4344 = vpop.f32.mrb[0].mxu0
        %v4345 = vadd.f32 %v4120, %v4344
        %v4346 = vpop.f32.mrb[0].mxu0
        %v4347 = vpop.f32.mrb[0].mxu0
        %v4348 = vadd.f32 %v4120, %v4347
        %v4349 = vpop.f32.mrb[0].mxu0
        %4350 = vmatprep.mubr.bf16.mxu0 %v4045
        %4351 = vmatmul.mubr.bf16.gmra.mrb[0].mxu0 %v4044
        %v4352 = vpop.f32.mrb[0].mxu0
        %v4353 = vadd.f32 %v4120, %v4352
        %v4354 = vpop.f32.mrb[0].mxu0
        %v4355 = vpop.f32.mrb[0].mxu0
        %v4356 = vadd.f32 %v4120, %v4355
        %v4357 = vpop.f32.mrb[0].mxu0
        %4358 = vmatprep.mubr.bf16.mxu0 %v4048
        %4359 = vmatmul.mubr.bf16.gmra.mrb[0].mxu0 %v4047
        %v4360 = vpop.f32.mrb[0].mxu0
        %v4361 = vadd.f32 %v4120, %v4360
        %v4362 = vpop.f32.mrb[0].mxu0
        %v4363 = vpop.f32.mrb[0].mxu0
        %v4364 = vadd.f32 %v4120, %v4363
        %v4365 = vpop.f32.mrb[0].mxu0
        %4366 = vmatprep.mubr.bf16.mxu0 %v4051
        %4367 = vmatmul.mubr.bf16.gmra.mrb[0].mxu0 %v4050
        %v4368 = vpop.f32.mrb[0].mxu0
        %v4369 = vadd.f32 %v4120, %v4368
        %v4370 = vpop.f32.mrb[0].mxu0
        %v4371 = vpop.f32.mrb[0].mxu0
        %v4372 = vadd.f32 %v4120, %v4371
        %v4373 = vpop.f32.mrb[0].mxu0
        %4374 = vmatprep.mubr.bf16.mxu0 %v4054
        %4375 = vmatmul.mubr.bf16.gmra.mrb[0].mxu0 %v4053
        %v4376 = vpop.f32.mrb[0].mxu0
        %v4377 = vadd.f32 %v4120, %v4376
        %v4378 = vpop.f32.mrb[0].mxu0
        %v4379 = vpop.f32.mrb[0].mxu0
        %v4380 = vadd.f32 %v4120, %v4379
        %v4381 = vpop.f32.mrb[0].mxu0
        %4382 = vmatprep.mubr.bf16.mxu0 %v4057
        %4383 = vmatmul.mubr.bf16.gmra.mrb[0].mxu0 %v4056
        %v4384 = vpop.f32.mrb[0].mxu0
        %v4385 = vadd.f32 %v4120, %v4384
        %v4386 = vpop.f32.mrb[0].mxu0
        %v4387 = vpop.f32.mrb[0].mxu0
        %v4388 = vadd.f32 %v4120, %v4387
        %v4389 = vpop.f32.mrb[0].mxu0
        %4390 = vmatprep.mubr.bf16.mxu0 %v4060
        %4391 = vmatmul.mubr.bf16.gmra.mrb[0].mxu0 %v4059
        %v4392 = vpop.f32.mrb[0].mxu0
        %v4393 = vadd.f32 %v4120, %v4392
        %v4394 = vpop.f32.mrb[0].mxu0
        %v4395 = vpop.f32.mrb[0].mxu0
        %v4396 = vadd.f32 %v4120, %v4395
        %v4397 = vpop.f32.mrb[0].mxu0
        %4398 = vmatprep.mubr.bf16.mxu0 %v4063
        %4399 = vmatmul.mubr.bf16.gmra.mrb[0].mxu0 %v4062
        %v4400 = vpop.f32.mrb[0].mxu0
        %v4401 = vadd.f32 %v4120, %v4400
        %v4402 = vpop.f32.mrb[0].mxu0
        %v4403 = vpop.f32.mrb[0].mxu0
        %v4404 = vadd.f32 %v4120, %v4403
        %v4405 = vpop.f32.mrb[0].mxu0
        %4406 = vmatprep.mubr.bf16.mxu0 %v4066
        %4407 = vmatmul.mubr.bf16.gmra.mrb[0].mxu0 %v4065
        %v4408 = vpop.f32.mrb[0].mxu0
        %v4409 = vadd.f32 %v4120, %v4408
        %v4410 = vpop.f32.mrb[0].mxu0
        %v4411 = vpop.f32.mrb[0].mxu0
        %v4412 = vadd.f32 %v4120, %v4411
        %v4413 = vpop.f32.mrb[0].mxu0
        %4414 = vmatprep.mubr.bf16.mxu0 %v4069
        %4415 = vmatmul.mubr.bf16.gmra.mrb[0].mxu0 %v4068
        %v4416 = vpop.f32.mrb[0].mxu0
        %v4417 = vadd.f32 %v4120, %v4416
        %v4418 = vpop.f32.mrb[0].mxu0
        %v4419 = vpop.f32.mrb[0].mxu0
        %v4420 = vadd.f32 %v4120, %v4419
        %v4421 = vpop.f32.mrb[0].mxu0
        %4422 = vmatprep.mubr.bf16.mxu0 %v4072
        %4423 = vmatmul.mubr.bf16.gmra.mrb[0].mxu0 %v4071
        %v4424 = vpop.f32.mrb[0].mxu0
        %v4425 = vadd.f32 %v4120, %v4424
        %v4426 = vpop.f32.mrb[0].mxu0
        %v4427 = vpop.f32.mrb[0].mxu0
        %v4428 = vadd.f32 %v4120, %v4427
        %v4429 = vpop.f32.mrb[0].mxu0
        %4430 = vmatprep.mubr.bf16.mxu0 %v4075
        %4431 = vmatmul.mubr.bf16.gmra.mrb[0].mxu0 %v4074
        %v4432 = vpop.f32.mrb[0].mxu0
        %v4433 = vadd.f32 %v4120, %v4432
        %v4434 = vpop.f32.mrb[0].mxu0
        %v4435 = vpop.f32.mrb[0].mxu0
        %v4436 = vadd.f32 %v4120, %v4435
        %v4437 = vpop.f32.mrb[0].mxu0
        %4438 = vdwg.mxu0
        %4439 = vmatprep.subr.bf16.mxu0 0
        %4440 = vmatpush1.bf16.msra.mxu0 %v4210
        %4441 = vmatprep.subr.bf16.mxu0 0
        %4442 = vmatpush1.bf16.msra.mxu0 %v4211
        %4443 = vmatprep.subr.bf16.mxu0 0
        %4444 = vmatpush1.bf16.msra.mxu0 0
        %4445 = vmatprep.subr.bf16.mxu0 0
        %4446 = vmatpush1.bf16.msra.mxu0 0
        %4447 = vmatprep.subr.bf16.mxu0 0
        %4448 = vmatpush1.bf16.msra.mxu0 0
        %4449 = vmatprep.subr.bf16.mxu0 0
        %4450 = vmatpush1.bf16.msra.mxu0 0
        %4451 = vmatprep.subr.bf16.mxu0 0
        %4452 = vmatpush1.bf16.msra.mxu0 0
        %4453 = vmatprep.subr.bf16.mxu0 0
        %4454 = vmatpush1.bf16.msra.mxu0 0
        %4455 = vmatprep.subr.bf16.mxu0 0
        %4456 = vmatpush1.bf16.msra.mxu0 0
        %4457 = vmatprep.subr.bf16.mxu0 0
        %4458 = vmatpush1.bf16.msra.mxu0 0
        %4459 = vmatprep.subr.bf16.mxu0 0
        %4460 = vmatpush1.bf16.msra.mxu0 0
        %4461 = vmatprep.subr.bf16.mxu0 0
        %4462 = vmatpush1.bf16.msra.mxu0 0
        %4463 = vmatprep.subr.bf16.mxu0 0
        %4464 = vmatpush1.bf16.msra.mxu0 0
        %4465 = vmatprep.subr.bf16.mxu0 0
        %4466 = vmatpush1.bf16.msra.mxu0 0
        %4467 = vmatprep.subr.bf16.mxu0 0
        %4468 = vmatpush1.bf16.msra.mxu0 0
        %4469 = vmatprep.subr.bf16.mxu0 0
        %4470 = vmatpush1.bf16.msra.mxu0 0
        %4471 = vmatprep.mubr.bf16.mxu0 0
        %4472 = vmatmul.mubr.bf16.gmra.mrb[0].mxu0 %v4231
        %v4473 = vpop.f32.mrb[0].mxu0
        %v4474 = vadd.f32 %v4313, %v4473
        %v4475 = vpop.f32.mrb[0].mxu0
        %v4476 = vpop.f32.mrb[0].mxu0
        %v4477 = vadd.f32 %v4316, %v4476
        %v4478 = vpop.f32.mrb[0].mxu0
        %4479 = vmatprep.mubr.bf16.mxu0 0
        %4480 = vmatmul.mubr.bf16.gmra.mrb[0].mxu0 %v4234
        %v4481 = vpop.f32.mrb[0].mxu0
        %v4482 = vadd.f32 %v4321, %v4481
        %v4483 = vpop.f32.mrb[0].mxu0
        %v4484 = vpop.f32.mrb[0].mxu0
        %v4485 = vadd.f32 %v4324, %v4484
        %v4486 = vpop.f32.mrb[0].mxu0
        %4487 = vmatprep.mubr.bf16.mxu0 0
        %4488 = vmatmul.mubr.bf16.gmra.mrb[0].mxu0 %v4237
        %v4489 = vpop.f32.mrb[0].mxu0
        %v4490 = vadd.f32 %v4329, %v4489
        %v4491 = vpop.f32.mrb[0].mxu0
        %v4492 = vpop.f32.mrb[0].mxu0
        %v4493 = vadd.f32 %v4332, %v4492
        %v4494 = vpop.f32.mrb[0].mxu0
        %4495 = vmatprep.mubr.bf16.mxu0 0
        %4496 = vmatmul.mubr.bf16.gmra.mrb[0].mxu0 %v4240
        %v4497 = vpop.f32.mrb[0].mxu0
        %v4498 = vadd.f32 %v4337, %v4497
        %v4499 = vpop.f32.mrb[0].mxu0
        %v4500 = vpop.f32.mrb[0].mxu0
        %v4501 = vadd.f32 %v4340, %v4500
        %v4502 = vpop.f32.mrb[0].mxu0
        %4503 = vmatprep.mubr.bf16.mxu0 0
        %4504 = vmatmul.mubr.bf16.gmra.mrb[0].mxu0 %v4243
        %v4505 = vpop.f32.mrb[0].mxu0
        %v4506 = vadd.f32 %v4345, %v4505
        %v4507 = vpop.f32.mrb[0].mxu0
        %v4508 = vpop.f32.mrb[0].mxu0
        %v4509 = vadd.f32 %v4348, %v4508
        %v4510 = vpop.f32.mrb[0].mxu0
        %4511 = vmatprep.mubr.bf16.mxu0 0
        %4512 = vmatmul.mubr.bf16.gmra.mrb[0].mxu0 %v4246
        %v4513 = vpop.f32.mrb[0].mxu0
        %v4514 = vadd.f32 %v4353, %v4513
        %v4515 = vpop.f32.mrb[0].mxu0
        %v4516 = vpop.f32.mrb[0].mxu0
        %v4517 = vadd.f32 %v4356, %v4516
        %v4518 = vpop.f32.mrb[0].mxu0
        %4519 = vmatprep.mubr.bf16.mxu0 0
        %4520 = vmatmul.mubr.bf16.gmra.mrb[0].mxu0 %v4249
        %v4521 = vpop.f32.mrb[0].mxu0
        %v4522 = vadd.f32 %v4361, %v4521
        %v4523 = vpop.f32.mrb[0].mxu0
        %v4524 = vpop.f32.mrb[0].mxu0
        %v4525 = vadd.f32 %v4364, %v4524
        %v4526 = vpop.f32.mrb[0].mxu0
        %4527 = vmatprep.mubr.bf16.mxu0 0
        %4528 = vmatmul.mubr.bf16.gmra.mrb[0].mxu0 %v4252
        %v4529 = vpop.f32.mrb[0].mxu0
        %v4530 = vadd.f32 %v4369, %v4529
        %v4531 = vpop.f32.mrb[0].mxu0
        %v4532 = vpop.f32.mrb[0].mxu0
        %v4533 = vadd.f32 %v4372, %v4532
        %v4534 = vpop.f32.mrb[0].mxu0
        %4535 = vmatprep.mubr.bf16.mxu0 0
        %4536 = vmatmul.mubr.bf16.gmra.mrb[0].mxu0 %v4255
        %v4537 = vpop.f32.mrb[0].mxu0
        %v4538 = vadd.f32 %v4377, %v4537
        %v4539 = vpop.f32.mrb[0].mxu0
        %v4540 = vpop.f32.mrb[0].mxu0
        %v4541 = vadd.f32 %v4380, %v4540
        %v4542 = vpop.f32.mrb[0].mxu0
        %4543 = vmatprep.mubr.bf16.mxu0 0
        %4544 = vmatmul.mubr.bf16.gmra.mrb[0].mxu0 %v4258
        %v4545 = vpop.f32.mrb[0].mxu0
        %v4546 = vadd.f32 %v4385, %v4545
        %v4547 = vpop.f32.mrb[0].mxu0
        %v4548 = vpop.f32.mrb[0].mxu0
        %v4549 = vadd.f32 %v4388, %v4548
        %v4550 = vpop.f32.mrb[0].mxu0
        %4551 = vmatprep.mubr.bf16.mxu0 0
        %4552 = vmatmul.mubr.bf16.gmra.mrb[0].mxu0 %v4261
        %v4553 = vpop.f32.mrb[0].mxu0
        %v4554 = vadd.f32 %v4393, %v4553
        %v4555 = vpop.f32.mrb[0].mxu0
        %v4556 = vpop.f32.mrb[0].mxu0
        %v4557 = vadd.f32 %v4396, %v4556
        %v4558 = vpop.f32.mrb[0].mxu0
        %4559 = vmatprep.mubr.bf16.mxu0 0
        %4560 = vmatmul.mubr.bf16.gmra.mrb[0].mxu0 %v4264
        %v4561 = vpop.f32.mrb[0].mxu0
        %v4562 = vadd.f32 %v4401, %v4561
        %v4563 = vpop.f32.mrb[0].mxu0
        %v4564 = vpop.f32.mrb[0].mxu0
        %v4565 = vadd.f32 %v4404, %v4564
        %v4566 = vpop.f32.mrb[0].mxu0
        %4567 = vmatprep.mubr.bf16.mxu0 0
        %4568 = vmatmul.mubr.bf16.gmra.mrb[0].mxu0 %v4267
        %v4569 = vpop.f32.mrb[0].mxu0
        %v4570 = vadd.f32 %v4409, %v4569
        %v4571 = vpop.f32.mrb[0].mxu0
        %v4572 = vpop.f32.mrb[0].mxu0
        %v4573 = vadd.f32 %v4412, %v4572
        %v4574 = vpop.f32.mrb[0].mxu0
        %4575 = vmatprep.mubr.bf16.mxu0 0
        %4576 = vmatmul.mubr.bf16.gmra.mrb[0].mxu0 %v4270
        %v4577 = vpop.f32.mrb[0].mxu0
        %v4578 = vadd.f32 %v4417, %v4577
        %v4579 = vpop.f32.mrb[0].mxu0
        %v4580 = vpop.f32.mrb[0].mxu0
        %v4581 = vadd.f32 %v4420, %v4580
        %v4582 = vpop.f32.mrb[0].mxu0
        %4583 = vmatprep.mubr.bf16.mxu0 0
        %4584 = vmatmul.mubr.bf16.gmra.mrb[0].mxu0 %v4273
        %v4585 = vpop.f32.mrb[0].mxu0
        %v4586 = vadd.f32 %v4425, %v4585
        %v4587 = vpop.f32.mrb[0].mxu0
        %v4588 = vpop.f32.mrb[0].mxu0
        %v4589 = vadd.f32 %v4428, %v4588
        %v4590 = vpop.f32.mrb[0].mxu0
        %4591 = vmatprep.mubr.bf16.mxu0 0
        %4592 = vmatmul.mubr.bf16.gmra.mrb[0].mxu0 %v4276
        %v4593 = vpop.f32.mrb[0].mxu0
        %v4594 = vadd.f32 %v4433, %v4593
        %v4595 = vpop.f32.mrb[0].mxu0
        %v4596 = vpop.f32.mrb[0].mxu0
        %v4597 = vadd.f32 %v4436, %v4596
        %v4598 = vpop.f32.mrb[0].mxu0
        %4599 = vdwg.mxu0
        %v4600 = vmax.f32 %v4474, 0.0
        %v4601 = vmax.f32 %v4477, 0.0
        %v4602 = vmax.f32 %v4482, 0.0
        %v4603 = vmax.f32 %v4485, 0.0
        %v4604 = vmax.f32 %v4490, 0.0
        %v4605 = vmax.f32 %v4493, 0.0
        %v4606 = vmax.f32 %v4498, 0.0
        %v4607 = vmax.f32 %v4501, 0.0
        %v4608 = vmax.f32 %v4506, 0.0
        %v4609 = vmax.f32 %v4509, 0.0
        %v4610 = vmax.f32 %v4514, 0.0
        %v4611 = vmax.f32 %v4517, 0.0
        %v4612 = vmax.f32 %v4522, 0.0
        %v4613 = vmax.f32 %v4525, 0.0
        %v4614 = vmax.f32 %v4530, 0.0
        %v4615 = vmax.f32 %v4533, 0.0
        %v4616 = vmax.f32 %v4538, 0.0
        %v4617 = vmax.f32 %v4541, 0.0
        %v4618 = vmax.f32 %v4546, 0.0
        %v4619 = vmax.f32 %v4549, 0.0
        %v4620 = vmax.f32 %v4554, 0.0
        %v4621 = vmax.f32 %v4557, 0.0
        %v4622 = vmax.f32 %v4562, 0.0
        %v4623 = vmax.f32 %v4565, 0.0
        %v4624 = vmax.f32 %v4570, 0.0
        %v4625 = vmax.f32 %v4573, 0.0
        %v4626 = vmax.f32 %v4578, 0.0
        %v4627 = vmax.f32 %v4581, 0.0
        %v4628 = vmax.f32 %v4586, 0.0
        %v4629 = vmax.f32 %v4589, 0.0
        %v4630 = vmax.f32 %v4594, 0.0
        %v4631 = vmax.f32 %v4597, 0.0
        %v4632 = vpack.c.bf16 %v4601, %v4600
        %v4633 = vpack.c.bf16 %v4603, %v4602
        %v4634 = vpack.c.bf16 %v4605, %v4604
        %v4635 = vpack.c.bf16 %v4607, %v4606
        %v4636 = vpack.c.bf16 %v4609, %v4608
        %v4637 = vpack.c.bf16 %v4611, %v4610
        %v4638 = vpack.c.bf16 %v4613, %v4612
        %v4639 = vpack.c.bf16 %v4615, %v4614
        %v4640 = vpack.c.bf16 %v4617, %v4616
        %v4641 = vpack.c.bf16 %v4619, %v4618
        %v4642 = vpack.c.bf16 %v4621, %v4620
        %v4643 = vpack.c.bf16 %v4623, %v4622
        %v4644 = vpack.c.bf16 %v4625, %v4624
        %v4645 = vpack.c.bf16 %v4627, %v4626
        %v4646 = vpack.c.bf16 %v4629, %v4628
        %v4647 = vpack.c.bf16 %v4631, %v4630
        %s4648 = scalar_lea.vmem %s3, 32
        %v4649 = vld [vmem:[%s4648] sm:$0xf]
        %v4650 = vld [vmem:[%s4648 + $0x4] sm:$0xf]
        %v4651 = vld [vmem:[%s4648 + $0x8] sm:$0xf]
        %v4652 = vld [vmem:[%s4648 + $0xc] sm:$0xf]
        %v4653 = vld [vmem:[%s4648 + $0x10] sm:$0xf]
        %v4654 = vld [vmem:[%s4648 + $0x14] sm:$0xf]
        %v4655 = vld [vmem:[%s4648 + $0x18] sm:$0xf]
        %v4656 = vld [vmem:[%s4648 + $0x1c] sm:$0xf]
        %v4665 = vunpack.c.l.b16 %v4649
        %v4666 = vunpack.c.l.b16 %v4650
        %v4667 = vunpack.c.l.b16 %v4651
        %v4668 = vunpack.c.l.b16 %v4652
        %v4669 = vunpack.c.l.b16 %v4653
        %v4670 = vunpack.c.l.b16 %v4654
        %v4671 = vunpack.c.l.b16 %v4655
        %v4672 = vunpack.c.l.b16 %v4656
        %v4673 = vpack.c.b16 %v4666, %v4665
        %v4674 = vpack.c.b16 %v4668, %v4667
        %v4675 = vpack.c.b16 %v4670, %v4669
        %v4676 = vpack.c.b16 %v4672, %v4671
        %v4682 = vsel %vm1530, %v4632, 0
        %v4685 = vsel %vm1530, %v4633, 0
        %v4688 = vsel %vm1530, %v4634, 0
        %v4691 = vsel %vm1530, %v4635, 0
        %v4694 = vsel %vm1530, %v4636, 0
        %v4697 = vsel %vm1530, %v4637, 0
        %v4700 = vsel %vm1530, %v4638, 0
        %v4703 = vsel %vm1530, %v4639, 0
        %v4706 = vsel %vm1530, %v4640, 0
        %v4709 = vsel %vm1530, %v4641, 0
        %v4712 = vsel %vm1530, %v4642, 0
        %v4715 = vsel %vm1530, %v4643, 0
        %v4718 = vsel %vm1530, %v4644, 0
        %v4721 = vsel %vm1530, %v4645, 0
        %v4724 = vsel %vm1530, %v4646, 0
        %v4727 = vsel %vm1530, %v4647, 0
        %4729 = vmatprep.subr.bf16.mxu0 0
        %4730 = vmatpush1.bf16.msra.mxu0 %v4673
        %4731 = vmatprep.subr.bf16.mxu0 0
        %4732 = vmatpush1.bf16.msra.mxu0 %v4674
        %4733 = vmatprep.subr.bf16.mxu0 0
        %4734 = vmatpush1.bf16.msra.mxu0 %v4675
        %4735 = vmatprep.subr.bf16.mxu0 0
        %4736 = vmatpush1.bf16.msra.mxu0 %v4676
        %4737 = vmatprep.subr.bf16.mxu0 0
        %4738 = vmatpush1.bf16.msra.mxu0 0
        %4739 = vmatprep.subr.bf16.mxu0 0
        %4740 = vmatpush1.bf16.msra.mxu0 0
        %4741 = vmatprep.subr.bf16.mxu0 0
        %4742 = vmatpush1.bf16.msra.mxu0 0
        %4743 = vmatprep.subr.bf16.mxu0 0
        %4744 = vmatpush1.bf16.msra.mxu0 0
        %4745 = vmatprep.subr.bf16.mxu0 0
        %4746 = vmatpush1.bf16.msra.mxu0 0
        %4747 = vmatprep.subr.bf16.mxu0 0
        %4748 = vmatpush1.bf16.msra.mxu0 0
        %4749 = vmatprep.subr.bf16.mxu0 0
        %4750 = vmatpush1.bf16.msra.mxu0 0
        %4751 = vmatprep.subr.bf16.mxu0 0
        %4752 = vmatpush1.bf16.msra.mxu0 0
        %4753 = vmatprep.subr.bf16.mxu0 0
        %4754 = vmatpush1.bf16.msra.mxu0 0
        %4755 = vmatprep.subr.bf16.mxu0 0
        %4756 = vmatpush1.bf16.msra.mxu0 0
        %4757 = vmatprep.subr.bf16.mxu0 0
        %4758 = vmatpush1.bf16.msra.mxu0 0
        %4759 = vmatprep.subr.bf16.mxu0 0
        %4760 = vmatpush1.bf16.msra.mxu0 0
        %4761 = vmatprep.mubr.bf16.mxu0 0
        %4762 = vmatmul.mubr.bf16.gmra.mrb[0].mxu0 %v4682
        %v4763 = vpop.f32.mrb[0].mxu0
        %v4764 = vadd.f32 0.0, %v4763
        %v4765 = vpop.f32.mrb[0].mxu0
        %v4766 = vpop.f32.mrb[0].mxu0
        %v4767 = vadd.f32 0.0, %v4766
        %v4768 = vpop.f32.mrb[0].mxu0
        %4769 = vmatprep.mubr.bf16.mxu0 0
        %4770 = vmatmul.mubr.bf16.gmra.mrb[0].mxu0 %v4685
        %v4771 = vpop.f32.mrb[0].mxu0
        %v4772 = vadd.f32 0.0, %v4771
        %v4773 = vpop.f32.mrb[0].mxu0
        %v4774 = vpop.f32.mrb[0].mxu0
        %v4775 = vadd.f32 0.0, %v4774
        %v4776 = vpop.f32.mrb[0].mxu0
        %4777 = vmatprep.mubr.bf16.mxu0 0
        %4778 = vmatmul.mubr.bf16.gmra.mrb[0].mxu0 %v4688
        %v4779 = vpop.f32.mrb[0].mxu0
        %v4780 = vadd.f32 0.0, %v4779
        %v4781 = vpop.f32.mrb[0].mxu0
        %v4782 = vpop.f32.mrb[0].mxu0
        %v4783 = vadd.f32 0.0, %v4782
        %v4784 = vpop.f32.mrb[0].mxu0
        %4785 = vmatprep.mubr.bf16.mxu0 0
        %4786 = vmatmul.mubr.bf16.gmra.mrb[0].mxu0 %v4691
        %v4787 = vpop.f32.mrb[0].mxu0
        %v4788 = vadd.f32 0.0, %v4787
        %v4789 = vpop.f32.mrb[0].mxu0
        %v4790 = vpop.f32.mrb[0].mxu0
        %v4791 = vadd.f32 0.0, %v4790
        %v4792 = vpop.f32.mrb[0].mxu0
        %4793 = vmatprep.mubr.bf16.mxu0 0
        %4794 = vmatmul.mubr.bf16.gmra.mrb[0].mxu0 %v4694
        %v4795 = vpop.f32.mrb[0].mxu0
        %v4796 = vadd.f32 0.0, %v4795
        %v4797 = vpop.f32.mrb[0].mxu0
        %v4798 = vpop.f32.mrb[0].mxu0
        %v4799 = vadd.f32 0.0, %v4798
        %v4800 = vpop.f32.mrb[0].mxu0
        %4801 = vmatprep.mubr.bf16.mxu0 0
        %4802 = vmatmul.mubr.bf16.gmra.mrb[0].mxu0 %v4697
        %v4803 = vpop.f32.mrb[0].mxu0
        %v4804 = vadd.f32 0.0, %v4803
        %v4805 = vpop.f32.mrb[0].mxu0
        %v4806 = vpop.f32.mrb[0].mxu0
        %v4807 = vadd.f32 0.0, %v4806
        %v4808 = vpop.f32.mrb[0].mxu0
        %4809 = vmatprep.mubr.bf16.mxu0 0
        %4810 = vmatmul.mubr.bf16.gmra.mrb[0].mxu0 %v4700
        %v4811 = vpop.f32.mrb[0].mxu0
        %v4812 = vadd.f32 0.0, %v4811
        %v4813 = vpop.f32.mrb[0].mxu0
        %v4814 = vpop.f32.mrb[0].mxu0
        %v4815 = vadd.f32 0.0, %v4814
        %v4816 = vpop.f32.mrb[0].mxu0
        %4817 = vmatprep.mubr.bf16.mxu0 0
        %4818 = vmatmul.mubr.bf16.gmra.mrb[0].mxu0 %v4703
        %v4819 = vpop.f32.mrb[0].mxu0
        %v4820 = vadd.f32 0.0, %v4819
        %v4821 = vpop.f32.mrb[0].mxu0
        %v4822 = vpop.f32.mrb[0].mxu0
        %v4823 = vadd.f32 0.0, %v4822
        %v4824 = vpop.f32.mrb[0].mxu0
        %4825 = vmatprep.mubr.bf16.mxu0 0
        %4826 = vmatmul.mubr.bf16.gmra.mrb[0].mxu0 %v4706
        %v4827 = vpop.f32.mrb[0].mxu0
        %v4828 = vadd.f32 0.0, %v4827
        %v4829 = vpop.f32.mrb[0].mxu0
        %v4830 = vpop.f32.mrb[0].mxu0
        %v4831 = vadd.f32 0.0, %v4830
        %v4832 = vpop.f32.mrb[0].mxu0
        %4833 = vmatprep.mubr.bf16.mxu0 0
        %4834 = vmatmul.mubr.bf16.gmra.mrb[0].mxu0 %v4709
        %v4835 = vpop.f32.mrb[0].mxu0
        %v4836 = vadd.f32 0.0, %v4835
        %v4837 = vpop.f32.mrb[0].mxu0
        %v4838 = vpop.f32.mrb[0].mxu0
        %v4839 = vadd.f32 0.0, %v4838
        %v4840 = vpop.f32.mrb[0].mxu0
        %4841 = vmatprep.mubr.bf16.mxu0 0
        %4842 = vmatmul.mubr.bf16.gmra.mrb[0].mxu0 %v4712
        %v4843 = vpop.f32.mrb[0].mxu0
        %v4844 = vadd.f32 0.0, %v4843
        %v4845 = vpop.f32.mrb[0].mxu0
        %v4846 = vpop.f32.mrb[0].mxu0
        %v4847 = vadd.f32 0.0, %v4846
        %v4848 = vpop.f32.mrb[0].mxu0
        %4849 = vmatprep.mubr.bf16.mxu0 0
        %4850 = vmatmul.mubr.bf16.gmra.mrb[0].mxu0 %v4715
        %v4851 = vpop.f32.mrb[0].mxu0
        %v4852 = vadd.f32 0.0, %v4851
        %v4853 = vpop.f32.mrb[0].mxu0
        %v4854 = vpop.f32.mrb[0].mxu0
        %v4855 = vadd.f32 0.0, %v4854
        %v4856 = vpop.f32.mrb[0].mxu0
        %4857 = vmatprep.mubr.bf16.mxu0 0
        %4858 = vmatmul.mubr.bf16.gmra.mrb[0].mxu0 %v4718
        %v4859 = vpop.f32.mrb[0].mxu0
        %v4860 = vadd.f32 0.0, %v4859
        %v4861 = vpop.f32.mrb[0].mxu0
        %v4862 = vpop.f32.mrb[0].mxu0
        %v4863 = vadd.f32 0.0, %v4862
        %v4864 = vpop.f32.mrb[0].mxu0
        %4865 = vmatprep.mubr.bf16.mxu0 0
        %4866 = vmatmul.mubr.bf16.gmra.mrb[0].mxu0 %v4721
        %v4867 = vpop.f32.mrb[0].mxu0
        %v4868 = vadd.f32 0.0, %v4867
        %v4869 = vpop.f32.mrb[0].mxu0
        %v4870 = vpop.f32.mrb[0].mxu0
        %v4871 = vadd.f32 0.0, %v4870
        %v4872 = vpop.f32.mrb[0].mxu0
        %4873 = vmatprep.mubr.bf16.mxu0 0
        %4874 = vmatmul.mubr.bf16.gmra.mrb[0].mxu0 %v4724
        %v4875 = vpop.f32.mrb[0].mxu0
        %v4876 = vadd.f32 0.0, %v4875
        %v4877 = vpop.f32.mrb[0].mxu0
        %v4878 = vpop.f32.mrb[0].mxu0
        %v4879 = vadd.f32 0.0, %v4878
        %v4880 = vpop.f32.mrb[0].mxu0
        %4881 = vmatprep.mubr.bf16.mxu0 0
        %4882 = vmatmul.mubr.bf16.gmra.mrb[0].mxu0 %v4727
        %v4883 = vpop.f32.mrb[0].mxu0
        %v4884 = vadd.f32 0.0, %v4883
        %v4885 = vpop.f32.mrb[0].mxu0
        %v4886 = vpop.f32.mrb[0].mxu0
        %v4887 = vadd.f32 0.0, %v4886
        %v4888 = vpop.f32.mrb[0].mxu0
        %4889 = vdwg.mxu0
        %v4890 = vld [vmem:[#allocation3] sm:$0xff]
        %v4891 = vld [vmem:[#allocation3 + $0x8] sm:$0xff]
        %v4892 = vld [vmem:[#allocation3 + $0x10] sm:$0xff]
        %v4893 = vld [vmem:[#allocation3 + $0x18] sm:$0xff]
        %v4894 = vld [vmem:[#allocation3 + $0x20] sm:$0xff]
        %v4895 = vld [vmem:[#allocation3 + $0x28] sm:$0xff]
        %v4896 = vld [vmem:[#allocation3 + $0x30] sm:$0xff]
        %v4897 = vld [vmem:[#allocation3 + $0x38] sm:$0xff]
        %v4898 = vld [vmem:[#allocation3 + $0x40] sm:$0xff]
        %v4899 = vld [vmem:[#allocation3 + $0x48] sm:$0xff]
        %v4900 = vld [vmem:[#allocation3 + $0x50] sm:$0xff]
        %v4901 = vld [vmem:[#allocation3 + $0x58] sm:$0xff]
        %v4902 = vld [vmem:[#allocation3 + $0x60] sm:$0xff]
        %v4903 = vld [vmem:[#allocation3 + $0x68] sm:$0xff]
        %v4904 = vld [vmem:[#allocation3 + $0x70] sm:$0xff]
        %v4905 = vld [vmem:[#allocation3 + $0x78] sm:$0xff]
        %v4906 = vld [vmem:[#allocation3 + $0x80] sm:$0xff]
        %v4907 = vld [vmem:[#allocation3 + $0x88] sm:$0xff]
        %v4908 = vld [vmem:[#allocation3 + $0x90] sm:$0xff]
        %v4909 = vld [vmem:[#allocation3 + $0x98] sm:$0xff]
        %v4910 = vld [vmem:[#allocation3 + $0xa0] sm:$0xff]
        %v4911 = vld [vmem:[#allocation3 + $0xa8] sm:$0xff]
        %v4912 = vld [vmem:[#allocation3 + $0xb0] sm:$0xff]
        %v4913 = vld [vmem:[#allocation3 + $0xb8] sm:$0xff]
        %v4914 = vld [vmem:[#allocation3 + $0xc0] sm:$0xff]
        %v4915 = vld [vmem:[#allocation3 + $0xc8] sm:$0xff]
        %v4916 = vld [vmem:[#allocation3 + $0xd0] sm:$0xff]
        %v4917 = vld [vmem:[#allocation3 + $0xd8] sm:$0xff]
        %v4918 = vld [vmem:[#allocation3 + $0xe0] sm:$0xff]
        %v4919 = vld [vmem:[#allocation3 + $0xe8] sm:$0xff]
        %v4920 = vld [vmem:[#allocation3 + $0xf0] sm:$0xff]
        %v4921 = vld [vmem:[#allocation3 + $0xf8] sm:$0xff]
        %v4922 = vadd.f32 %v4890, %v4764
        %v4923 = vadd.f32 %v4891, %v4767
        %v4924 = vadd.f32 %v4892, %v4772
        %v4925 = vadd.f32 %v4893, %v4775
        %v4926 = vadd.f32 %v4894, %v4780
        %v4927 = vadd.f32 %v4895, %v4783
        %v4928 = vadd.f32 %v4896, %v4788
        %v4929 = vadd.f32 %v4897, %v4791
        %v4930 = vadd.f32 %v4898, %v4796
        %v4931 = vadd.f32 %v4899, %v4799
        %v4932 = vadd.f32 %v4900, %v4804
        %v4933 = vadd.f32 %v4901, %v4807
        %v4934 = vadd.f32 %v4902, %v4812
        %v4935 = vadd.f32 %v4903, %v4815
        %v4936 = vadd.f32 %v4904, %v4820
        %v4937 = vadd.f32 %v4905, %v4823
        %v4938 = vadd.f32 %v4906, %v4828
        %v4939 = vadd.f32 %v4907, %v4831
        %v4940 = vadd.f32 %v4908, %v4836
        %v4941 = vadd.f32 %v4909, %v4839
        %v4942 = vadd.f32 %v4910, %v4844
        %v4943 = vadd.f32 %v4911, %v4847
        %v4944 = vadd.f32 %v4912, %v4852
        %v4945 = vadd.f32 %v4913, %v4855
        %v4946 = vadd.f32 %v4914, %v4860
        %v4947 = vadd.f32 %v4915, %v4863
        %v4948 = vadd.f32 %v4916, %v4868
        %v4949 = vadd.f32 %v4917, %v4871
        %v4950 = vadd.f32 %v4918, %v4876
        %v4951 = vadd.f32 %v4919, %v4879
        %v4952 = vadd.f32 %v4920, %v4884
        %v4953 = vadd.f32 %v4921, %v4887
        %s4954 = scalar_lea.vmem %s4, 1
        %v4955 = vld [vmem:[%s4954] sm:$0x1]
        %v4957 = vlaneseq
        %v4958 = vshrl.u32 %v4957, 7
        %v4959 = vsub.s32 0, %v4958
        %v4960 = vrot.slane %v4955, %v4959
        %v4962 = vadd.f32 %v4922, %v4960
        %v4963 = vadd.f32 %v4923, %v4960
        %v4964 = vadd.f32 %v4924, %v4960
        %v4965 = vadd.f32 %v4925, %v4960
        %v4966 = vadd.f32 %v4926, %v4960
        %v4967 = vadd.f32 %v4927, %v4960
        %v4968 = vadd.f32 %v4928, %v4960
        %v4969 = vadd.f32 %v4929, %v4960
        %v4970 = vadd.f32 %v4930, %v4960
        %v4971 = vadd.f32 %v4931, %v4960
        %v4972 = vadd.f32 %v4932, %v4960
        %v4973 = vadd.f32 %v4933, %v4960
        %v4974 = vadd.f32 %v4934, %v4960
        %v4975 = vadd.f32 %v4935, %v4960
        %v4976 = vadd.f32 %v4936, %v4960
        %v4977 = vadd.f32 %v4937, %v4960
        %v4978 = vadd.f32 %v4938, %v4960
        %v4979 = vadd.f32 %v4939, %v4960
        %v4980 = vadd.f32 %v4940, %v4960
        %v4981 = vadd.f32 %v4941, %v4960
        %v4982 = vadd.f32 %v4942, %v4960
        %v4983 = vadd.f32 %v4943, %v4960
        %v4984 = vadd.f32 %v4944, %v4960
        %v4985 = vadd.f32 %v4945, %v4960
        %v4986 = vadd.f32 %v4946, %v4960
        %v4987 = vadd.f32 %v4947, %v4960
        %v4988 = vadd.f32 %v4948, %v4960
        %v4989 = vadd.f32 %v4949, %v4960
        %v4990 = vadd.f32 %v4950, %v4960
        %v4991 = vadd.f32 %v4951, %v4960
        %v4992 = vadd.f32 %v4952, %v4960
        %v4993 = vadd.f32 %v4953, %v4960
        %4994 = vst.msk [vmem:[#allocation3] sm:$0xff] %vm256, %v4962
        %4995 = vst.msk [vmem:[#allocation3 + $0x8] sm:$0xff] %vm256, %v4963
        %4996 = vst.msk [vmem:[#allocation3 + $0x10] sm:$0xff] %vm256, %v4964
        %4997 = vst.msk [vmem:[#allocation3 + $0x18] sm:$0xff] %vm256, %v4965
        %4998 = vst.msk [vmem:[#allocation3 + $0x20] sm:$0xff] %vm256, %v4966
        %4999 = vst.msk [vmem:[#allocation3 + $0x28] sm:$0xff] %vm256, %v4967
        %5000 = vst.msk [vmem:[#allocation3 + $0x30] sm:$0xff] %vm256, %v4968
        %5001 = vst.msk [vmem:[#allocation3 + $0x38] sm:$0xff] %vm256, %v4969
        %5002 = vst.msk [vmem:[#allocation3 + $0x40] sm:$0xff] %vm256, %v4970
        %5003 = vst.msk [vmem:[#allocation3 + $0x48] sm:$0xff] %vm256, %v4971
        %5004 = vst.msk [vmem:[#allocation3 + $0x50] sm:$0xff] %vm256, %v4972
        %5005 = vst.msk [vmem:[#allocation3 + $0x58] sm:$0xff] %vm256, %v4973
        %5006 = vst.msk [vmem:[#allocation3 + $0x60] sm:$0xff] %vm256, %v4974
        %5007 = vst.msk [vmem:[#allocation3 + $0x68] sm:$0xff] %vm256, %v4975
        %5008 = vst.msk [vmem:[#allocation3 + $0x70] sm:$0xff] %vm256, %v4976
        %5009 = vst.msk [vmem:[#allocation3 + $0x78] sm:$0xff] %vm256, %v4977
        %5010 = vst.msk [vmem:[#allocation3 + $0x80] sm:$0xff] %vm256, %v4978
        %5011 = vst.msk [vmem:[#allocation3 + $0x88] sm:$0xff] %vm256, %v4979
        %5012 = vst.msk [vmem:[#allocation3 + $0x90] sm:$0xff] %vm256, %v4980
        %5013 = vst.msk [vmem:[#allocation3 + $0x98] sm:$0xff] %vm256, %v4981
        %5014 = vst.msk [vmem:[#allocation3 + $0xa0] sm:$0xff] %vm256, %v4982
        %5015 = vst.msk [vmem:[#allocation3 + $0xa8] sm:$0xff] %vm256, %v4983
        %5016 = vst.msk [vmem:[#allocation3 + $0xb0] sm:$0xff] %vm256, %v4984
        %5017 = vst.msk [vmem:[#allocation3 + $0xb8] sm:$0xff] %vm256, %v4985
        %5018 = vst.msk [vmem:[#allocation3 + $0xc0] sm:$0xff] %vm256, %v4986
        %5019 = vst.msk [vmem:[#allocation3 + $0xc8] sm:$0xff] %vm256, %v4987
        %5020 = vst.msk [vmem:[#allocation3 + $0xd0] sm:$0xff] %vm256, %v4988
        %5021 = vst.msk [vmem:[#allocation3 + $0xd8] sm:$0xff] %vm256, %v4989
        %5022 = vst.msk [vmem:[#allocation3 + $0xe0] sm:$0xff] %vm256, %v4990
        %5023 = vst.msk [vmem:[#allocation3 + $0xe8] sm:$0xff] %vm256, %v4991
        %5024 = vst.msk [vmem:[#allocation3 + $0xf0] sm:$0xff] %vm256, %v4992
        %5025 = vst.msk [vmem:[#allocation3 + $0xf8] sm:$0xff] %vm256, %v4993
        %v5026 = vld [vmem:[#allocation3] sm:$0xff]
        %v5027 = vld [vmem:[#allocation3 + $0x8] sm:$0xff]
        %v5028 = vld [vmem:[#allocation3 + $0x10] sm:$0xff]
        %v5029 = vld [vmem:[#allocation3 + $0x18] sm:$0xff]
        %v5030 = vld [vmem:[#allocation3 + $0x20] sm:$0xff]
        %v5031 = vld [vmem:[#allocation3 + $0x28] sm:$0xff]
        %v5032 = vld [vmem:[#allocation3 + $0x30] sm:$0xff]
        %v5033 = vld [vmem:[#allocation3 + $0x38] sm:$0xff]
        %v5034 = vld [vmem:[#allocation3 + $0x40] sm:$0xff]
        %v5035 = vld [vmem:[#allocation3 + $0x48] sm:$0xff]
        %v5036 = vld [vmem:[#allocation3 + $0x50] sm:$0xff]
        %v5037 = vld [vmem:[#allocation3 + $0x58] sm:$0xff]
        %v5038 = vld [vmem:[#allocation3 + $0x60] sm:$0xff]
        %v5039 = vld [vmem:[#allocation3 + $0x68] sm:$0xff]
        %v5040 = vld [vmem:[#allocation3 + $0x70] sm:$0xff]
        %v5041 = vld [vmem:[#allocation3 + $0x78] sm:$0xff]
        %v5042 = vld [vmem:[#allocation3 + $0x80] sm:$0xff]
        %v5043 = vld [vmem:[#allocation3 + $0x88] sm:$0xff]
        %v5044 = vld [vmem:[#allocation3 + $0x90] sm:$0xff]
        %v5045 = vld [vmem:[#allocation3 + $0x98] sm:$0xff]
        %v5046 = vld [vmem:[#allocation3 + $0xa0] sm:$0xff]
        %v5047 = vld [vmem:[#allocation3 + $0xa8] sm:$0xff]
        %v5048 = vld [vmem:[#allocation3 + $0xb0] sm:$0xff]
        %v5049 = vld [vmem:[#allocation3 + $0xb8] sm:$0xff]
        %v5050 = vld [vmem:[#allocation3 + $0xc0] sm:$0xff]
        %v5051 = vld [vmem:[#allocation3 + $0xc8] sm:$0xff]
        %v5052 = vld [vmem:[#allocation3 + $0xd0] sm:$0xff]
        %v5053 = vld [vmem:[#allocation3 + $0xd8] sm:$0xff]
        %v5054 = vld [vmem:[#allocation3 + $0xe0] sm:$0xff]
        %v5055 = vld [vmem:[#allocation3 + $0xe8] sm:$0xff]
        %v5056 = vld [vmem:[#allocation3 + $0xf0] sm:$0xff]
        %v5057 = vld [vmem:[#allocation3 + $0xf8] sm:$0xff]
        %5058 = vst.msk [vmem:[%s217] sm:$0xff] %vm256, %v5026
        %5059 = vst.msk [vmem:[%s217 + $0x8] sm:$0xff] %vm256, %v5027
        %5060 = vst.msk [vmem:[%s217 + $0x10] sm:$0xff] %vm256, %v5028
        %5061 = vst.msk [vmem:[%s217 + $0x18] sm:$0xff] %vm256, %v5029
        %5062 = vst.msk [vmem:[%s217 + $0x20] sm:$0xff] %vm256, %v5030
        %5063 = vst.msk [vmem:[%s217 + $0x28] sm:$0xff] %vm256, %v5031
        %5064 = vst.msk [vmem:[%s217 + $0x30] sm:$0xff] %vm256, %v5032
        %5065 = vst.msk [vmem:[%s217 + $0x38] sm:$0xff] %vm256, %v5033
        %5066 = vst.msk [vmem:[%s217 + $0x40] sm:$0xff] %vm256, %v5034
        %5067 = vst.msk [vmem:[%s217 + $0x48] sm:$0xff] %vm256, %v5035
        %5068 = vst.msk [vmem:[%s217 + $0x50] sm:$0xff] %vm256, %v5036
        %5069 = vst.msk [vmem:[%s217 + $0x58] sm:$0xff] %vm256, %v5037
        %5070 = vst.msk [vmem:[%s217 + $0x60] sm:$0xff] %vm256, %v5038
        %5071 = vst.msk [vmem:[%s217 + $0x68] sm:$0xff] %vm256, %v5039
        %5072 = vst.msk [vmem:[%s217 + $0x70] sm:$0xff] %vm256, %v5040
        %5073 = vst.msk [vmem:[%s217 + $0x78] sm:$0xff] %vm256, %v5041
        %5074 = vst.msk [vmem:[%s217 + $0x80] sm:$0xff] %vm256, %v5042
        %5075 = vst.msk [vmem:[%s217 + $0x88] sm:$0xff] %vm256, %v5043
        %5076 = vst.msk [vmem:[%s217 + $0x90] sm:$0xff] %vm256, %v5044
        %5077 = vst.msk [vmem:[%s217 + $0x98] sm:$0xff] %vm256, %v5045
        %5078 = vst.msk [vmem:[%s217 + $0xa0] sm:$0xff] %vm256, %v5046
        %5079 = vst.msk [vmem:[%s217 + $0xa8] sm:$0xff] %vm256, %v5047
        %5080 = vst.msk [vmem:[%s217 + $0xb0] sm:$0xff] %vm256, %v5048
        %5081 = vst.msk [vmem:[%s217 + $0xb8] sm:$0xff] %vm256, %v5049
        %5082 = vst.msk [vmem:[%s217 + $0xc0] sm:$0xff] %vm256, %v5050
        %5083 = vst.msk [vmem:[%s217 + $0xc8] sm:$0xff] %vm256, %v5051
        %5084 = vst.msk [vmem:[%s217 + $0xd0] sm:$0xff] %vm256, %v5052
        %5085 = vst.msk [vmem:[%s217 + $0xd8] sm:$0xff] %vm256, %v5053
        %5086 = vst.msk [vmem:[%s217 + $0xe0] sm:$0xff] %vm256, %v5054
        %5087 = vst.msk [vmem:[%s217 + $0xe8] sm:$0xff] %vm256, %v5055
        %5088 = vst.msk [vmem:[%s217 + $0xf0] sm:$0xff] %vm256, %v5056
        %5089 = vst.msk [vmem:[%s217 + $0xf8] sm:$0xff] %vm256, %v5057
        %s5090 = sand.u32 %s137, 1
        %s5091 = scalar_lea.sflag [#allocation5], %s5090
        %s5092 = sand.u32 %s137, 1
        %s5093 = smul.addr %s5092, 256
        %s5094 = scalar_lea.vmem [#allocation4], %s5093
        // Predicated region
        $region41: #{residual_block_forward.1} parent=39 // pred_check
          %p5095 = pneg %p147
        $region42: #{residual_block_forward.1} parent=39 // pred_check_branch
          %5097 = sbr.rel (%p5095) target = $region44
        $region43: #{residual_block_forward.1} parent=39 // pred_region
          %s5099 = ssub.s32 4096, 4096
          %5100 = vsyncadd %s5091, %s5099
          %s5101 = smul.addr %s19, 32
          %s5102 = smul.addr %s5101, 128
          %s5103 = scalar_lea.hbm %s5, %s5102
          %s5104 = sshll.u32 %s5094, 4
          %s5105 = int_to_ptr.vmem [resolvable:$true] %s5104
          %5110 = dma.vmem_to_hbm [thread:$0]  %s5105, 4096, %s5103, %s5091, 128, 128, 8
        $region44: #{residual_block_forward.1} parent=39 // pred_fallthru
          _
      $region40: #{residual_block_forward.1} parent=5 // pred_fallthru
        _
      %p5111 = scmp.le.s32.totalorder 2, %s14
      // Predicated region
      $region45: #{residual_block_forward.1} parent=5 // pred_check
        %p5112 = pneg %p5111
      $region46: #{residual_block_forward.1} parent=5 // pred_check_branch
        %5114 = sbr.rel (%p5112) target = $region48
      $region47: #{residual_block_forward.1} parent=5 // pred_region
        %s5115 = ssub.s32 %s14, 2
        // Predicated region
        $region49: #{residual_block_forward.1} parent=47 // pred_check
          %p5116 = pneg %p153
        $region50: #{residual_block_forward.1} parent=47 // pred_check_branch
          %5118 = sbr.rel (%p5116) target = $region52
        $region51: #{residual_block_forward.1} parent=47 // pred_region
          %s5119 = sand.u32 %s138, 1
          %s5120 = scalar_lea.sflag [#allocation5], %s5119
          %s5121 = sand.u32 %s138, 1
          %s5122 = smul.addr %s5121, 256
          %s5123 = scalar_lea.vmem [#allocation4], %s5122
          %5124 = dma.done %s5120, 4096
        $region52: #{residual_block_forward.1} parent=47 // pred_fallthru
          _
      $region48: #{residual_block_forward.1} parent=5 // pred_fallthru
        _
    $region6: #{residual_block_forward.1} parent=1 // loop_footer
      %s18 = sadd.s32 1, %s14
    $region7: #{residual_block_forward.1} parent=1 // loop_footer_branch
      %13 = sbr.rel target = $region3
    $region8: #{residual_block_forward.1} parent=1 // loop_exit
      _
    %5125 = vsyncpa [#allocation5], 1
    %s5126 = scalar_lea.sflag [#allocation5], 1
    %5127 = vsyncpa %s5126, 1

</llo_original>
